<compile_context>
chip_gen: v6e
topology: v6e:2x2x1
jax: 0.10.0
libtpu: 0.0.40
codegen_flags: <defaults>
</compile_context>

<pallas_src>
import functools
import math

import jax
import jax.numpy as jnp
from jax.experimental import pallas as pl
from jax.experimental.pallas import tpu as pltpu

_EPS = 1e-5          # nn.BatchNorm2d default eps
_SKIP_CH = 48        # hard-coded in the module (skip_layer_* output channels)
_COMB_CH = 256       # hard-coded in the module (comb_layer_* output channels)
_LANE = 128          # TPU lane width; channel blocks are padded to multiples of this


def _round_up(x, m):
    return (x + m - 1) // m * m


def _nbytes(shape, dtype):
    return math.prod(shape) * jnp.dtype(dtype).itemsize


# ============================================================================ #
# Pallas kernels
# ============================================================================ #
def _zero_halo(pad_ref, n, h, w, c):
    """Zero only the 1-wide halo ring of a (n, h+2, w+2, c) padded scratch buffer."""
    zrow = jnp.zeros((n, 1, w + 2, c), pad_ref.dtype)
    pad_ref[:, 0:1, :, :] = zrow
    pad_ref[:, h + 1:h + 2, :, :] = zrow
    zcol = jnp.zeros((n, h, 1, c), pad_ref.dtype)
    pad_ref[:, 1:h + 1, 0:1, :] = zcol
    pad_ref[:, 1:h + 1, w + 1:w + 2, :] = zcol


def _bn_relu_train(x, gamma, beta, m, eps):
    """Training-mode BatchNorm2d (biased variance, two-pass stats) + ReLU, all in f32."""
    mean = jnp.sum(x, axis=0, keepdims=True) * (1.0 / m)
    d = x - mean
    var = jnp.sum(d * d, axis=0, keepdims=True) * (1.0 / m)
    y = d * jax.lax.rsqrt(var + eps) * gamma + beta
    return jnp.maximum(y, 0.0)


def _merge_core(skip_ref, up_ref, w_skip_ref, g_skip_ref, b_skip_ref,
                w_comb_ref, g_comb_ref, b_comb_ref, pad_ref, eps):
    n, h, w, cs = skip_ref.shape
    cf = up_ref.shape[-1]              # real upsampled-feature channels (unpadded)
    ccat = pad_ref.shape[-1]           # 128 (skip half) + cfp (up half, lane padded)
    ckp = _LANE
    cfp = ccat - ckp
    m = n * h * w

    # --- skip path: 1x1 conv == ONE bf16 MXU matmul with batch folded into M --
    skip_flat = skip_ref[...].reshape(m, cs)
    s = jnp.dot(skip_flat, w_skip_ref[...], preferred_element_type=jnp.float32)
    s = _bn_relu_train(s, g_skip_ref[...], b_skip_ref[...], m, eps)      # (m, 128) f32
    # padded lanes of s are exactly 0 (zero weight cols, gamma=beta=0)

    # --- torch.cat((skip48, up), ch=1): single bf16 halo buffer, both halves 128-aligned
    _zero_halo(pad_ref, n, h, w, ccat)
    pad_ref[:, 1:h + 1, 1:w + 1, 0:ckp] = (
        s.reshape(n, h, w, ckp).astype(pad_ref.dtype))
    pad_ref[:, 1:h + 1, 1:w + 1, ckp:ckp + cf] = up_ref[...].astype(pad_ref.dtype)
    if cf < cfp:   # zero lane-padding tail of the up half (halo ring already zeroed)
        pad_ref[:, 1:h + 1, 1:w + 1, ckp + cf:ccat] = (
            jnp.zeros((n, h, w, cfp - cf), pad_ref.dtype))

    # --- 3x3 comb conv: 9 per-tap bf16 MXU matmuls accumulated in f32 ---------
    #     (no materialized im2col buffer; zero K rows keep the result exact)
    acc = jnp.zeros((m, _COMB_CH), jnp.float32)
    for t in range(9):
        dy, dx = t // 3, t % 3
        lhs = pad_ref[:, dy:dy + h, dx:dx + w, :].reshape(m, ccat)
        acc = acc + jnp.dot(lhs, w_comb_ref[t], preferred_element_type=jnp.float32)
    return _bn_relu_train(acc, g_comb_ref[...], b_comb_ref[...], m, eps)  # (m, 256) f32


def _merge_kernel(skip_ref, up_ref, w_skip_ref, g_skip_ref, b_skip_ref,
                  w_comb_ref, g_comb_ref, b_comb_ref,
                  out_ref, pad_ref, *, eps):
    n, h, w, _ = skip_ref.shape
    y = _merge_core(skip_ref, up_ref, w_skip_ref, g_skip_ref, b_skip_ref,
                    w_comb_ref, g_comb_ref, b_comb_ref, pad_ref, eps)
    out_ref[...] = y.reshape(n, h, w, out_ref.shape[-1]).astype(out_ref.dtype)


def _merge_pred_kernel(skip_ref, up_ref, w_skip_ref, g_skip_ref, b_skip_ref,
                       w_comb_ref, g_comb_ref, b_comb_ref, w_pred_ref, b_pred_ref,
                       out_ref, pred_ref, pad_ref, *, eps):
    n, h, w, _ = skip_ref.shape
    y = _merge_core(skip_ref, up_ref, w_skip_ref, g_skip_ref, b_skip_ref,
                    w_comb_ref, g_comb_ref, b_comb_ref, pad_ref, eps)
    out_ref[...] = y.reshape(n, h, w, out_ref.shape[-1]).astype(out_ref.dtype)
    # fused features_to_predictions: 1x1 conv with bias, no BN / activation.
    # output channels lane-padded to 128 -> unmasked stores; wrapper slices back.
    p = jnp.dot(y.astype(jnp.bfloat16), w_pred_ref[...],
                preferred_element_type=jnp.float32) + b_pred_ref[...]
    pred_ref[...] = p.reshape(n, h, w, pred_ref.shape[-1]).astype(pred_ref.dtype)


# ============================================================================ #
# Wrappers
# ============================================================================ #
def _merge_stage(skip, up, sp, pred_params=None):
    """One merge_bottleneck_skip_features stage as a single fused pallas_call."""
    n, h, w, _ = skip.shape
    cf = up.shape[-1]
    cfp = _round_up(cf, _LANE)
    ccat = _LANE + cfp
    co = _COMB_CH
    m = n * h * w

    vmem = pl.BlockSpec(memory_space=pltpu.MemorySpace.VMEM)
    scratch = [pltpu.VMEM((n, h + 2, w + 2, ccat), jnp.bfloat16)]   # concat halo buffer (bf16)

    args = (skip, up, sp["w_skip"], sp["g_skip"], sp["b_skip"],
            sp["w_comb"], sp["g_comb"], sp["b_comb"])

    # vmem budget from the actual footprint (2x headroom for compiler temporaries),
    # capped generation-safely (v7x has 64 MiB physical VMEM).
    need = sum(_nbytes(a.shape, a.dtype) for a in args)
    need += _nbytes((n, h, w, co), jnp.float32)                       # features output
    need += _nbytes((n, h + 2, w + 2, ccat), jnp.bfloat16)            # halo scratch
    need += m * ccat * 2 + m * co * 4 + m * _LANE * 4                 # per-tap lhs + acc + skip tmp
    if pred_params is not None:
        need += sum(_nbytes(a.shape, a.dtype) for a in pred_params)
        need += _nbytes((n, h, w, _LANE), jnp.float32)                # padded prediction output
    limit = int(min(max(2 * need + (8 << 20), 16 << 20), 56 << 20))
    cparams = pltpu.CompilerParams(vmem_limit_bytes=limit)

    if pred_params is None:
        return pl.pallas_call(
            functools.partial(_merge_kernel, eps=_EPS),
            out_shape=jax.ShapeDtypeStruct((n, h, w, co), jnp.float32),
            in_specs=[vmem] * len(args),
            out_specs=vmem,
            scratch_shapes=scratch,
            compiler_params=cparams,
        )(*args)

    w_pred, b_pred = pred_params
    n_out_pad = w_pred.shape[-1]
    return pl.pallas_call(
        functools.partial(_merge_pred_kernel, eps=_EPS),
        out_shape=(jax.ShapeDtypeStruct((n, h, w, co), jnp.float32),
                   jax.ShapeDtypeStruct((n, h, w, n_out_pad), jnp.float32)),
        in_specs=[vmem] * (len(args) + 2),
        out_specs=(vmem, vmem),
        scratch_shapes=scratch,
        compiler_params=cparams,
    )(*args, w_pred, b_pred)


def _interp_matrix(out_size, in_size):
    """Row/col interpolation matrix matching F.interpolate bilinear, align_corners=False."""
    o = jnp.arange(out_size, dtype=jnp.float32)
    src = (o + 0.5) * (in_size / out_size) - 0.5
    src = jnp.clip(src, 0.0, float(in_size - 1))
    i0 = jnp.minimum(jnp.floor(src).astype(jnp.int32), in_size - 1)
    i1 = jnp.minimum(i0 + 1, in_size - 1)
    w1 = src - i0.astype(jnp.float32)
    rows = jnp.arange(out_size)
    mtx = jnp.zeros((out_size, in_size), jnp.float32)
    mtx = mtx.at[rows, i0].add(1.0 - w1)
    mtx = mtx.at[rows, i1].add(w1)
    return mtx


def _bilinear_resize_nhwc(x, out_h, out_w):
    # TODO(synk): bilinear F.interpolate(align_corners=False) is applied in the wrapper as two
    #             separable interpolation-matrix contractions; in-kernel fusion would need
    #             cross-sublane contractions with transposes (left as XLA data movement).
    _, h, w, _ = x.shape
    r = _interp_matrix(out_h, h)
    c = _interp_matrix(out_w, w)
    y = jnp.einsum('oh,nhwc->nowc', r, x)
    y = jnp.einsum('pw,nowc->nopc', c, y)
    return y


# ---- weight packing from PyTorch layouts into kernel (lane-padded, bf16) layouts --
def _pack_skip(w_oihw):
    """Conv2d(Cs, 48, 1, bias=False) weight (48, Cs, 1, 1) -> (Cs, 128) bf16."""
    co = w_oihw.shape[0]
    w = jnp.transpose(w_oihw[:, :, 0, 0], (1, 0))                       # (Cs, 48)
    return jnp.pad(w, ((0, 0), (0, _LANE - co))).astype(jnp.bfloat16)


def _pack_bn(gamma, beta, cp):
    """(C,) gamma/beta -> (1, cp) f32; padded lanes get gamma=beta=0 (exactly 0 output)."""
    c = gamma.shape[0]
    return (jnp.pad(gamma, (0, cp - c)).reshape(1, cp).astype(jnp.float32),
            jnp.pad(beta, (0, cp - c)).reshape(1, cp).astype(jnp.float32))


def _pack_comb(w_oihw, cf, cfp):
    """Conv2d(48+cf, 256, 3) weight (256, 48+cf, 3, 3) -> (9, 128+cfp, 256) bf16, tap-major,
    K order per tap = [skip(48)->128 | up(cf)->cfp]; zero rows on lane-padding channels."""
    co = w_oihw.shape[0]
    w = jnp.transpose(w_oihw, (2, 3, 1, 0))                             # (3, 3, 48+cf, 256)
    ws = jnp.pad(w[:, :, :_SKIP_CH, :], ((0, 0), (0, 0), (0, _LANE - _SKIP_CH), (0, 0)))
    wu = jnp.pad(w[:, :, _SKIP_CH:, :], ((0, 0), (0, 0), (0, cfp - cf), (0, 0)))
    wcat = jnp.concatenate([ws, wu], axis=2)                            # (3, 3, 128+cfp, 256)
    return wcat.reshape(9, _LANE + cfp, co).astype(jnp.bfloat16)


def _pack_pred(w_oihw, bias):
    """Conv2d(256, n_out, 1) weight (n_out, 256, 1, 1) -> (256, 128) bf16 + (1, 128) f32 bias
    (output channels lane-padded to 128 for unmasked stores)."""
    n_out = w_oihw.shape[0]
    n_pad = _round_up(n_out, _LANE)
    w = jnp.transpose(w_oihw[:, :, 0, 0], (1, 0))                       # (256, n_out)
    w = jnp.pad(w, ((0, 0), (0, n_pad - n_out))).astype(jnp.bfloat16)
    b = jnp.pad(bias, (0, n_pad - n_out)).reshape(1, n_pad).astype(jnp.float32)
    return w, b


def decoder_deeplabv3p_all_connect(features_bottleneck, features_skip, params):
    """NCHW in / NCHW out; returns (predictions_2x, features_2x) like the PyTorch forward."""
    to_nhwc = lambda t: jnp.transpose(t, (0, 2, 3, 1))
    to_nchw = lambda t: jnp.transpose(t, (0, 3, 1, 2))

    feat = to_nhwc(features_bottleneck).astype(jnp.float32)
    pred = None
    for scale in (8, 4, 2):
        skip = to_nhwc(features_skip[scale]).astype(jnp.bfloat16)        # bf16 MXU operand
        h, w = skip.shape[1], skip.shape[2]
        # interpolation in f32, then cast the matmul operand to bf16 (no wrapper channel pad)
        up = _bilinear_resize_nhwc(feat, h, w).astype(jnp.bfloat16)
        if scale == 2:
            feat, pred = _merge_stage(skip, up, params[scale],
                                      pred_params=(params["w_pred"], params["b_pred"]))
        else:
            feat = _merge_stage(skip, up, params[scale])
    pred = pred[..., :params["num_out_ch"]]      # strip prediction-channel lane padding
    return to_nchw(pred), to_nchw(feat)


# ============================================================================ #
if __name__ == "__main__":
    key = jax.random.PRNGKey(0)
    ks = jax.random.split(key, 24)

    N = 2
    bottleneck_ch, skip8_ch, skip4_ch, skip2_ch = 64, 32, 24, 16
    num_out_ch = 19
    # small, sublane/lane friendly spatial sizes (kernels are grid-less & VMEM resident)
    bott_hw, s8_hw, s4_hw, s2_hw = 4, 8, 16, 16

    features_bottleneck = jax.random.normal(ks[0], (N, bottleneck_ch, bott_hw, bott_hw),
                                            jnp.float32)
    features_skip = {
        8: jax.random.normal(ks[1], (N, skip8_ch, s8_hw, s8_hw), jnp.float32),
        4: jax.random.normal(ks[2], (N, skip4_ch, s4_hw, s4_hw), jnp.float32),
        2: jax.random.normal(ks[3], (N, skip2_ch, s2_hw, s2_hw), jnp.float32),
    }

    def make_stage_params(base, skip_ch, cf):
        cfp = _round_up(cf, _LANE)
        # parameters in native PyTorch layouts, then packed for the kernels
        w_skip = 0.10 * jax.random.normal(ks[base + 0], (_SKIP_CH, skip_ch, 1, 1), jnp.float32)
        g_s = 1.0 + 0.1 * jax.random.normal(ks[base + 1], (_SKIP_CH,), jnp.float32)
        b_s = 0.10 * jax.random.normal(ks[base + 2], (_SKIP_CH,), jnp.float32)
        w_comb = 0.05 * jax.random.normal(ks[base + 3], (_COMB_CH, _SKIP_CH + cf, 3, 3),
                                          jnp.float32)
        g_c = 1.0 + 0.1 * jax.random.normal(ks[base + 4], (_COMB_CH,), jnp.float32)
        b_c = 0.10 * jax.random.normal(ks[base + 5], (_COMB_CH,), jnp.float32)
        gs, bs = _pack_bn(g_s, b_s, _LANE)
        gc, bc = _pack_bn(g_c, b_c, _COMB_CH)
        return dict(w_skip=_pack_skip(w_skip), g_skip=gs, b_skip=bs,
                    w_comb=_pack_comb(w_comb, cf, cfp), g_comb=gc, b_comb=bc)

    params = {
        8: make_stage_params(4, skip8_ch, bottleneck_ch),   # comb in-ch = bottleneck_ch + 48
        4: make_stage_params(10, skip4_ch, _COMB_CH),       # comb in-ch = 256 + 48
        2: make_stage_params(16, skip2_ch, _COMB_CH),       # comb in-ch = 256 + 48
    }
    w_pred = 0.10 * jax.random.normal(ks[22], (num_out_ch, _COMB_CH, 1, 1), jnp.float32)
    b_pred = 0.10 * jax.random.normal(ks[23], (num_out_ch,), jnp.float32)
    params["w_pred"], params["b_pred"] = _pack_pred(w_pred, b_pred)
    params["num_out_ch"] = num_out_ch

    predictions_2x, features_2x = decoder_deeplabv3p_all_connect(
        features_bottleneck, features_skip, params)
    jax.block_until_ready((predictions_2x, features_2x))

    assert predictions_2x.shape == (N, num_out_ch, s2_hw, s2_hw)
    assert features_2x.shape == (N, _COMB_CH, s2_hw, s2_hw)
    assert bool(jnp.all(jnp.isfinite(predictions_2x))) and bool(jnp.all(jnp.isfinite(features_2x)))
    print("KERNEL_OK")
</pallas_src>

<mosaic_0001>
module attributes {stable_mosaic.version = 11 : i64} {
  func.func @_merge_kernel(%arg0: memref<2x8x8x32xbf16, #tpu.memory_space<vmem>>, %arg1: memref<2x8x8x64xbf16, #tpu.memory_space<vmem>>, %arg2: memref<32x128xbf16, #tpu.memory_space<vmem>>, %arg3: memref<1x128xf32, #tpu.memory_space<vmem>>, %arg4: memref<1x128xf32, #tpu.memory_space<vmem>>, %arg5: memref<9x256x256xbf16, #tpu.memory_space<vmem>>, %arg6: memref<1x256xf32, #tpu.memory_space<vmem>>, %arg7: memref<1x256xf32, #tpu.memory_space<vmem>>, %arg8: memref<2x8x8x256xf32, #tpu.memory_space<vmem>>, %arg9: memref<2x10x10x256xbf16, #tpu.memory_space<vmem>>) attributes {dimension_semantics = [], scalar_prefetch = 0 : i64, scratch_operands = 1 : i64, tpu.core_type = #tpu.core_type<tc>} {
    %c0 = arith.constant 0 : index
    %c0_0 = arith.constant 0 : index
    %c0_1 = arith.constant 0 : index
    %c0_2 = arith.constant 0 : index
    %0 = vector.load %arg0[%c0, %c0_0, %c0_1, %c0_2] : memref<2x8x8x32xbf16, #tpu.memory_space<vmem>>, vector<2x8x8x32xbf16>
    %1 = vector.shape_cast %0 : vector<2x8x8x32xbf16> to vector<128x32xbf16>
    %c0_3 = arith.constant 0 : index
    %c0_4 = arith.constant 0 : index
    %2 = vector.load %arg2[%c0_3, %c0_4] : memref<32x128xbf16, #tpu.memory_space<vmem>>, vector<32x128xbf16>
    %cst = arith.constant dense<0.000000e+00> : vector<128x128xf32>
    %3 = tpu.matmul %1, %2, %cst {dimension_numbers = #tpu.dot_dimension_numbers<[1], [0], [0], [1], [0, 0, 1, 1], [], []>} : vector<128x32xbf16>, vector<32x128xbf16>, vector<128x128xf32> -> vector<128x128xf32>
    %c0_5 = arith.constant 0 : index
    %c0_6 = arith.constant 0 : index
    %4 = vector.load %arg3[%c0_5, %c0_6] : memref<1x128xf32, #tpu.memory_space<vmem>>, vector<1x128xf32>
    %c0_7 = arith.constant 0 : index
    %c0_8 = arith.constant 0 : index
    %5 = vector.load %arg4[%c0_7, %c0_8] : memref<1x128xf32, #tpu.memory_space<vmem>>, vector<1x128xf32>
    %cst_9 = arith.constant dense<0.000000e+00> : vector<128xf32>
    %6 = vector.multi_reduction <add>, %3, %cst_9 [0] : vector<128x128xf32> to vector<128xf32>
    %7 = vector.shape_cast %6 : vector<128xf32> to vector<1x128xf32>
    %cst_10 = arith.constant 7.812500e-03 : f32
    %8 = vector.broadcast %cst_10 : f32 to vector<1x128xf32>
    %9 = arith.mulf %7, %8 : vector<1x128xf32>
    %10 = vector.broadcast %9 : vector<1x128xf32> to vector<128x128xf32>
    %11 = arith.subf %3, %10 : vector<128x128xf32>
    %12 = arith.mulf %11, %11 : vector<128x128xf32>
    %cst_11 = arith.constant dense<0.000000e+00> : vector<128xf32>
    %13 = vector.multi_reduction <add>, %12, %cst_11 [0] : vector<128x128xf32> to vector<128xf32>
    %14 = vector.shape_cast %13 : vector<128xf32> to vector<1x128xf32>
    %cst_12 = arith.constant 7.812500e-03 : f32
    %15 = vector.broadcast %cst_12 : f32 to vector<1x128xf32>
    %16 = arith.mulf %14, %15 : vector<1x128xf32>
    %cst_13 = arith.constant 9.99999974E-6 : f32
    %17 = vector.broadcast %cst_13 : f32 to vector<1x128xf32>
    %18 = arith.addf %16, %17 : vector<1x128xf32>
    %19 = math.rsqrt %18 : vector<1x128xf32>
    %20 = vector.broadcast %19 : vector<1x128xf32> to vector<128x128xf32>
    %21 = arith.mulf %11, %20 : vector<128x128xf32>
    %22 = vector.broadcast %4 : vector<1x128xf32> to vector<128x128xf32>
    %23 = arith.mulf %21, %22 : vector<128x128xf32>
    %24 = vector.broadcast %5 : vector<1x128xf32> to vector<128x128xf32>
    %25 = arith.addf %23, %24 : vector<128x128xf32>
    %cst_14 = arith.constant 0.000000e+00 : f32
    %26 = vector.broadcast %cst_14 : f32 to vector<128x128xf32>
    %27 = arith.maximumf %25, %26 : vector<128x128xf32>
    %cst_15 = arith.constant 0.000000e+00 : bf16
    %28 = vector.broadcast %cst_15 : bf16 to vector<2x1x10x256xbf16>
    %c0_16 = arith.constant 0 : index
    %c0_17 = arith.constant 0 : index
    %c0_18 = arith.constant 0 : index
    %c0_19 = arith.constant 0 : index
    %29 = vector.load %arg9[%c0_16, %c0_17, %c0_18, %c0_19] : memref<2x10x10x256xbf16, #tpu.memory_space<vmem>>, vector<2x1x10x256xbf16>
    tpu.vector_store %arg9[%c0_16, %c0_17, %c0_18, %c0_19], %28 {strides = array<i32>} : memref<2x10x10x256xbf16, #tpu.memory_space<vmem>>, vector<2x1x10x256xbf16>,
    %c0_20 = arith.constant 0 : index
    %c9 = arith.constant 9 : index
    %c0_21 = arith.constant 0 : index
    %c0_22 = arith.constant 0 : index
    %30 = vector.load %arg9[%c0_20, %c9, %c0_21, %c0_22] : memref<2x10x10x256xbf16, #tpu.memory_space<vmem>>, vector<2x1x10x256xbf16>
    tpu.vector_store %arg9[%c0_20, %c9, %c0_21, %c0_22], %28 {strides = array<i32>} : memref<2x10x10x256xbf16, #tpu.memory_space<vmem>>, vector<2x1x10x256xbf16>,
    %cst_23 = arith.constant 0.000000e+00 : bf16
    %31 = vector.broadcast %cst_23 : bf16 to vector<2x8x1x256xbf16>
    %c0_24 = arith.constant 0 : index
    %c1 = arith.constant 1 : index
    %c0_25 = arith.constant 0 : index
    %c0_26 = arith.constant 0 : index
    %32 = vector.load %arg9[%c0_24, %c1, %c0_25, %c0_26] : memref<2x10x10x256xbf16, #tpu.memory_space<vmem>>, vector<2x8x1x256xbf16>
    tpu.vector_store %arg9[%c0_24, %c1, %c0_25, %c0_26], %31 {strides = array<i32>} : memref<2x10x10x256xbf16, #tpu.memory_space<vmem>>, vector<2x8x1x256xbf16>,
    %c0_27 = arith.constant 0 : index
    %c1_28 = arith.constant 1 : index
    %c9_29 = arith.constant 9 : index
    %c0_30 = arith.constant 0 : index
    %33 = vector.load %arg9[%c0_27, %c1_28, %c9_29, %c0_30] : memref<2x10x10x256xbf16, #tpu.memory_space<vmem>>, vector<2x8x1x256xbf16>
    tpu.vector_store %arg9[%c0_27, %c1_28, %c9_29, %c0_30], %31 {strides = array<i32>} : memref<2x10x10x256xbf16, #tpu.memory_space<vmem>>, vector<2x8x1x256xbf16>,
    %34 = vector.shape_cast %27 : vector<128x128xf32> to vector<2x8x8x128xf32>
    %35 = arith.truncf %34 : vector<2x8x8x128xf32> to vector<2x8x8x128xbf16>
    %c0_31 = arith.constant 0 : index
    %c1_32 = arith.constant 1 : index
    %c1_33 = arith.constant 1 : index
    %c0_34 = arith.constant 0 : index
    %36 = vector.load %arg9[%c0_31, %c1_32, %c1_33, %c0_34] : memref<2x10x10x256xbf16, #tpu.memory_space<vmem>>, vector<2x8x8x128xbf16>
    tpu.vector_store %arg9[%c0_31, %c1_32, %c1_33, %c0_34], %35 {strides = array<i32>} : memref<2x10x10x256xbf16, #tpu.memory_space<vmem>>, vector<2x8x8x128xbf16>,
    %c0_35 = arith.constant 0 : index
    %c0_36 = arith.constant 0 : index
    %c0_37 = arith.constant 0 : index
    %c0_38 = arith.constant 0 : index
    %37 = vector.load %arg1[%c0_35, %c0_36, %c0_37, %c0_38] : memref<2x8x8x64xbf16, #tpu.memory_space<vmem>>, vector<2x8x8x64xbf16>
    %c0_39 = arith.constant 0 : index
    %c1_40 = arith.constant 1 : index
    %c1_41 = arith.constant 1 : index
    %c128 = arith.constant 128 : index
    %38 = vector.load %arg9[%c0_39, %c1_40, %c1_41, %c128] : memref<2x10x10x256xbf16, #tpu.memory_space<vmem>>, vector<2x8x8x64xbf16>
    tpu.vector_store %arg9[%c0_39, %c1_40, %c1_41, %c128], %37 {strides = array<i32>} : memref<2x10x10x256xbf16, #tpu.memory_space<vmem>>, vector<2x8x8x64xbf16>,
    %cst_42 = arith.constant 0.000000e+00 : bf16
    %39 = vector.broadcast %cst_42 : bf16 to vector<2x8x8x64xbf16>
    %c0_43 = arith.constant 0 : index
    %c1_44 = arith.constant 1 : index
    %c1_45 = arith.constant 1 : index
    %c192 = arith.constant 192 : index
    %40 = vector.load %arg9[%c0_43, %c1_44, %c1_45, %c192] : memref<2x10x10x256xbf16, #tpu.memory_space<vmem>>, vector<2x8x8x64xbf16>
    tpu.vector_store %arg9[%c0_43, %c1_44, %c1_45, %c192], %39 {strides = array<i32>} : memref<2x10x10x256xbf16, #tpu.memory_space<vmem>>, vector<2x8x8x64xbf16>,
    %cst_46 = arith.constant 0.000000e+00 : f32
    %41 = vector.broadcast %cst_46 : f32 to vector<128x256xf32>
    %c0_47 = arith.constant 0 : index
    %c0_48 = arith.constant 0 : index
    %c0_49 = arith.constant 0 : index
    %c0_50 = arith.constant 0 : index
    %42 = vector.load %arg9[%c0_47, %c0_48, %c0_49, %c0_50] : memref<2x10x10x256xbf16, #tpu.memory_space<vmem>>, vector<2x8x8x256xbf16>
    %43 = vector.shape_cast %42 : vector<2x8x8x256xbf16> to vector<128x256xbf16>
    %c0_51 = arith.constant 0 : index
    %c0_52 = arith.constant 0 : index
    %c0_53 = arith.constant 0 : index
    %44 = vector.load %arg5[%c0_51, %c0_52, %c0_53] : memref<9x256x256xbf16, #tpu.memory_space<vmem>>, vector<1x256x256xbf16>
    %45 = vector.shape_cast %44 : vector<1x256x256xbf16> to vector<256x256xbf16>
    %cst_54 = arith.constant dense<0.000000e+00> : vector<128x256xf32>
    %46 = tpu.matmul %43, %45, %cst_54 {dimension_numbers = #tpu.dot_dimension_numbers<[1], [0], [0], [1], [0, 0, 1, 1], [], []>} : vector<128x256xbf16>, vector<256x256xbf16>, vector<128x256xf32> -> vector<128x256xf32>
    %47 = arith.addf %41, %46 : vector<128x256xf32>
    %c0_55 = arith.constant 0 : index
    %c0_56 = arith.constant 0 : index
    %c1_57 = arith.constant 1 : index
    %c0_58 = arith.constant 0 : index
    %48 = vector.load %arg9[%c0_55, %c0_56, %c1_57, %c0_58] : memref<2x10x10x256xbf16, #tpu.memory_space<vmem>>, vector<2x8x8x256xbf16>
    %49 = vector.shape_cast %48 : vector<2x8x8x256xbf16> to vector<128x256xbf16>
    %c1_59 = arith.constant 1 : index
    %c0_60 = arith.constant 0 : index
    %c0_61 = arith.constant 0 : index
    %50 = vector.load %arg5[%c1_59, %c0_60, %c0_61] : memref<9x256x256xbf16, #tpu.memory_space<vmem>>, vector<1x256x256xbf16>
    %51 = vector.shape_cast %50 : vector<1x256x256xbf16> to vector<256x256xbf16>
    %cst_62 = arith.constant dense<0.000000e+00> : vector<128x256xf32>
    %52 = tpu.matmul %49, %51, %cst_62 {dimension_numbers = #tpu.dot_dimension_numbers<[1], [0], [0], [1], [0, 0, 1, 1], [], []>} : vector<128x256xbf16>, vector<256x256xbf16>, vector<128x256xf32> -> vector<128x256xf32>
    %53 = arith.addf %47, %52 : vector<128x256xf32>
    %c0_63 = arith.constant 0 : index
    %c0_64 = arith.constant 0 : index
    %c2 = arith.constant 2 : index
    %c0_65 = arith.constant 0 : index
    %54 = vector.load %arg9[%c0_63, %c0_64, %c2, %c0_65] : memref<2x10x10x256xbf16, #tpu.memory_space<vmem>>, vector<2x8x8x256xbf16>
    %55 = vector.shape_cast %54 : vector<2x8x8x256xbf16> to vector<128x256xbf16>
    %c2_66 = arith.constant 2 : index
    %c0_67 = arith.constant 0 : index
    %c0_68 = arith.constant 0 : index
    %56 = vector.load %arg5[%c2_66, %c0_67, %c0_68] : memref<9x256x256xbf16, #tpu.memory_space<vmem>>, vector<1x256x256xbf16>
    %57 = vector.shape_cast %56 : vector<1x256x256xbf16> to vector<256x256xbf16>
    %cst_69 = arith.constant dense<0.000000e+00> : vector<128x256xf32>
    %58 = tpu.matmul %55, %57, %cst_69 {dimension_numbers = #tpu.dot_dimension_numbers<[1], [0], [0], [1], [0, 0, 1, 1], [], []>} : vector<128x256xbf16>, vector<256x256xbf16>, vector<128x256xf32> -> vector<128x256xf32>
    %59 = arith.addf %53, %58 : vector<128x256xf32>
    %c0_70 = arith.constant 0 : index
    %c1_71 = arith.constant 1 : index
    %c0_72 = arith.constant 0 : index
    %c0_73 = arith.constant 0 : index
    %60 = vector.load %arg9[%c0_70, %c1_71, %c0_72, %c0_73] : memref<2x10x10x256xbf16, #tpu.memory_space<vmem>>, vector<2x8x8x256xbf16>
    %61 = vector.shape_cast %60 : vector<2x8x8x256xbf16> to vector<128x256xbf16>
    %c3 = arith.constant 3 : index
    %c0_74 = arith.constant 0 : index
    %c0_75 = arith.constant 0 : index
    %62 = vector.load %arg5[%c3, %c0_74, %c0_75] : memref<9x256x256xbf16, #tpu.memory_space<vmem>>, vector<1x256x256xbf16>
    %63 = vector.shape_cast %62 : vector<1x256x256xbf16> to vector<256x256xbf16>
    %cst_76 = arith.constant dense<0.000000e+00> : vector<128x256xf32>
    %64 = tpu.matmul %61, %63, %cst_76 {dimension_numbers = #tpu.dot_dimension_numbers<[1], [0], [0], [1], [0, 0, 1, 1], [], []>} : vector<128x256xbf16>, vector<256x256xbf16>, vector<128x256xf32> -> vector<128x256xf32>
    %65 = arith.addf %59, %64 : vector<128x256xf32>
    %c0_77 = arith.constant 0 : index
    %c1_78 = arith.constant 1 : index
    %c1_79 = arith.constant 1 : index
    %c0_80 = arith.constant 0 : index
    %66 = vector.load %arg9[%c0_77, %c1_78, %c1_79, %c0_80] : memref<2x10x10x256xbf16, #tpu.memory_space<vmem>>, vector<2x8x8x256xbf16>
    %67 = vector.shape_cast %66 : vector<2x8x8x256xbf16> to vector<128x256xbf16>
    %c4 = arith.constant 4 : index
    %c0_81 = arith.constant 0 : index
    %c0_82 = arith.constant 0 : index
    %68 = vector.load %arg5[%c4, %c0_81, %c0_82] : memref<9x256x256xbf16, #tpu.memory_space<vmem>>, vector<1x256x256xbf16>
    %69 = vector.shape_cast %68 : vector<1x256x256xbf16> to vector<256x256xbf16>
    %cst_83 = arith.constant dense<0.000000e+00> : vector<128x256xf32>
    %70 = tpu.matmul %67, %69, %cst_83 {dimension_numbers = #tpu.dot_dimension_numbers<[1], [0], [0], [1], [0, 0, 1, 1], [], []>} : vector<128x256xbf16>, vector<256x256xbf16>, vector<128x256xf32> -> vector<128x256xf32>
    %71 = arith.addf %65, %70 : vector<128x256xf32>
    %c0_84 = arith.constant 0 : index
    %c1_85 = arith.constant 1 : index
    %c2_86 = arith.constant 2 : index
    %c0_87 = arith.constant 0 : index
    %72 = vector.load %arg9[%c0_84, %c1_85, %c2_86, %c0_87] : memref<2x10x10x256xbf16, #tpu.memory_space<vmem>>, vector<2x8x8x256xbf16>
    %73 = vector.shape_cast %72 : vector<2x8x8x256xbf16> to vector<128x256xbf16>
    %c5 = arith.constant 5 : index
    %c0_88 = arith.constant 0 : index
    %c0_89 = arith.constant 0 : index
    %74 = vector.load %arg5[%c5, %c0_88, %c0_89] : memref<9x256x256xbf16, #tpu.memory_space<vmem>>, vector<1x256x256xbf16>
    %75 = vector.shape_cast %74 : vector<1x256x256xbf16> to vector<256x256xbf16>
    %cst_90 = arith.constant dense<0.000000e+00> : vector<128x256xf32>
    %76 = tpu.matmul %73, %75, %cst_90 {dimension_numbers = #tpu.dot_dimension_numbers<[1], [0], [0], [1], [0, 0, 1, 1], [], []>} : vector<128x256xbf16>, vector<256x256xbf16>, vector<128x256xf32> -> vector<128x256xf32>
    %77 = arith.addf %71, %76 : vector<128x256xf32>
    %c0_91 = arith.constant 0 : index
    %c2_92 = arith.constant 2 : index
    %c0_93 = arith.constant 0 : index
    %c0_94 = arith.constant 0 : index
    %78 = vector.load %arg9[%c0_91, %c2_92, %c0_93, %c0_94] : memref<2x10x10x256xbf16, #tpu.memory_space<vmem>>, vector<2x8x8x256xbf16>
    %79 = vector.shape_cast %78 : vector<2x8x8x256xbf16> to vector<128x256xbf16>
    %c6 = arith.constant 6 : index
    %c0_95 = arith.constant 0 : index
    %c0_96 = arith.constant 0 : index
    %80 = vector.load %arg5[%c6, %c0_95, %c0_96] : memref<9x256x256xbf16, #tpu.memory_space<vmem>>, vector<1x256x256xbf16>
    %81 = vector.shape_cast %80 : vector<1x256x256xbf16> to vector<256x256xbf16>
    %cst_97 = arith.constant dense<0.000000e+00> : vector<128x256xf32>
    %82 = tpu.matmul %79, %81, %cst_97 {dimension_numbers = #tpu.dot_dimension_numbers<[1], [0], [0], [1], [0, 0, 1, 1], [], []>} : vector<128x256xbf16>, vector<256x256xbf16>, vector<128x256xf32> -> vector<128x256xf32>
    %83 = arith.addf %77, %82 : vector<128x256xf32>
    %c0_98 = arith.constant 0 : index
    %c2_99 = arith.constant 2 : index
    %c1_100 = arith.constant 1 : index
    %c0_101 = arith.constant 0 : index
    %84 = vector.load %arg9[%c0_98, %c2_99, %c1_100, %c0_101] : memref<2x10x10x256xbf16, #tpu.memory_space<vmem>>, vector<2x8x8x256xbf16>
    %85 = vector.shape_cast %84 : vector<2x8x8x256xbf16> to vector<128x256xbf16>
    %c7 = arith.constant 7 : index
    %c0_102 = arith.constant 0 : index
    %c0_103 = arith.constant 0 : index
    %86 = vector.load %arg5[%c7, %c0_102, %c0_103] : memref<9x256x256xbf16, #tpu.memory_space<vmem>>, vector<1x256x256xbf16>
    %87 = vector.shape_cast %86 : vector<1x256x256xbf16> to vector<256x256xbf16>
    %cst_104 = arith.constant dense<0.000000e+00> : vector<128x256xf32>
    %88 = tpu.matmul %85, %87, %cst_104 {dimension_numbers = #tpu.dot_dimension_numbers<[1], [0], [0], [1], [0, 0, 1, 1], [], []>} : vector<128x256xbf16>, vector<256x256xbf16>, vector<128x256xf32> -> vector<128x256xf32>
    %89 = arith.addf %83, %88 : vector<128x256xf32>
    %c0_105 = arith.constant 0 : index
    %c2_106 = arith.constant 2 : index
    %c2_107 = arith.constant 2 : index
    %c0_108 = arith.constant 0 : index
    %90 = vector.load %arg9[%c0_105, %c2_106, %c2_107, %c0_108] : memref<2x10x10x256xbf16, #tpu.memory_space<vmem>>, vector<2x8x8x256xbf16>
    %91 = vector.shape_cast %90 : vector<2x8x8x256xbf16> to vector<128x256xbf16>
    %c8 = arith.constant 8 : index
    %c0_109 = arith.constant 0 : index
    %c0_110 = arith.constant 0 : index
    %92 = vector.load %arg5[%c8, %c0_109, %c0_110] : memref<9x256x256xbf16, #tpu.memory_space<vmem>>, vector<1x256x256xbf16>
    %93 = vector.shape_cast %92 : vector<1x256x256xbf16> to vector<256x256xbf16>
    %cst_111 = arith.constant dense<0.000000e+00> : vector<128x256xf32>
    %94 = tpu.matmul %91, %93, %cst_111 {dimension_numbers = #tpu.dot_dimension_numbers<[1], [0], [0], [1], [0, 0, 1, 1], [], []>} : vector<128x256xbf16>, vector<256x256xbf16>, vector<128x256xf32> -> vector<128x256xf32>
    %95 = arith.addf %89, %94 : vector<128x256xf32>
    %c0_112 = arith.constant 0 : index
    %c0_113 = arith.constant 0 : index
    %96 = vector.load %arg6[%c0_112, %c0_113] : memref<1x256xf32, #tpu.memory_space<vmem>>, vector<1x256xf32>
    %c0_114 = arith.constant 0 : index
    %c0_115 = arith.constant 0 : index
    %97 = vector.load %arg7[%c0_114, %c0_115] : memref<1x256xf32, #tpu.memory_space<vmem>>, vector<1x256xf32>
    %cst_116 = arith.constant dense<0.000000e+00> : vector<256xf32>
    %98 = vector.multi_reduction <add>, %95, %cst_116 [0] : vector<128x256xf32> to vector<256xf32>
    %99 = vector.shape_cast %98 : vector<256xf32> to vector<1x256xf32>
    %cst_117 = arith.constant 7.812500e-03 : f32
    %100 = vector.broadcast %cst_117 : f32 to vector<1x256xf32>
    %101 = arith.mulf %99, %100 : vector<1x256xf32>
    %102 = vector.broadcast %101 : vector<1x256xf32> to vector<128x256xf32>
    %103 = arith.subf %95, %102 : vector<128x256xf32>
    %104 = arith.mulf %103, %103 : vector<128x256xf32>
    %cst_118 = arith.constant dense<0.000000e+00> : vector<256xf32>
    %105 = vector.multi_reduction <add>, %104, %cst_118 [0] : vector<128x256xf32> to vector<256xf32>
    %106 = vector.shape_cast %105 : vector<256xf32> to vector<1x256xf32>
    %cst_119 = arith.constant 7.812500e-03 : f32
    %107 = vector.broadcast %cst_119 : f32 to vector<1x256xf32>
    %108 = arith.mulf %106, %107 : vector<1x256xf32>
    %cst_120 = arith.constant 9.99999974E-6 : f32
    %109 = vector.broadcast %cst_120 : f32 to vector<1x256xf32>
    %110 = arith.addf %108, %109 : vector<1x256xf32>
    %111 = math.rsqrt %110 : vector<1x256xf32>
    %112 = vector.broadcast %111 : vector<1x256xf32> to vector<128x256xf32>
    %113 = arith.mulf %103, %112 : vector<128x256xf32>
    %114 = vector.broadcast %96 : vector<1x256xf32> to vector<128x256xf32>
    %115 = arith.mulf %113, %114 : vector<128x256xf32>
    %116 = vector.broadcast %97 : vector<1x256xf32> to vector<128x256xf32>
    %117 = arith.addf %115, %116 : vector<128x256xf32>
    %cst_121 = arith.constant 0.000000e+00 : f32
    %118 = vector.broadcast %cst_121 : f32 to vector<128x256xf32>
    %119 = arith.maximumf %117, %118 : vector<128x256xf32>
    %120 = vector.shape_cast %119 : vector<128x256xf32> to vector<2x8x8x256xf32>
    %c0_122 = arith.constant 0 : index
    %c0_123 = arith.constant 0 : index
    %c0_124 = arith.constant 0 : index
    %c0_125 = arith.constant 0 : index
    %121 = vector.load %arg8[%c0_122, %c0_123, %c0_124, %c0_125] : memref<2x8x8x256xf32, #tpu.memory_space<vmem>>, vector<2x8x8x256xf32>
    tpu.vector_store %arg8[%c0_122, %c0_123, %c0_124, %c0_125], %120 {strides = array<i32>} : memref<2x8x8x256xf32, #tpu.memory_space<vmem>>, vector<2x8x8x256xf32>,
    return
  }
}

</mosaic_0001>

<llo_original>
// kernel: tpu_custom_call.1
$region0: #{tpu_custom_call.1}
  #allocation0 [shape = 'u32[]', space=smem, size = 0x4, offset = 0x4, fixed_abs, tag = 'smem constant byte address 0x4 - core index']
  #allocation1 [shape = 'u32[144,128]{1,0:T(1,128)}', space=vmem, size = 0x12000, scoped, tag = 'internal scratch']
  #allocation2 [shape = 'bf16[2,10,10,256]{3,2,1,0:T(8,128)(2,1)}', space=vmem, size = 0x28000, scoped, tag = 'scratch operand']
  %s0 = inlined_call_operand.hbm [shape: bf16[2,8,8,32], index: 0, kind: input, shape index: {}]
  %s1 = inlined_call_operand.hbm [shape: bf16[2,8,8,64], index: 1, kind: input, shape index: {}]
  %s2 = inlined_call_operand.hbm [shape: bf16[32,128], index: 2, kind: input, shape index: {}]
  %s3 = inlined_call_operand.hbm [shape: f32[1,128], index: 3, kind: input, shape index: {}]
  %s4 = inlined_call_operand.hbm [shape: f32[1,128], index: 4, kind: input, shape index: {}]
  %s5 = inlined_call_operand.hbm [shape: bf16[9,256,256], index: 5, kind: input, shape index: {}]
  %s6 = inlined_call_operand.hbm [shape: f32[1,256], index: 6, kind: input, shape index: {}]
  %s7 = inlined_call_operand.hbm [shape: f32[1,256], index: 7, kind: input, shape index: {}]
  %s8 = inlined_call_operand.hbm [shape: f32[2,8,8,256], index: 8, kind: output, shape index: {}]
  %s9 = sld [smem:[#allocation0]]
  $region74: #{tpu_custom_call.1} parent=0
    _
  %s11 = ssub.s32 1, %s9
  %s12 = scalar_select 0, %s11, %s9
  $region1: #{tpu_custom_call.1} parent=0
    #allocation3 [shape = 'u8[32768]{0}', space=vmem, size = 0x8000, scoped, tag = 'input window, operand 0, single buffered']
    #allocation4 [shape = 's32[1]{0}', space=sflag, size = 0x4, scoped, tag = 'scoped memory for tpu_custom_call.1']
    #allocation5 [shape = 's32[1]{0}', space=sflag, size = 0x4, scoped, tag = 'scoped memory for tpu_custom_call.1']
    #allocation6 [shape = 'u8[32768]{0}', space=vmem, size = 0x8000, scoped, tag = 'input window, operand 1, single buffered']
    #allocation7 [shape = 's32[1]{0}', space=sflag, size = 0x4, scoped, tag = 'scoped memory for tpu_custom_call.1']
    #allocation8 [shape = 'u8[8192]{0}', space=vmem, size = 0x2000, scoped, tag = 'input window, operand 2, single buffered']
    #allocation9 [shape = 'u8[512]{0}', space=vmem, size = 0x400, scoped, tag = 'input window, operand 3, single buffered']
    #allocation10 [shape = 's32[1]{0}', space=sflag, size = 0x4, scoped, tag = 'scoped memory for tpu_custom_call.1']
    #allocation11 [shape = 'u8[512]{0}', space=vmem, size = 0x400, scoped, tag = 'input window, operand 4, single buffered']
    #allocation12 [shape = 'u8[1179648]{0}', space=vmem, size = 0x120000, scoped, tag = 'input window, operand 5, single buffered']
    #allocation13 [shape = 's32[1]{0}', space=sflag, size = 0x4, scoped, tag = 'scoped memory for tpu_custom_call.1']
    #allocation14 [shape = 'u8[1024]{0}', space=vmem, size = 0x400, scoped, tag = 'input window, operand 6, single buffered']
    #allocation15 [shape = 'u8[1024]{0}', space=vmem, size = 0x400, scoped, tag = 'input window, operand 7, single buffered']
    #allocation16 [shape = 's32[1]{0}', space=sflag, size = 0x4, scoped, tag = 'scoped memory for tpu_custom_call.1']
    #allocation17 [shape = 'u8[131072]{0}', space=vmem, size = 0x20000, scoped, tag = 'output window, operand 0, single buffered']
    %13 = vsyncpa [#allocation4], 0
    %14 = vsyncpa [#allocation7], 0
    %15 = vsyncpa [#allocation10], 0
    %16 = vsyncpa [#allocation13], 0
    %17 = vsyncpa [#allocation16], 0
    %18 = vsyncpa [#allocation5], 0
    // Predicated region
    $region2: #{tpu_custom_call.1} parent=1 // pred_check
      _
    $region3: #{tpu_custom_call.1} parent=1 // pred_check_branch
      %20 = sbr.rel (0) target = $region5
    $region4: #{tpu_custom_call.1} parent=1 // pred_region
      %s22 = ssub.s32 1024, 1024
      %23 = vsyncadd [#allocation4], %s22
      %s24 = sshll.u32 [#allocation3], 4
      %s25 = int_to_ptr.vmem [resolvable:$true] %s24
      %30 = dma.hbm_to_vmem [thread:$0]  %s0, 1024, %s25, [#allocation4], 64, 64, 4
    $region5: #{tpu_custom_call.1} parent=1 // pred_fallthru
      _
    // Predicated region
    $region6: #{tpu_custom_call.1} parent=1 // pred_check
      _
    $region7: #{tpu_custom_call.1} parent=1 // pred_check_branch
      %32 = sbr.rel (0) target = $region9
    $region8: #{tpu_custom_call.1} parent=1 // pred_region
      %s34 = ssub.s32 1024, 1024
      %35 = vsyncadd [#allocation7], %s34
      %s36 = sshll.u32 [#allocation6], 4
      %s37 = int_to_ptr.vmem [resolvable:$true] %s36
      %42 = dma.hbm_to_vmem [thread:$0]  %s1, 1024, %s37, [#allocation7], 64, 64, 4
    $region9: #{tpu_custom_call.1} parent=1 // pred_fallthru
      _
    // Predicated region
    $region10: #{tpu_custom_call.1} parent=1 // pred_check
      _
    $region11: #{tpu_custom_call.1} parent=1 // pred_check_branch
      %44 = sbr.rel (0) target = $region13
    $region12: #{tpu_custom_call.1} parent=1 // pred_region
      %s46 = ssub.s32 256, 256
      %47 = vsyncadd [#allocation7], %s46
      %s48 = sshll.u32 [#allocation8], 4
      %s49 = int_to_ptr.vmem [resolvable:$true] %s48
      %54 = dma.hbm_to_vmem [thread:$0]  %s2, 256, %s49, [#allocation7], 64, 64, 4
    $region13: #{tpu_custom_call.1} parent=1 // pred_fallthru
      _
    // Predicated region
    $region14: #{tpu_custom_call.1} parent=1 // pred_check
      _
    $region15: #{tpu_custom_call.1} parent=1 // pred_check_branch
      %56 = sbr.rel (0) target = $region17
    $region16: #{tpu_custom_call.1} parent=1 // pred_region
      %s58 = ssub.s32 16, 16
      %59 = vsyncadd [#allocation10], %s58
      %s61 = sshll.u32 [#allocation9], 4
      %s62 = int_to_ptr.vmem [resolvable:$true] %s61
      %64 = dma.hbm_to_vmem [thread:$0]  %s3, 16, %s62, [#allocation10]
    $region17: #{tpu_custom_call.1} parent=1 // pred_fallthru
      _
    // Predicated region
    $region18: #{tpu_custom_call.1} parent=1 // pred_check
      _
    $region19: #{tpu_custom_call.1} parent=1 // pred_check_branch
      %66 = sbr.rel (0) target = $region21
    $region20: #{tpu_custom_call.1} parent=1 // pred_region
      %s68 = ssub.s32 16, 16
      %69 = vsyncadd [#allocation10], %s68
      %s71 = sshll.u32 [#allocation11], 4
      %s72 = int_to_ptr.vmem [resolvable:$true] %s71
      %74 = dma.hbm_to_vmem [thread:$0]  %s4, 16, %s72, [#allocation10]
    $region21: #{tpu_custom_call.1} parent=1 // pred_fallthru
      _
    // Predicated region
    $region22: #{tpu_custom_call.1} parent=1 // pred_check
      _
    $region23: #{tpu_custom_call.1} parent=1 // pred_check_branch
      %76 = sbr.rel (0) target = $region25
    $region24: #{tpu_custom_call.1} parent=1 // pred_region
      %s78 = ssub.s32 36864, 36864
      %79 = vsyncadd [#allocation13], %s78
      %s80 = sshll.u32 [#allocation12], 4
      %s81 = int_to_ptr.vmem [resolvable:$true] %s80
      %86 = dma.hbm_to_vmem [thread:$0]  %s5, 36864, %s81, [#allocation13], 128, 128, 8
    $region25: #{tpu_custom_call.1} parent=1 // pred_fallthru
      _
    // Predicated region
    $region26: #{tpu_custom_call.1} parent=1 // pred_check
      _
    $region27: #{tpu_custom_call.1} parent=1 // pred_check_branch
      %88 = sbr.rel (0) target = $region29
    $region28: #{tpu_custom_call.1} parent=1 // pred_region
      %s90 = ssub.s32 32, 32
      %91 = vsyncadd [#allocation13], %s90
      %s93 = sshll.u32 [#allocation14], 4
      %s94 = int_to_ptr.vmem [resolvable:$true] %s93
      %96 = dma.hbm_to_vmem [thread:$0]  %s6, 32, %s94, [#allocation13]
    $region29: #{tpu_custom_call.1} parent=1 // pred_fallthru
      _
    // Predicated region
    $region30: #{tpu_custom_call.1} parent=1 // pred_check
      _
    $region31: #{tpu_custom_call.1} parent=1 // pred_check_branch
      %98 = sbr.rel (0) target = $region33
    $region32: #{tpu_custom_call.1} parent=1 // pred_region
      %s100 = ssub.s32 32, 32
      %101 = vsyncadd [#allocation16], %s100
      %s103 = sshll.u32 [#allocation15], 4
      %s104 = int_to_ptr.vmem [resolvable:$true] %s103
      %106 = dma.hbm_to_vmem [thread:$0]  %s7, 32, %s104, [#allocation16]
    $region33: #{tpu_custom_call.1} parent=1 // pred_fallthru
      _
    // Predicated region
    $region34: #{tpu_custom_call.1} parent=1 // pred_check
      _
    $region35: #{tpu_custom_call.1} parent=1 // pred_check_branch
      %108 = sbr.rel (0) target = $region37
    $region36: #{tpu_custom_call.1} parent=1 // pred_region
      %109 = dma.done [#allocation4], 1024
    $region37: #{tpu_custom_call.1} parent=1 // pred_fallthru
      _
    // Predicated region
    $region38: #{tpu_custom_call.1} parent=1 // pred_check
      _
    $region39: #{tpu_custom_call.1} parent=1 // pred_check_branch
      %111 = sbr.rel (0) target = $region41
    $region40: #{tpu_custom_call.1} parent=1 // pred_region
      %112 = dma.done [#allocation7], 1024
    $region41: #{tpu_custom_call.1} parent=1 // pred_fallthru
      _
    // Predicated region
    $region42: #{tpu_custom_call.1} parent=1 // pred_check
      _
    $region43: #{tpu_custom_call.1} parent=1 // pred_check_branch
      %114 = sbr.rel (0) target = $region45
    $region44: #{tpu_custom_call.1} parent=1 // pred_region
      %115 = dma.done [#allocation7], 256
    $region45: #{tpu_custom_call.1} parent=1 // pred_fallthru
      _
    // Predicated region
    $region46: #{tpu_custom_call.1} parent=1 // pred_check
      _
    $region47: #{tpu_custom_call.1} parent=1 // pred_check_branch
      %117 = sbr.rel (0) target = $region49
    $region48: #{tpu_custom_call.1} parent=1 // pred_region
      %118 = dma.done [#allocation10], 16
    $region49: #{tpu_custom_call.1} parent=1 // pred_fallthru
      _
    // Predicated region
    $region50: #{tpu_custom_call.1} parent=1 // pred_check
      _
    $region51: #{tpu_custom_call.1} parent=1 // pred_check_branch
      %120 = sbr.rel (0) target = $region53
    $region52: #{tpu_custom_call.1} parent=1 // pred_region
      %121 = dma.done [#allocation10], 16
    $region53: #{tpu_custom_call.1} parent=1 // pred_fallthru
      _
    // Predicated region
    $region54: #{tpu_custom_call.1} parent=1 // pred_check
      _
    $region55: #{tpu_custom_call.1} parent=1 // pred_check_branch
      %123 = sbr.rel (0) target = $region57
    $region56: #{tpu_custom_call.1} parent=1 // pred_region
      %124 = dma.done [#allocation13], 36864
    $region57: #{tpu_custom_call.1} parent=1 // pred_fallthru
      _
    // Predicated region
    $region58: #{tpu_custom_call.1} parent=1 // pred_check
      _
    $region59: #{tpu_custom_call.1} parent=1 // pred_check_branch
      %126 = sbr.rel (0) target = $region61
    $region60: #{tpu_custom_call.1} parent=1 // pred_region
      %127 = dma.done [#allocation13], 32
    $region61: #{tpu_custom_call.1} parent=1 // pred_fallthru
      _
    // Predicated region
    $region62: #{tpu_custom_call.1} parent=1 // pred_check
      _
    $region63: #{tpu_custom_call.1} parent=1 // pred_check_branch
      %129 = sbr.rel (0) target = $region65
    $region64: #{tpu_custom_call.1} parent=1 // pred_region
      %130 = dma.done [#allocation16], 32
    $region65: #{tpu_custom_call.1} parent=1 // pred_fallthru
      _
    %v132 = vld [vmem:[#allocation3] sm:$0xf]
    %v133 = vld [vmem:[#allocation3 + $0x4] sm:$0xf]
    %v134 = vld [vmem:[#allocation3 + $0x8] sm:$0xf]
    %v135 = vld [vmem:[#allocation3 + $0xc] sm:$0xf]
    %v136 = vld [vmem:[#allocation3 + $0x10] sm:$0xf]
    %v137 = vld [vmem:[#allocation3 + $0x14] sm:$0xf]
    %v138 = vld [vmem:[#allocation3 + $0x18] sm:$0xf]
    %v139 = vld [vmem:[#allocation3 + $0x1c] sm:$0xf]
    %v140 = vld [vmem:[#allocation3 + $0x20] sm:$0xf]
    %v141 = vld [vmem:[#allocation3 + $0x24] sm:$0xf]
    %v142 = vld [vmem:[#allocation3 + $0x28] sm:$0xf]
    %v143 = vld [vmem:[#allocation3 + $0x2c] sm:$0xf]
    %v144 = vld [vmem:[#allocation3 + $0x30] sm:$0xf]
    %v145 = vld [vmem:[#allocation3 + $0x34] sm:$0xf]
    %v146 = vld [vmem:[#allocation3 + $0x38] sm:$0xf]
    %v147 = vld [vmem:[#allocation3 + $0x3c] sm:$0xf]
    %v148 = vld [vmem:[#allocation8] sm:$0xf]
    %v149 = vld [vmem:[#allocation8 + $0x4] sm:$0xf]
    %v150 = vld [vmem:[#allocation8 + $0x8] sm:$0xf]
    %v151 = vld [vmem:[#allocation8 + $0xc] sm:$0xf]
    %v168 = vunpack.c.l.b16 %v132
    %v169 = vunpack.c.l.b16 %v133
    %v170 = vunpack.c.l.b16 %v134
    %v171 = vunpack.c.l.b16 %v135
    %v172 = vunpack.c.l.b16 %v136
    %v173 = vunpack.c.l.b16 %v137
    %v174 = vunpack.c.l.b16 %v138
    %v175 = vunpack.c.l.b16 %v139
    %v176 = vunpack.c.l.b16 %v140
    %v177 = vunpack.c.l.b16 %v141
    %v178 = vunpack.c.l.b16 %v142
    %v179 = vunpack.c.l.b16 %v143
    %v180 = vunpack.c.l.b16 %v144
    %v181 = vunpack.c.l.b16 %v145
    %v182 = vunpack.c.l.b16 %v146
    %v183 = vunpack.c.l.b16 %v147
    %v184 = vpack.c.b16 %v169, %v168
    %v185 = vpack.c.b16 %v171, %v170
    %v186 = vpack.c.b16 %v173, %v172
    %v187 = vpack.c.b16 %v175, %v174
    %v188 = vpack.c.b16 %v177, %v176
    %v189 = vpack.c.b16 %v179, %v178
    %v190 = vpack.c.b16 %v181, %v180
    %v191 = vpack.c.b16 %v183, %v182
    %v196 = vunpack.c.l.b16 %v148
    %v197 = vunpack.c.l.b16 %v149
    %v198 = vunpack.c.l.b16 %v150
    %v199 = vunpack.c.l.b16 %v151
    %v200 = vpack.c.b16 %v197, %v196
    %v201 = vpack.c.b16 %v199, %v198
    %vm204 = vcmask 261120
    %v206 = vsel %vm204, %v184, 0
    %v209 = vsel %vm204, %v185, 0
    %v212 = vsel %vm204, %v186, 0
    %v215 = vsel %vm204, %v187, 0
    %v218 = vsel %vm204, %v188, 0
    %v221 = vsel %vm204, %v189, 0
    %v224 = vsel %vm204, %v190, 0
    %v227 = vsel %vm204, %v191, 0
    %229 = vmatprep.subr.bf16.mxu0 0
    %230 = vmatpush1.bf16.msra.mxu0 0
    %231 = vmatprep.subr.bf16.mxu0 0
    %232 = vmatpush1.bf16.msra.mxu0 0
    %233 = vmatprep.subr.bf16.mxu0 0
    %234 = vmatpush1.bf16.msra.mxu0 0
    %235 = vmatprep.subr.bf16.mxu0 0
    %236 = vmatpush1.bf16.msra.mxu0 0
    %237 = vmatprep.subr.bf16.mxu0 0
    %238 = vmatpush1.bf16.msra.mxu0 0
    %239 = vmatprep.subr.bf16.mxu0 0
    %240 = vmatpush1.bf16.msra.mxu0 0
    %241 = vmatprep.subr.bf16.mxu0 0
    %242 = vmatpush1.bf16.msra.mxu0 %v201
    %243 = vmatprep.subr.bf16.mxu0 0
    %244 = vmatpush1.bf16.msra.mxu0 %v200
    %245 = vmatprep.subr.bf16.mxu0 0
    %246 = vmatpush2.bf16.msra.mxu0 0
    %247 = vmatprep.subr.bf16.mxu0 0
    %248 = vmatpush2.bf16.msra.mxu0 0
    %249 = vmatprep.subr.bf16.mxu0 0
    %250 = vmatpush2.bf16.msra.mxu0 0
    %251 = vmatprep.subr.bf16.mxu0 0
    %252 = vmatpush2.bf16.msra.mxu0 0
    %253 = vmatprep.subr.bf16.mxu0 0
    %254 = vmatpush2.bf16.msra.mxu0 0
    %255 = vmatprep.subr.bf16.mxu0 0
    %256 = vmatpush2.bf16.msra.mxu0 0
    %257 = vmatprep.subr.bf16.mxu0 0
    %258 = vmatpush2.bf16.msra.mxu0 0
    %259 = vmatprep.subr.bf16.mxu0 0
    %260 = vmatpush2.bf16.msra.mxu0 0
    %261 = vmatprep.mubr.bf16.mxu0 0
    %262 = vmatmul.mubr.bf16.gmra.mxu0 %v206
    %v263 = vpop.f32.mrf.mxu0
    %v264 = vadd.f32 0.0, %v263
    %v265 = vpop.f32.mrf.mxu0
    %v266 = vpop.f32.mrf.mxu0
    %v267 = vadd.f32 0.0, %v266
    %v268 = vpop.f32.mrf.mxu0
    %269 = vmatprep.mubr.bf16.mxu0 0
    %270 = vmatmul.mubr.bf16.gmra.mxu0 %v209
    %v271 = vpop.f32.mrf.mxu0
    %v272 = vadd.f32 0.0, %v271
    %v273 = vpop.f32.mrf.mxu0
    %v274 = vpop.f32.mrf.mxu0
    %v275 = vadd.f32 0.0, %v274
    %v276 = vpop.f32.mrf.mxu0
    %277 = vmatprep.mubr.bf16.mxu0 0
    %278 = vmatmul.mubr.bf16.gmra.mxu0 %v212
    %v279 = vpop.f32.mrf.mxu0
    %v280 = vadd.f32 0.0, %v279
    %v281 = vpop.f32.mrf.mxu0
    %v282 = vpop.f32.mrf.mxu0
    %v283 = vadd.f32 0.0, %v282
    %v284 = vpop.f32.mrf.mxu0
    %285 = vmatprep.mubr.bf16.mxu0 0
    %286 = vmatmul.mubr.bf16.gmra.mxu0 %v215
    %v287 = vpop.f32.mrf.mxu0
    %v288 = vadd.f32 0.0, %v287
    %v289 = vpop.f32.mrf.mxu0
    %v290 = vpop.f32.mrf.mxu0
    %v291 = vadd.f32 0.0, %v290
    %v292 = vpop.f32.mrf.mxu0
    %293 = vmatprep.mubr.bf16.mxu0 0
    %294 = vmatmul.mubr.bf16.gmra.mxu0 %v218
    %v295 = vpop.f32.mrf.mxu0
    %v296 = vadd.f32 0.0, %v295
    %v297 = vpop.f32.mrf.mxu0
    %v298 = vpop.f32.mrf.mxu0
    %v299 = vadd.f32 0.0, %v298
    %v300 = vpop.f32.mrf.mxu0
    %301 = vmatprep.mubr.bf16.mxu0 0
    %302 = vmatmul.mubr.bf16.gmra.mxu0 %v221
    %v303 = vpop.f32.mrf.mxu0
    %v304 = vadd.f32 0.0, %v303
    %v305 = vpop.f32.mrf.mxu0
    %v306 = vpop.f32.mrf.mxu0
    %v307 = vadd.f32 0.0, %v306
    %v308 = vpop.f32.mrf.mxu0
    %309 = vmatprep.mubr.bf16.mxu0 0
    %310 = vmatmul.mubr.bf16.gmra.mxu0 %v224
    %v311 = vpop.f32.mrf.mxu0
    %v312 = vadd.f32 0.0, %v311
    %v313 = vpop.f32.mrf.mxu0
    %v314 = vpop.f32.mrf.mxu0
    %v315 = vadd.f32 0.0, %v314
    %v316 = vpop.f32.mrf.mxu0
    %317 = vmatprep.mubr.bf16.mxu0 0
    %318 = vmatmul.mubr.bf16.gmra.mxu0 %v227
    %v319 = vpop.f32.mrf.mxu0
    %v320 = vadd.f32 0.0, %v319
    %v321 = vpop.f32.mrf.mxu0
    %v322 = vpop.f32.mrf.mxu0
    %v323 = vadd.f32 0.0, %v322
    %v324 = vpop.f32.mrf.mxu0
    %325 = vdwg.mxu0
    %v326 = vld [vmem:[#allocation9] sm:$0x1]
    %v327 = vld [vmem:[#allocation11] sm:$0x1]
    %v328 = vadd.f32 %v264, %v267
    %v329 = vadd.f32 %v328, %v272
    %v330 = vadd.f32 %v329, %v275
    %v331 = vadd.f32 %v330, %v280
    %v332 = vadd.f32 %v331, %v283
    %v333 = vadd.f32 %v332, %v288
    %v334 = vadd.f32 %v333, %v291
    %v335 = vadd.f32 %v334, %v296
    %v336 = vadd.f32 %v335, %v299
    %v337 = vadd.f32 %v336, %v304
    %v338 = vadd.f32 %v337, %v307
    %v339 = vadd.f32 %v338, %v312
    %v340 = vadd.f32 %v339, %v315
    %v341 = vadd.f32 %v340, %v320
    %v342 = vadd.f32 %v341, %v323
    %v343 = vrot.slane %v342, 4
    %v344 = vadd.f32 %v342, %v343
    %v345 = vrot.slane %v344, 2
    %v346 = vadd.f32 %v344, %v345
    %v347 = vrot.slane %v346, 1
    %v348 = vadd.f32 %v346, %v347
    %v349 = vmul.f32 %v348, 0.0078125
    %v350 = vsub.f32 %v264, %v349
    %v351 = vsub.f32 %v267, %v349
    %v352 = vsub.f32 %v272, %v349
    %v353 = vsub.f32 %v275, %v349
    %v354 = vsub.f32 %v280, %v349
    %v355 = vsub.f32 %v283, %v349
    %v356 = vsub.f32 %v288, %v349
    %v357 = vsub.f32 %v291, %v349
    %v358 = vsub.f32 %v296, %v349
    %v359 = vsub.f32 %v299, %v349
    %v360 = vsub.f32 %v304, %v349
    %v361 = vsub.f32 %v307, %v349
    %v362 = vsub.f32 %v312, %v349
    %v363 = vsub.f32 %v315, %v349
    %v364 = vsub.f32 %v320, %v349
    %v365 = vsub.f32 %v323, %v349
    %v366 = vmul.f32 %v350, %v350
    %v367 = vmul.f32 %v351, %v351
    %v368 = vmul.f32 %v352, %v352
    %v369 = vmul.f32 %v353, %v353
    %v370 = vmul.f32 %v354, %v354
    %v371 = vmul.f32 %v355, %v355
    %v372 = vmul.f32 %v356, %v356
    %v373 = vmul.f32 %v357, %v357
    %v374 = vmul.f32 %v358, %v358
    %v375 = vmul.f32 %v359, %v359
    %v376 = vmul.f32 %v360, %v360
    %v377 = vmul.f32 %v361, %v361
    %v378 = vmul.f32 %v362, %v362
    %v379 = vmul.f32 %v363, %v363
    %v380 = vmul.f32 %v364, %v364
    %v381 = vmul.f32 %v365, %v365
    %v382 = vadd.f32 %v366, %v367
    %v383 = vadd.f32 %v382, %v368
    %v384 = vadd.f32 %v383, %v369
    %v385 = vadd.f32 %v384, %v370
    %v386 = vadd.f32 %v385, %v371
    %v387 = vadd.f32 %v386, %v372
    %v388 = vadd.f32 %v387, %v373
    %v389 = vadd.f32 %v388, %v374
    %v390 = vadd.f32 %v389, %v375
    %v391 = vadd.f32 %v390, %v376
    %v392 = vadd.f32 %v391, %v377
    %v393 = vadd.f32 %v392, %v378
    %v394 = vadd.f32 %v393, %v379
    %v395 = vadd.f32 %v394, %v380
    %v396 = vadd.f32 %v395, %v381
    %v397 = vrot.slane %v396, 4
    %v398 = vadd.f32 %v396, %v397
    %v399 = vrot.slane %v398, 2
    %v400 = vadd.f32 %v398, %v399
    %v401 = vrot.slane %v400, 1
    %v402 = vadd.f32 %v400, %v401
    %v403 = vmul.f32 %v402, 0.0078125
    %v404 = vadd.f32 %v403, 1e-05
    %v405 = vrsqrt.pop %v404
    %v406 = vmul.f32 %v350, %v405
    %v407 = vmul.f32 %v351, %v405
    %v408 = vmul.f32 %v352, %v405
    %v409 = vmul.f32 %v353, %v405
    %v410 = vmul.f32 %v354, %v405
    %v411 = vmul.f32 %v355, %v405
    %v412 = vmul.f32 %v356, %v405
    %v413 = vmul.f32 %v357, %v405
    %v414 = vmul.f32 %v358, %v405
    %v415 = vmul.f32 %v359, %v405
    %v416 = vmul.f32 %v360, %v405
    %v417 = vmul.f32 %v361, %v405
    %v418 = vmul.f32 %v362, %v405
    %v419 = vmul.f32 %v363, %v405
    %v420 = vmul.f32 %v364, %v405
    %v421 = vmul.f32 %v365, %v405
    %v423 = vlaneseq
    %v424 = vshrl.u32 %v423, 7
    %v425 = vsub.s32 0, %v424
    %v426 = vrot.slane %v326, %v425
    %v428 = vmul.f32 %v406, %v426
    %v429 = vmul.f32 %v407, %v426
    %v430 = vmul.f32 %v408, %v426
    %v431 = vmul.f32 %v409, %v426
    %v432 = vmul.f32 %v410, %v426
    %v433 = vmul.f32 %v411, %v426
    %v434 = vmul.f32 %v412, %v426
    %v435 = vmul.f32 %v413, %v426
    %v436 = vmul.f32 %v414, %v426
    %v437 = vmul.f32 %v415, %v426
    %v438 = vmul.f32 %v416, %v426
    %v439 = vmul.f32 %v417, %v426
    %v440 = vmul.f32 %v418, %v426
    %v441 = vmul.f32 %v419, %v426
    %v442 = vmul.f32 %v420, %v426
    %v443 = vmul.f32 %v421, %v426
    %v445 = vlaneseq
    %v446 = vshrl.u32 %v445, 7
    %v447 = vsub.s32 0, %v446
    %v448 = vrot.slane %v327, %v447
    %v450 = vadd.f32 %v428, %v448
    %v451 = vadd.f32 %v429, %v448
    %v452 = vadd.f32 %v430, %v448
    %v453 = vadd.f32 %v431, %v448
    %v454 = vadd.f32 %v432, %v448
    %v455 = vadd.f32 %v433, %v448
    %v456 = vadd.f32 %v434, %v448
    %v457 = vadd.f32 %v435, %v448
    %v458 = vadd.f32 %v436, %v448
    %v459 = vadd.f32 %v437, %v448
    %v460 = vadd.f32 %v438, %v448
    %v461 = vadd.f32 %v439, %v448
    %v462 = vadd.f32 %v440, %v448
    %v463 = vadd.f32 %v441, %v448
    %v464 = vadd.f32 %v442, %v448
    %v465 = vadd.f32 %v443, %v448
    %v466 = vmax.f32 %v450, 0.0
    %v467 = vmax.f32 %v451, 0.0
    %v468 = vmax.f32 %v452, 0.0
    %v469 = vmax.f32 %v453, 0.0
    %v470 = vmax.f32 %v454, 0.0
    %v471 = vmax.f32 %v455, 0.0
    %v472 = vmax.f32 %v456, 0.0
    %v473 = vmax.f32 %v457, 0.0
    %v474 = vmax.f32 %v458, 0.0
    %v475 = vmax.f32 %v459, 0.0
    %v476 = vmax.f32 %v460, 0.0
    %v477 = vmax.f32 %v461, 0.0
    %v478 = vmax.f32 %v462, 0.0
    %v479 = vmax.f32 %v463, 0.0
    %v480 = vmax.f32 %v464, 0.0
    %v481 = vmax.f32 %v465, 0.0
    %482 = vst [vmem:[#allocation2] sm:$0xff] 0
    %483 = vst [vmem:[#allocation2 + $0x8] sm:$0x11] 0
    %484 = vst [vmem:[#allocation2 + $0xa0] sm:$0xff] 0
    %485 = vst [vmem:[#allocation2 + $0xa8] sm:$0x11] 0
    %s486 = scalar_lea.vmem [#allocation2], 144
    %487 = vst [vmem:[%s486] sm:$0xff] 0
    %488 = vst [vmem:[%s486 + $0x8] sm:$0x11] 0
    %489 = vst [vmem:[%s486 + $0xa0] sm:$0xff] 0
    %490 = vst [vmem:[%s486 + $0xa8] sm:$0x11] 0
    %s491 = scalar_lea.vmem [#allocation2], 16
    %vm492 = vcmask 1040384
    %vm493 = vsmask.f32 256
    %vm494 = vmand %vm492, %vm493
    %vm495 = vcmask 1044484
    %vm496 = vsmask.f32 4352
    %vm497 = vmand %vm495, %vm496
    %vm498 = vmor %vm497, %vm494
    %v499 = vld [vmem:[%s491] sm:$0x11]
    %v500 = vsel %vm498, 0, %v499
    %501 = vst [vmem:[%s491] sm:$0x11] %v500
    %v502 = vld [vmem:[%s491 + $0x10] sm:$0x11]
    %v503 = vsel %vm498, 0, %v502
    %504 = vst [vmem:[%s491 + $0x10] sm:$0x11] %v503
    %v505 = vld [vmem:[%s491 + $0x20] sm:$0x11]
    %v506 = vsel %vm498, 0, %v505
    %507 = vst [vmem:[%s491 + $0x20] sm:$0x11] %v506
    %v508 = vld [vmem:[%s491 + $0x30] sm:$0x11]
    %v509 = vsel %vm498, 0, %v508
    %510 = vst [vmem:[%s491 + $0x30] sm:$0x11] %v509
    %v511 = vld [vmem:[%s491 + $0x40] sm:$0x11]
    %v512 = vsel %vm498, 0, %v511
    %513 = vst [vmem:[%s491 + $0x40] sm:$0x11] %v512
    %v514 = vld [vmem:[%s491 + $0x50] sm:$0x11]
    %v515 = vsel %vm498, 0, %v514
    %516 = vst [vmem:[%s491 + $0x50] sm:$0x11] %v515
    %v517 = vld [vmem:[%s491 + $0x60] sm:$0x11]
    %v518 = vsel %vm498, 0, %v517
    %519 = vst [vmem:[%s491 + $0x60] sm:$0x11] %v518
    %v520 = vld [vmem:[%s491 + $0x70] sm:$0x11]
    %v521 = vsel %vm498, 0, %v520
    %522 = vst [vmem:[%s491 + $0x70] sm:$0x11] %v521
    %v523 = vld [vmem:[%s491 + $0xa0] sm:$0x11]
    %v524 = vsel %vm498, 0, %v523
    %525 = vst [vmem:[%s491 + $0xa0] sm:$0x11] %v524
    %v526 = vld [vmem:[%s491 + $0xb0] sm:$0x11]
    %v527 = vsel %vm498, 0, %v526
    %528 = vst [vmem:[%s491 + $0xb0] sm:$0x11] %v527
    %v529 = vld [vmem:[%s491 + $0xc0] sm:$0x11]
    %v530 = vsel %vm498, 0, %v529
    %531 = vst [vmem:[%s491 + $0xc0] sm:$0x11] %v530
    %v532 = vld [vmem:[%s491 + $0xd0] sm:$0x11]
    %v533 = vsel %vm498, 0, %v532
    %534 = vst [vmem:[%s491 + $0xd0] sm:$0x11] %v533
    %v535 = vld [vmem:[%s491 + $0xe0] sm:$0x11]
    %v536 = vsel %vm498, 0, %v535
    %537 = vst [vmem:[%s491 + $0xe0] sm:$0x11] %v536
    %v538 = vld [vmem:[%s491 + $0xf0] sm:$0x11]
    %v539 = vsel %vm498, 0, %v538
    %540 = vst [vmem:[%s491 + $0xf0] sm:$0x11] %v539
    %v541 = vld [vmem:[%s491 + $0x100] sm:$0x11]
    %v542 = vsel %vm498, 0, %v541
    %543 = vst [vmem:[%s491 + $0x100] sm:$0x11] %v542
    %v544 = vld [vmem:[%s491 + $0x110] sm:$0x11]
    %v545 = vsel %vm498, 0, %v544
    %546 = vst [vmem:[%s491 + $0x110] sm:$0x11] %v545
    %vm547 = vsmask.f32 7938
    %vm548 = vmand %vm492, %vm547
    %vm549 = vsmask.f32 7954
    %vm550 = vmand %vm495, %vm549
    %vm551 = vmor %vm550, %vm548
    %v552 = vld [vmem:[%s491 + $0x8] sm:$0x11]
    %v553 = vsel %vm551, 0, %v552
    %554 = vst [vmem:[%s491 + $0x8] sm:$0x11] %v553
    %v555 = vld [vmem:[%s491 + $0x18] sm:$0x11]
    %v556 = vsel %vm551, 0, %v555
    %557 = vst [vmem:[%s491 + $0x18] sm:$0x11] %v556
    %v558 = vld [vmem:[%s491 + $0x28] sm:$0x11]
    %v559 = vsel %vm551, 0, %v558
    %560 = vst [vmem:[%s491 + $0x28] sm:$0x11] %v559
    %v561 = vld [vmem:[%s491 + $0x38] sm:$0x11]
    %v562 = vsel %vm551, 0, %v561
    %563 = vst [vmem:[%s491 + $0x38] sm:$0x11] %v562
    %v564 = vld [vmem:[%s491 + $0x48] sm:$0x11]
    %v565 = vsel %vm551, 0, %v564
    %566 = vst [vmem:[%s491 + $0x48] sm:$0x11] %v565
    %v567 = vld [vmem:[%s491 + $0x58] sm:$0x11]
    %v568 = vsel %vm551, 0, %v567
    %569 = vst [vmem:[%s491 + $0x58] sm:$0x11] %v568
    %v570 = vld [vmem:[%s491 + $0x68] sm:$0x11]
    %v571 = vsel %vm551, 0, %v570
    %572 = vst [vmem:[%s491 + $0x68] sm:$0x11] %v571
    %v573 = vld [vmem:[%s491 + $0x78] sm:$0x11]
    %v574 = vsel %vm551, 0, %v573
    %575 = vst [vmem:[%s491 + $0x78] sm:$0x11] %v574
    %v576 = vld [vmem:[%s491 + $0xa8] sm:$0x11]
    %v577 = vsel %vm551, 0, %v576
    %578 = vst [vmem:[%s491 + $0xa8] sm:$0x11] %v577
    %v579 = vld [vmem:[%s491 + $0xb8] sm:$0x11]
    %v580 = vsel %vm551, 0, %v579
    %581 = vst [vmem:[%s491 + $0xb8] sm:$0x11] %v580
    %v582 = vld [vmem:[%s491 + $0xc8] sm:$0x11]
    %v583 = vsel %vm551, 0, %v582
    %584 = vst [vmem:[%s491 + $0xc8] sm:$0x11] %v583
    %v585 = vld [vmem:[%s491 + $0xd8] sm:$0x11]
    %v586 = vsel %vm551, 0, %v585
    %587 = vst [vmem:[%s491 + $0xd8] sm:$0x11] %v586
    %v588 = vld [vmem:[%s491 + $0xe8] sm:$0x11]
    %v589 = vsel %vm551, 0, %v588
    %590 = vst [vmem:[%s491 + $0xe8] sm:$0x11] %v589
    %v591 = vld [vmem:[%s491 + $0xf8] sm:$0x11]
    %v592 = vsel %vm551, 0, %v591
    %593 = vst [vmem:[%s491 + $0xf8] sm:$0x11] %v592
    %v594 = vld [vmem:[%s491 + $0x108] sm:$0x11]
    %v595 = vsel %vm551, 0, %v594
    %596 = vst [vmem:[%s491 + $0x108] sm:$0x11] %v595
    %v597 = vld [vmem:[%s491 + $0x118] sm:$0x11]
    %v598 = vsel %vm551, 0, %v597
    %599 = vst [vmem:[%s491 + $0x118] sm:$0x11] %v598
    %v600 = vpack.c.bf16 %v466, %v466
    %v601 = vpack.c.bf16 %v467, %v467
    %v602 = vpack.c.bf16 %v468, %v468
    %v603 = vpack.c.bf16 %v469, %v469
    %v604 = vpack.c.bf16 %v470, %v470
    %v605 = vpack.c.bf16 %v471, %v471
    %v606 = vpack.c.bf16 %v472, %v472
    %v607 = vpack.c.bf16 %v473, %v473
    %v608 = vpack.c.bf16 %v474, %v474
    %v609 = vpack.c.bf16 %v475, %v475
    %v610 = vpack.c.bf16 %v476, %v476
    %v611 = vpack.c.bf16 %v477, %v477
    %v612 = vpack.c.bf16 %v478, %v478
    %v613 = vpack.c.bf16 %v479, %v479
    %v614 = vpack.c.bf16 %v480, %v480
    %v615 = vpack.c.bf16 %v481, %v481
    %v632 = vunpack.c.l.b16 %v600
    %v633 = vunpack.c.l.b16 %v601
    %v634 = vunpack.c.l.b16 %v602
    %v635 = vunpack.c.l.b16 %v603
    %v636 = vunpack.c.l.b16 %v604
    %v637 = vunpack.c.l.b16 %v605
    %v638 = vunpack.c.l.b16 %v606
    %v639 = vunpack.c.l.b16 %v607
    %v640 = vunpack.c.l.b16 %v608
    %v641 = vunpack.c.l.b16 %v609
    %v642 = vunpack.c.l.b16 %v610
    %v643 = vunpack.c.l.b16 %v611
    %v644 = vunpack.c.l.b16 %v612
    %v645 = vunpack.c.l.b16 %v613
    %v646 = vunpack.c.l.b16 %v614
    %v647 = vunpack.c.l.b16 %v615
    %v648 = vpack.c.b16 %v632, %v632
    %v649 = vpack.c.b16 %v633, %v633
    %v650 = vpack.c.b16 %v634, %v634
    %v651 = vpack.c.b16 %v635, %v635
    %v652 = vpack.c.b16 %v636, %v636
    %v653 = vpack.c.b16 %v637, %v637
    %v654 = vpack.c.b16 %v638, %v638
    %v655 = vpack.c.b16 %v639, %v639
    %v656 = vpack.c.b16 %v640, %v640
    %v657 = vpack.c.b16 %v641, %v641
    %v658 = vpack.c.b16 %v642, %v642
    %v659 = vpack.c.b16 %v643, %v643
    %v660 = vpack.c.b16 %v644, %v644
    %v661 = vpack.c.b16 %v645, %v645
    %v662 = vpack.c.b16 %v646, %v646
    %v663 = vpack.c.b16 %v647, %v647
    %v665 = vshrl.u32 %v648, 16
    %v667 = vrot.slane %v665, 7
    %v668 = vshll.u32 %v648, 16
    %v670 = vor.u32 %v667, %v668
    %v671 = vrot.slane %v667, 4
    %v673 = vshrl.u32 %v649, 16
    %v675 = vrot.slane %v673, 7
    %v676 = vshll.u32 %v649, 16
    %v678 = vor.u32 %v675, %v676
    %v679 = vrot.slane %v675, 4
    %v681 = vshrl.u32 %v650, 16
    %v683 = vrot.slane %v681, 7
    %v684 = vshll.u32 %v650, 16
    %v686 = vor.u32 %v683, %v684
    %v687 = vrot.slane %v683, 4
    %v689 = vshrl.u32 %v651, 16
    %v691 = vrot.slane %v689, 7
    %v692 = vshll.u32 %v651, 16
    %v694 = vor.u32 %v691, %v692
    %v695 = vrot.slane %v691, 4
    %v697 = vshrl.u32 %v652, 16
    %v699 = vrot.slane %v697, 7
    %v700 = vshll.u32 %v652, 16
    %v702 = vor.u32 %v699, %v700
    %v703 = vrot.slane %v699, 4
    %v705 = vshrl.u32 %v653, 16
    %v707 = vrot.slane %v705, 7
    %v708 = vshll.u32 %v653, 16
    %v710 = vor.u32 %v707, %v708
    %v711 = vrot.slane %v707, 4
    %v713 = vshrl.u32 %v654, 16
    %v715 = vrot.slane %v713, 7
    %v716 = vshll.u32 %v654, 16
    %v718 = vor.u32 %v715, %v716
    %v719 = vrot.slane %v715, 4
    %v721 = vshrl.u32 %v655, 16
    %v723 = vrot.slane %v721, 7
    %v724 = vshll.u32 %v655, 16
    %v726 = vor.u32 %v723, %v724
    %v727 = vrot.slane %v723, 4
    %v729 = vshrl.u32 %v656, 16
    %v731 = vrot.slane %v729, 7
    %v732 = vshll.u32 %v656, 16
    %v734 = vor.u32 %v731, %v732
    %v735 = vrot.slane %v731, 4
    %v737 = vshrl.u32 %v657, 16
    %v739 = vrot.slane %v737, 7
    %v740 = vshll.u32 %v657, 16
    %v742 = vor.u32 %v739, %v740
    %v743 = vrot.slane %v739, 4
    %v745 = vshrl.u32 %v658, 16
    %v747 = vrot.slane %v745, 7
    %v748 = vshll.u32 %v658, 16
    %v750 = vor.u32 %v747, %v748
    %v751 = vrot.slane %v747, 4
    %v753 = vshrl.u32 %v659, 16
    %v755 = vrot.slane %v753, 7
    %v756 = vshll.u32 %v659, 16
    %v758 = vor.u32 %v755, %v756
    %v759 = vrot.slane %v755, 4
    %v761 = vshrl.u32 %v660, 16
    %v763 = vrot.slane %v761, 7
    %v764 = vshll.u32 %v660, 16
    %v766 = vor.u32 %v763, %v764
    %v767 = vrot.slane %v763, 4
    %v769 = vshrl.u32 %v661, 16
    %v771 = vrot.slane %v769, 7
    %v772 = vshll.u32 %v661, 16
    %v774 = vor.u32 %v771, %v772
    %v775 = vrot.slane %v771, 4
    %v777 = vshrl.u32 %v662, 16
    %v779 = vrot.slane %v777, 7
    %v780 = vshll.u32 %v662, 16
    %v782 = vor.u32 %v779, %v780
    %v783 = vrot.slane %v779, 4
    %v785 = vshrl.u32 %v663, 16
    %v787 = vrot.slane %v785, 7
    %v788 = vshll.u32 %v663, 16
    %v790 = vor.u32 %v787, %v788
    %v791 = vrot.slane %v787, 4
    %vm824 = vcmask 1043456
    %vm825 = vmand %vm824, %vm547
    %v826 = vld [vmem:[%s491] sm:$0xf]
    %v827 = vsel %vm825, %v670, %v826
    %828 = vst [vmem:[%s491] sm:$0xf] %v827
    %v829 = vld [vmem:[%s491 + $0x8] sm:$0x1]
    %v830 = vsel %vm494, %v671, %v829
    %831 = vst [vmem:[%s491 + $0x8] sm:$0x1] %v830
    %v832 = vld [vmem:[%s491 + $0x10] sm:$0xf]
    %v833 = vsel %vm825, %v678, %v832
    %834 = vst [vmem:[%s491 + $0x10] sm:$0xf] %v833
    %v835 = vld [vmem:[%s491 + $0x18] sm:$0x1]
    %v836 = vsel %vm494, %v679, %v835
    %837 = vst [vmem:[%s491 + $0x18] sm:$0x1] %v836
    %v838 = vld [vmem:[%s491 + $0x20] sm:$0xf]
    %v839 = vsel %vm825, %v686, %v838
    %840 = vst [vmem:[%s491 + $0x20] sm:$0xf] %v839
    %v841 = vld [vmem:[%s491 + $0x28] sm:$0x1]
    %v842 = vsel %vm494, %v687, %v841
    %843 = vst [vmem:[%s491 + $0x28] sm:$0x1] %v842
    %v844 = vld [vmem:[%s491 + $0x30] sm:$0xf]
    %v845 = vsel %vm825, %v694, %v844
    %846 = vst [vmem:[%s491 + $0x30] sm:$0xf] %v845
    %v847 = vld [vmem:[%s491 + $0x38] sm:$0x1]
    %v848 = vsel %vm494, %v695, %v847
    %849 = vst [vmem:[%s491 + $0x38] sm:$0x1] %v848
    %v850 = vld [vmem:[%s491 + $0x40] sm:$0xf]
    %v851 = vsel %vm825, %v702, %v850
    %852 = vst [vmem:[%s491 + $0x40] sm:$0xf] %v851
    %v853 = vld [vmem:[%s491 + $0x48] sm:$0x1]
    %v854 = vsel %vm494, %v703, %v853
    %855 = vst [vmem:[%s491 + $0x48] sm:$0x1] %v854
    %v856 = vld [vmem:[%s491 + $0x50] sm:$0xf]
    %v857 = vsel %vm825, %v710, %v856
    %858 = vst [vmem:[%s491 + $0x50] sm:$0xf] %v857
    %v859 = vld [vmem:[%s491 + $0x58] sm:$0x1]
    %v860 = vsel %vm494, %v711, %v859
    %861 = vst [vmem:[%s491 + $0x58] sm:$0x1] %v860
    %v862 = vld [vmem:[%s491 + $0x60] sm:$0xf]
    %v863 = vsel %vm825, %v718, %v862
    %864 = vst [vmem:[%s491 + $0x60] sm:$0xf] %v863
    %v865 = vld [vmem:[%s491 + $0x68] sm:$0x1]
    %v866 = vsel %vm494, %v719, %v865
    %867 = vst [vmem:[%s491 + $0x68] sm:$0x1] %v866
    %v868 = vld [vmem:[%s491 + $0x70] sm:$0xf]
    %v869 = vsel %vm825, %v726, %v868
    %870 = vst [vmem:[%s491 + $0x70] sm:$0xf] %v869
    %v871 = vld [vmem:[%s491 + $0x78] sm:$0x1]
    %v872 = vsel %vm494, %v727, %v871
    %873 = vst [vmem:[%s491 + $0x78] sm:$0x1] %v872
    %v874 = vld [vmem:[%s491 + $0xa0] sm:$0xf]
    %v875 = vsel %vm825, %v734, %v874
    %876 = vst [vmem:[%s491 + $0xa0] sm:$0xf] %v875
    %v877 = vld [vmem:[%s491 + $0xa8] sm:$0x1]
    %v878 = vsel %vm494, %v735, %v877
    %879 = vst [vmem:[%s491 + $0xa8] sm:$0x1] %v878
    %v880 = vld [vmem:[%s491 + $0xb0] sm:$0xf]
    %v881 = vsel %vm825, %v742, %v880
    %882 = vst [vmem:[%s491 + $0xb0] sm:$0xf] %v881
    %v883 = vld [vmem:[%s491 + $0xb8] sm:$0x1]
    %v884 = vsel %vm494, %v743, %v883
    %885 = vst [vmem:[%s491 + $0xb8] sm:$0x1] %v884
    %v886 = vld [vmem:[%s491 + $0xc0] sm:$0xf]
    %v887 = vsel %vm825, %v750, %v886
    %888 = vst [vmem:[%s491 + $0xc0] sm:$0xf] %v887
    %v889 = vld [vmem:[%s491 + $0xc8] sm:$0x1]
    %v890 = vsel %vm494, %v751, %v889
    %891 = vst [vmem:[%s491 + $0xc8] sm:$0x1] %v890
    %v892 = vld [vmem:[%s491 + $0xd0] sm:$0xf]
    %v893 = vsel %vm825, %v758, %v892
    %894 = vst [vmem:[%s491 + $0xd0] sm:$0xf] %v893
    %v895 = vld [vmem:[%s491 + $0xd8] sm:$0x1]
    %v896 = vsel %vm494, %v759, %v895
    %897 = vst [vmem:[%s491 + $0xd8] sm:$0x1] %v896
    %v898 = vld [vmem:[%s491 + $0xe0] sm:$0xf]
    %v899 = vsel %vm825, %v766, %v898
    %900 = vst [vmem:[%s491 + $0xe0] sm:$0xf] %v899
    %v901 = vld [vmem:[%s491 + $0xe8] sm:$0x1]
    %v902 = vsel %vm494, %v767, %v901
    %903 = vst [vmem:[%s491 + $0xe8] sm:$0x1] %v902
    %v904 = vld [vmem:[%s491 + $0xf0] sm:$0xf]
    %v905 = vsel %vm825, %v774, %v904
    %906 = vst [vmem:[%s491 + $0xf0] sm:$0xf] %v905
    %v907 = vld [vmem:[%s491 + $0xf8] sm:$0x1]
    %v908 = vsel %vm494, %v775, %v907
    %909 = vst [vmem:[%s491 + $0xf8] sm:$0x1] %v908
    %v910 = vld [vmem:[%s491 + $0x100] sm:$0xf]
    %v911 = vsel %vm825, %v782, %v910
    %912 = vst [vmem:[%s491 + $0x100] sm:$0xf] %v911
    %v913 = vld [vmem:[%s491 + $0x108] sm:$0x1]
    %v914 = vsel %vm494, %v783, %v913
    %915 = vst [vmem:[%s491 + $0x108] sm:$0x1] %v914
    %v916 = vld [vmem:[%s491 + $0x110] sm:$0xf]
    %v917 = vsel %vm825, %v790, %v916
    %918 = vst [vmem:[%s491 + $0x110] sm:$0xf] %v917
    %v919 = vld [vmem:[%s491 + $0x118] sm:$0x1]
    %v920 = vsel %vm494, %v791, %v919
    %921 = vst [vmem:[%s491 + $0x118] sm:$0x1] %v920
    %v922 = vld [vmem:[#allocation6] sm:$0xf]
    %v923 = vld [vmem:[#allocation6 + $0x4] sm:$0xf]
    %v924 = vld [vmem:[#allocation6 + $0x8] sm:$0xf]
    %v925 = vld [vmem:[#allocation6 + $0xc] sm:$0xf]
    %v926 = vld [vmem:[#allocation6 + $0x10] sm:$0xf]
    %v927 = vld [vmem:[#allocation6 + $0x14] sm:$0xf]
    %v928 = vld [vmem:[#allocation6 + $0x18] sm:$0xf]
    %v929 = vld [vmem:[#allocation6 + $0x1c] sm:$0xf]
    %v930 = vld [vmem:[#allocation6 + $0x20] sm:$0xf]
    %v931 = vld [vmem:[#allocation6 + $0x24] sm:$0xf]
    %v932 = vld [vmem:[#allocation6 + $0x28] sm:$0xf]
    %v933 = vld [vmem:[#allocation6 + $0x2c] sm:$0xf]
    %v934 = vld [vmem:[#allocation6 + $0x30] sm:$0xf]
    %v935 = vld [vmem:[#allocation6 + $0x34] sm:$0xf]
    %v936 = vld [vmem:[#allocation6 + $0x38] sm:$0xf]
    %v937 = vld [vmem:[#allocation6 + $0x3c] sm:$0xf]
    %v939 = vshrl.u32 %v922, 16
    %v941 = vrot.slane %v939, 7
    %v942 = vshll.u32 %v922, 16
    %v944 = vor.u32 %v941, %v942
    %v945 = vrot.slane %v941, 4
    %v947 = vshrl.u32 %v923, 16
    %v949 = vrot.slane %v947, 7
    %v950 = vshll.u32 %v923, 16
    %v952 = vor.u32 %v949, %v950
    %v953 = vrot.slane %v949, 4
    %v955 = vshrl.u32 %v924, 16
    %v957 = vrot.slane %v955, 7
    %v958 = vshll.u32 %v924, 16
    %v960 = vor.u32 %v957, %v958
    %v961 = vrot.slane %v957, 4
    %v963 = vshrl.u32 %v925, 16
    %v965 = vrot.slane %v963, 7
    %v966 = vshll.u32 %v925, 16
    %v968 = vor.u32 %v965, %v966
    %v969 = vrot.slane %v965, 4
    %v971 = vshrl.u32 %v926, 16
    %v973 = vrot.slane %v971, 7
    %v974 = vshll.u32 %v926, 16
    %v976 = vor.u32 %v973, %v974
    %v977 = vrot.slane %v973, 4
    %v979 = vshrl.u32 %v927, 16
    %v981 = vrot.slane %v979, 7
    %v982 = vshll.u32 %v927, 16
    %v984 = vor.u32 %v981, %v982
    %v985 = vrot.slane %v981, 4
    %v987 = vshrl.u32 %v928, 16
    %v989 = vrot.slane %v987, 7
    %v990 = vshll.u32 %v928, 16
    %v992 = vor.u32 %v989, %v990
    %v993 = vrot.slane %v989, 4
    %v995 = vshrl.u32 %v929, 16
    %v997 = vrot.slane %v995, 7
    %v998 = vshll.u32 %v929, 16
    %v1000 = vor.u32 %v997, %v998
    %v1001 = vrot.slane %v997, 4
    %v1003 = vshrl.u32 %v930, 16
    %v1005 = vrot.slane %v1003, 7
    %v1006 = vshll.u32 %v930, 16
    %v1008 = vor.u32 %v1005, %v1006
    %v1009 = vrot.slane %v1005, 4
    %v1011 = vshrl.u32 %v931, 16
    %v1013 = vrot.slane %v1011, 7
    %v1014 = vshll.u32 %v931, 16
    %v1016 = vor.u32 %v1013, %v1014
    %v1017 = vrot.slane %v1013, 4
    %v1019 = vshrl.u32 %v932, 16
    %v1021 = vrot.slane %v1019, 7
    %v1022 = vshll.u32 %v932, 16
    %v1024 = vor.u32 %v1021, %v1022
    %v1025 = vrot.slane %v1021, 4
    %v1027 = vshrl.u32 %v933, 16
    %v1029 = vrot.slane %v1027, 7
    %v1030 = vshll.u32 %v933, 16
    %v1032 = vor.u32 %v1029, %v1030
    %v1033 = vrot.slane %v1029, 4
    %v1035 = vshrl.u32 %v934, 16
    %v1037 = vrot.slane %v1035, 7
    %v1038 = vshll.u32 %v934, 16
    %v1040 = vor.u32 %v1037, %v1038
    %v1041 = vrot.slane %v1037, 4
    %v1043 = vshrl.u32 %v935, 16
    %v1045 = vrot.slane %v1043, 7
    %v1046 = vshll.u32 %v935, 16
    %v1048 = vor.u32 %v1045, %v1046
    %v1049 = vrot.slane %v1045, 4
    %v1051 = vshrl.u32 %v936, 16
    %v1053 = vrot.slane %v1051, 7
    %v1054 = vshll.u32 %v936, 16
    %v1056 = vor.u32 %v1053, %v1054
    %v1057 = vrot.slane %v1053, 4
    %v1059 = vshrl.u32 %v937, 16
    %v1061 = vrot.slane %v1059, 7
    %v1062 = vshll.u32 %v937, 16
    %v1064 = vor.u32 %v1061, %v1062
    %v1065 = vrot.slane %v1061, 4
    %vm1098 = vcmask 519168
    %vm1099 = vmand %vm1098, %vm547
    %v1100 = vld [vmem:[%s491 + $0x4] sm:$0xf]
    %v1101 = vsel %vm1099, %v944, %v1100
    %1102 = vst [vmem:[%s491 + $0x4] sm:$0xf] %v1101
    %vm1103 = vcmask 516096
    %vm1104 = vmand %vm1103, %vm493
    %v1105 = vld [vmem:[%s491 + $0xc] sm:$0x1]
    %v1106 = vsel %vm1104, %v945, %v1105
    %1107 = vst [vmem:[%s491 + $0xc] sm:$0x1] %v1106
    %v1108 = vld [vmem:[%s491 + $0x14] sm:$0xf]
    %v1109 = vsel %vm1099, %v952, %v1108
    %1110 = vst [vmem:[%s491 + $0x14] sm:$0xf] %v1109
    %v1111 = vld [vmem:[%s491 + $0x1c] sm:$0x1]
    %v1112 = vsel %vm1104, %v953, %v1111
    %1113 = vst [vmem:[%s491 + $0x1c] sm:$0x1] %v1112
    %v1114 = vld [vmem:[%s491 + $0x24] sm:$0xf]
    %v1115 = vsel %vm1099, %v960, %v1114
    %1116 = vst [vmem:[%s491 + $0x24] sm:$0xf] %v1115
    %v1117 = vld [vmem:[%s491 + $0x2c] sm:$0x1]
    %v1118 = vsel %vm1104, %v961, %v1117
    %1119 = vst [vmem:[%s491 + $0x2c] sm:$0x1] %v1118
    %v1120 = vld [vmem:[%s491 + $0x34] sm:$0xf]
    %v1121 = vsel %vm1099, %v968, %v1120
    %1122 = vst [vmem:[%s491 + $0x34] sm:$0xf] %v1121
    %v1123 = vld [vmem:[%s491 + $0x3c] sm:$0x1]
    %v1124 = vsel %vm1104, %v969, %v1123
    %1125 = vst [vmem:[%s491 + $0x3c] sm:$0x1] %v1124
    %v1126 = vld [vmem:[%s491 + $0x44] sm:$0xf]
    %v1127 = vsel %vm1099, %v976, %v1126
    %1128 = vst [vmem:[%s491 + $0x44] sm:$0xf] %v1127
    %v1129 = vld [vmem:[%s491 + $0x4c] sm:$0x1]
    %v1130 = vsel %vm1104, %v977, %v1129
    %1131 = vst [vmem:[%s491 + $0x4c] sm:$0x1] %v1130
    %v1132 = vld [vmem:[%s491 + $0x54] sm:$0xf]
    %v1133 = vsel %vm1099, %v984, %v1132
    %1134 = vst [vmem:[%s491 + $0x54] sm:$0xf] %v1133
    %v1135 = vld [vmem:[%s491 + $0x5c] sm:$0x1]
    %v1136 = vsel %vm1104, %v985, %v1135
    %1137 = vst [vmem:[%s491 + $0x5c] sm:$0x1] %v1136
    %v1138 = vld [vmem:[%s491 + $0x64] sm:$0xf]
    %v1139 = vsel %vm1099, %v992, %v1138
    %1140 = vst [vmem:[%s491 + $0x64] sm:$0xf] %v1139
    %v1141 = vld [vmem:[%s491 + $0x6c] sm:$0x1]
    %v1142 = vsel %vm1104, %v993, %v1141
    %1143 = vst [vmem:[%s491 + $0x6c] sm:$0x1] %v1142
    %v1144 = vld [vmem:[%s491 + $0x74] sm:$0xf]
    %v1145 = vsel %vm1099, %v1000, %v1144
    %1146 = vst [vmem:[%s491 + $0x74] sm:$0xf] %v1145
    %v1147 = vld [vmem:[%s491 + $0x7c] sm:$0x1]
    %v1148 = vsel %vm1104, %v1001, %v1147
    %1149 = vst [vmem:[%s491 + $0x7c] sm:$0x1] %v1148
    %v1150 = vld [vmem:[%s491 + $0xa4] sm:$0xf]
    %v1151 = vsel %vm1099, %v1008, %v1150
    %1152 = vst [vmem:[%s491 + $0xa4] sm:$0xf] %v1151
    %v1153 = vld [vmem:[%s491 + $0xac] sm:$0x1]
    %v1154 = vsel %vm1104, %v1009, %v1153
    %1155 = vst [vmem:[%s491 + $0xac] sm:$0x1] %v1154
    %v1156 = vld [vmem:[%s491 + $0xb4] sm:$0xf]
    %v1157 = vsel %vm1099, %v1016, %v1156
    %1158 = vst [vmem:[%s491 + $0xb4] sm:$0xf] %v1157
    %v1159 = vld [vmem:[%s491 + $0xbc] sm:$0x1]
    %v1160 = vsel %vm1104, %v1017, %v1159
    %1161 = vst [vmem:[%s491 + $0xbc] sm:$0x1] %v1160
    %v1162 = vld [vmem:[%s491 + $0xc4] sm:$0xf]
    %v1163 = vsel %vm1099, %v1024, %v1162
    %1164 = vst [vmem:[%s491 + $0xc4] sm:$0xf] %v1163
    %v1165 = vld [vmem:[%s491 + $0xcc] sm:$0x1]
    %v1166 = vsel %vm1104, %v1025, %v1165
    %1167 = vst [vmem:[%s491 + $0xcc] sm:$0x1] %v1166
    %v1168 = vld [vmem:[%s491 + $0xd4] sm:$0xf]
    %v1169 = vsel %vm1099, %v1032, %v1168
    %1170 = vst [vmem:[%s491 + $0xd4] sm:$0xf] %v1169
    %v1171 = vld [vmem:[%s491 + $0xdc] sm:$0x1]
    %v1172 = vsel %vm1104, %v1033, %v1171
    %1173 = vst [vmem:[%s491 + $0xdc] sm:$0x1] %v1172
    %v1174 = vld [vmem:[%s491 + $0xe4] sm:$0xf]
    %v1175 = vsel %vm1099, %v1040, %v1174
    %1176 = vst [vmem:[%s491 + $0xe4] sm:$0xf] %v1175
    %v1177 = vld [vmem:[%s491 + $0xec] sm:$0x1]
    %v1178 = vsel %vm1104, %v1041, %v1177
    %1179 = vst [vmem:[%s491 + $0xec] sm:$0x1] %v1178
    %v1180 = vld [vmem:[%s491 + $0xf4] sm:$0xf]
    %v1181 = vsel %vm1099, %v1048, %v1180
    %1182 = vst [vmem:[%s491 + $0xf4] sm:$0xf] %v1181
    %v1183 = vld [vmem:[%s491 + $0xfc] sm:$0x1]
    %v1184 = vsel %vm1104, %v1049, %v1183
    %1185 = vst [vmem:[%s491 + $0xfc] sm:$0x1] %v1184
    %v1186 = vld [vmem:[%s491 + $0x104] sm:$0xf]
    %v1187 = vsel %vm1099, %v1056, %v1186
    %1188 = vst [vmem:[%s491 + $0x104] sm:$0xf] %v1187
    %v1189 = vld [vmem:[%s491 + $0x10c] sm:$0x1]
    %v1190 = vsel %vm1104, %v1057, %v1189
    %1191 = vst [vmem:[%s491 + $0x10c] sm:$0x1] %v1190
    %v1192 = vld [vmem:[%s491 + $0x114] sm:$0xf]
    %v1193 = vsel %vm1099, %v1064, %v1192
    %1194 = vst [vmem:[%s491 + $0x114] sm:$0xf] %v1193
    %v1195 = vld [vmem:[%s491 + $0x11c] sm:$0x1]
    %v1196 = vsel %vm1104, %v1065, %v1195
    %1197 = vst [vmem:[%s491 + $0x11c] sm:$0x1] %v1196
    %vm1198 = vcmask 1043968
    %vm1199 = vmand %vm1198, %vm547
    %v1200 = vld [vmem:[%s491 + $0x4] sm:$0xf]
    %v1201 = vsel %vm1199, 0, %v1200
    %1202 = vst [vmem:[%s491 + $0x4] sm:$0xf] %v1201
    %vm1203 = vcmask 1040896
    %vm1204 = vmand %vm1203, %vm493
    %v1205 = vld [vmem:[%s491 + $0xc] sm:$0x1]
    %v1206 = vsel %vm1204, 0, %v1205
    %1207 = vst [vmem:[%s491 + $0xc] sm:$0x1] %v1206
    %v1208 = vld [vmem:[%s491 + $0x14] sm:$0xf]
    %v1209 = vsel %vm1199, 0, %v1208
    %1210 = vst [vmem:[%s491 + $0x14] sm:$0xf] %v1209
    %v1211 = vld [vmem:[%s491 + $0x1c] sm:$0x1]
    %v1212 = vsel %vm1204, 0, %v1211
    %1213 = vst [vmem:[%s491 + $0x1c] sm:$0x1] %v1212
    %v1214 = vld [vmem:[%s491 + $0x24] sm:$0xf]
    %v1215 = vsel %vm1199, 0, %v1214
    %1216 = vst [vmem:[%s491 + $0x24] sm:$0xf] %v1215
    %v1217 = vld [vmem:[%s491 + $0x2c] sm:$0x1]
    %v1218 = vsel %vm1204, 0, %v1217
    %1219 = vst [vmem:[%s491 + $0x2c] sm:$0x1] %v1218
    %v1220 = vld [vmem:[%s491 + $0x34] sm:$0xf]
    %v1221 = vsel %vm1199, 0, %v1220
    %1222 = vst [vmem:[%s491 + $0x34] sm:$0xf] %v1221
    %v1223 = vld [vmem:[%s491 + $0x3c] sm:$0x1]
    %v1224 = vsel %vm1204, 0, %v1223
    %1225 = vst [vmem:[%s491 + $0x3c] sm:$0x1] %v1224
    %v1226 = vld [vmem:[%s491 + $0x44] sm:$0xf]
    %v1227 = vsel %vm1199, 0, %v1226
    %1228 = vst [vmem:[%s491 + $0x44] sm:$0xf] %v1227
    %v1229 = vld [vmem:[%s491 + $0x4c] sm:$0x1]
    %v1230 = vsel %vm1204, 0, %v1229
    %1231 = vst [vmem:[%s491 + $0x4c] sm:$0x1] %v1230
    %v1232 = vld [vmem:[%s491 + $0x54] sm:$0xf]
    %v1233 = vsel %vm1199, 0, %v1232
    %1234 = vst [vmem:[%s491 + $0x54] sm:$0xf] %v1233
    %v1235 = vld [vmem:[%s491 + $0x5c] sm:$0x1]
    %v1236 = vsel %vm1204, 0, %v1235
    %1237 = vst [vmem:[%s491 + $0x5c] sm:$0x1] %v1236
    %v1238 = vld [vmem:[%s491 + $0x64] sm:$0xf]
    %v1239 = vsel %vm1199, 0, %v1238
    %1240 = vst [vmem:[%s491 + $0x64] sm:$0xf] %v1239
    %v1241 = vld [vmem:[%s491 + $0x6c] sm:$0x1]
    %v1242 = vsel %vm1204, 0, %v1241
    %1243 = vst [vmem:[%s491 + $0x6c] sm:$0x1] %v1242
    %v1244 = vld [vmem:[%s491 + $0x74] sm:$0xf]
    %v1245 = vsel %vm1199, 0, %v1244
    %1246 = vst [vmem:[%s491 + $0x74] sm:$0xf] %v1245
    %v1247 = vld [vmem:[%s491 + $0x7c] sm:$0x1]
    %v1248 = vsel %vm1204, 0, %v1247
    %1249 = vst [vmem:[%s491 + $0x7c] sm:$0x1] %v1248
    %v1250 = vld [vmem:[%s491 + $0xa4] sm:$0xf]
    %v1251 = vsel %vm1199, 0, %v1250
    %1252 = vst [vmem:[%s491 + $0xa4] sm:$0xf] %v1251
    %v1253 = vld [vmem:[%s491 + $0xac] sm:$0x1]
    %v1254 = vsel %vm1204, 0, %v1253
    %1255 = vst [vmem:[%s491 + $0xac] sm:$0x1] %v1254
    %v1256 = vld [vmem:[%s491 + $0xb4] sm:$0xf]
    %v1257 = vsel %vm1199, 0, %v1256
    %1258 = vst [vmem:[%s491 + $0xb4] sm:$0xf] %v1257
    %v1259 = vld [vmem:[%s491 + $0xbc] sm:$0x1]
    %v1260 = vsel %vm1204, 0, %v1259
    %1261 = vst [vmem:[%s491 + $0xbc] sm:$0x1] %v1260
    %v1262 = vld [vmem:[%s491 + $0xc4] sm:$0xf]
    %v1263 = vsel %vm1199, 0, %v1262
    %1264 = vst [vmem:[%s491 + $0xc4] sm:$0xf] %v1263
    %v1265 = vld [vmem:[%s491 + $0xcc] sm:$0x1]
    %v1266 = vsel %vm1204, 0, %v1265
    %1267 = vst [vmem:[%s491 + $0xcc] sm:$0x1] %v1266
    %v1268 = vld [vmem:[%s491 + $0xd4] sm:$0xf]
    %v1269 = vsel %vm1199, 0, %v1268
    %1270 = vst [vmem:[%s491 + $0xd4] sm:$0xf] %v1269
    %v1271 = vld [vmem:[%s491 + $0xdc] sm:$0x1]
    %v1272 = vsel %vm1204, 0, %v1271
    %1273 = vst [vmem:[%s491 + $0xdc] sm:$0x1] %v1272
    %v1274 = vld [vmem:[%s491 + $0xe4] sm:$0xf]
    %v1275 = vsel %vm1199, 0, %v1274
    %1276 = vst [vmem:[%s491 + $0xe4] sm:$0xf] %v1275
    %v1277 = vld [vmem:[%s491 + $0xec] sm:$0x1]
    %v1278 = vsel %vm1204, 0, %v1277
    %1279 = vst [vmem:[%s491 + $0xec] sm:$0x1] %v1278
    %v1280 = vld [vmem:[%s491 + $0xf4] sm:$0xf]
    %v1281 = vsel %vm1199, 0, %v1280
    %1282 = vst [vmem:[%s491 + $0xf4] sm:$0xf] %v1281
    %v1283 = vld [vmem:[%s491 + $0xfc] sm:$0x1]
    %v1284 = vsel %vm1204, 0, %v1283
    %1285 = vst [vmem:[%s491 + $0xfc] sm:$0x1] %v1284
    %v1286 = vld [vmem:[%s491 + $0x104] sm:$0xf]
    %v1287 = vsel %vm1199, 0, %v1286
    %1288 = vst [vmem:[%s491 + $0x104] sm:$0xf] %v1287
    %v1289 = vld [vmem:[%s491 + $0x10c] sm:$0x1]
    %v1290 = vsel %vm1204, 0, %v1289
    %1291 = vst [vmem:[%s491 + $0x10c] sm:$0x1] %v1290
    %v1292 = vld [vmem:[%s491 + $0x114] sm:$0xf]
    %v1293 = vsel %vm1199, 0, %v1292
    %1294 = vst [vmem:[%s491 + $0x114] sm:$0xf] %v1293
    %v1295 = vld [vmem:[%s491 + $0x11c] sm:$0x1]
    %v1296 = vsel %vm1204, 0, %v1295
    %1297 = vst [vmem:[%s491 + $0x11c] sm:$0x1] %v1296
    %v1298 = vld [vmem:[#allocation2] sm:$0xff]
    %v1299 = vld [vmem:[#allocation2 + $0x10] sm:$0xff]
    %v1300 = vld [vmem:[#allocation2 + $0x20] sm:$0xff]
    %v1301 = vld [vmem:[#allocation2 + $0x30] sm:$0xff]
    %v1302 = vld [vmem:[#allocation2 + $0x40] sm:$0xff]
    %v1303 = vld [vmem:[#allocation2 + $0x50] sm:$0xff]
    %v1304 = vld [vmem:[#allocation2 + $0x60] sm:$0xff]
    %v1305 = vld [vmem:[#allocation2 + $0x70] sm:$0xff]
    %v1306 = vld [vmem:[#allocation2 + $0xa0] sm:$0xff]
    %v1307 = vld [vmem:[#allocation2 + $0xb0] sm:$0xff]
    %v1308 = vld [vmem:[#allocation2 + $0xc0] sm:$0xff]
    %v1309 = vld [vmem:[#allocation2 + $0xd0] sm:$0xff]
    %v1310 = vld [vmem:[#allocation2 + $0xe0] sm:$0xff]
    %v1311 = vld [vmem:[#allocation2 + $0xf0] sm:$0xff]
    %v1312 = vld [vmem:[#allocation2 + $0x100] sm:$0xff]
    %v1313 = vld [vmem:[#allocation2 + $0x110] sm:$0xff]
    %v1314 = vld [vmem:[#allocation12] sm:$0xff]
    %v1315 = vld [vmem:[#allocation12 + $0x8] sm:$0xff]
    %v1316 = vld [vmem:[#allocation12 + $0x10] sm:$0xff]
    %v1317 = vld [vmem:[#allocation12 + $0x18] sm:$0xff]
    %v1318 = vld [vmem:[#allocation12 + $0x20] sm:$0xff]
    %v1319 = vld [vmem:[#allocation12 + $0x28] sm:$0xff]
    %v1320 = vld [vmem:[#allocation12 + $0x30] sm:$0xff]
    %v1321 = vld [vmem:[#allocation12 + $0x38] sm:$0xff]
    %v1322 = vld [vmem:[#allocation12 + $0x40] sm:$0xff]
    %v1323 = vld [vmem:[#allocation12 + $0x48] sm:$0xff]
    %v1324 = vld [vmem:[#allocation12 + $0x50] sm:$0xff]
    %v1325 = vld [vmem:[#allocation12 + $0x58] sm:$0xff]
    %v1326 = vld [vmem:[#allocation12 + $0x60] sm:$0xff]
    %v1327 = vld [vmem:[#allocation12 + $0x68] sm:$0xff]
    %v1328 = vld [vmem:[#allocation12 + $0x70] sm:$0xff]
    %v1329 = vld [vmem:[#allocation12 + $0x78] sm:$0xff]
    %v1330 = vld [vmem:[#allocation12 + $0x80] sm:$0xff]
    %v1331 = vld [vmem:[#allocation12 + $0x88] sm:$0xff]
    %v1332 = vld [vmem:[#allocation12 + $0x90] sm:$0xff]
    %v1333 = vld [vmem:[#allocation12 + $0x98] sm:$0xff]
    %v1334 = vld [vmem:[#allocation12 + $0xa0] sm:$0xff]
    %v1335 = vld [vmem:[#allocation12 + $0xa8] sm:$0xff]
    %v1336 = vld [vmem:[#allocation12 + $0xb0] sm:$0xff]
    %v1337 = vld [vmem:[#allocation12 + $0xb8] sm:$0xff]
    %v1338 = vld [vmem:[#allocation12 + $0xc0] sm:$0xff]
    %v1339 = vld [vmem:[#allocation12 + $0xc8] sm:$0xff]
    %v1340 = vld [vmem:[#allocation12 + $0xd0] sm:$0xff]
    %v1341 = vld [vmem:[#allocation12 + $0xd8] sm:$0xff]
    %v1342 = vld [vmem:[#allocation12 + $0xe0] sm:$0xff]
    %v1343 = vld [vmem:[#allocation12 + $0xe8] sm:$0xff]
    %v1344 = vld [vmem:[#allocation12 + $0xf0] sm:$0xff]
    %v1345 = vld [vmem:[#allocation12 + $0xf8] sm:$0xff]
    %v1346 = vld [vmem:[#allocation2 + $0x8] sm:$0x11]
    %v1347 = vld [vmem:[#allocation2 + $0x18] sm:$0x11]
    %v1348 = vld [vmem:[#allocation2 + $0x28] sm:$0x11]
    %v1349 = vld [vmem:[#allocation2 + $0x38] sm:$0x11]
    %v1350 = vld [vmem:[#allocation2 + $0x48] sm:$0x11]
    %v1351 = vld [vmem:[#allocation2 + $0x58] sm:$0x11]
    %v1352 = vld [vmem:[#allocation2 + $0x68] sm:$0x11]
    %v1353 = vld [vmem:[#allocation2 + $0x78] sm:$0x11]
    %v1354 = vld [vmem:[#allocation2 + $0xa8] sm:$0x11]
    %v1355 = vld [vmem:[#allocation2 + $0xb8] sm:$0x11]
    %v1356 = vld [vmem:[#allocation2 + $0xc8] sm:$0x11]
    %v1357 = vld [vmem:[#allocation2 + $0xd8] sm:$0x11]
    %v1358 = vld [vmem:[#allocation2 + $0xe8] sm:$0x11]
    %v1359 = vld [vmem:[#allocation2 + $0xf8] sm:$0x11]
    %v1360 = vld [vmem:[#allocation2 + $0x108] sm:$0x11]
    %v1361 = vld [vmem:[#allocation2 + $0x118] sm:$0x11]
    %vm1362 = vsmask.f32 3328
    %vm1363 = vsmask.f32 7440
    %vm1364 = vmor %vm1362, %vm1363
    %v1366 = vshrl.u32 %v1298, 16
    %v1368 = vrot.slane %v1366, 4
    %v1369 = vshll.u32 %v1298, 16
    %v1371 = vrot.slane %v1369, 5
    %v1372 = vor.u32 %v1368, %v1371
    %v1373 = vrot.slane %v1372, 4
    %v1375 = vshll.u32 %v1346, 16
    %v1377 = vrot.slane %v1375, 5
    %v1378 = vsel %vm1364, %v1373, %v1377
    %v1380 = vshrl.u32 %v1299, 16
    %v1382 = vrot.slane %v1380, 4
    %v1383 = vshll.u32 %v1299, 16
    %v1385 = vrot.slane %v1383, 5
    %v1386 = vor.u32 %v1382, %v1385
    %v1387 = vrot.slane %v1386, 4
    %v1389 = vshll.u32 %v1347, 16
    %v1391 = vrot.slane %v1389, 5
    %v1392 = vsel %vm1364, %v1387, %v1391
    %v1394 = vshrl.u32 %v1300, 16
    %v1396 = vrot.slane %v1394, 4
    %v1397 = vshll.u32 %v1300, 16
    %v1399 = vrot.slane %v1397, 5
    %v1400 = vor.u32 %v1396, %v1399
    %v1401 = vrot.slane %v1400, 4
    %v1403 = vshll.u32 %v1348, 16
    %v1405 = vrot.slane %v1403, 5
    %v1406 = vsel %vm1364, %v1401, %v1405
    %v1408 = vshrl.u32 %v1301, 16
    %v1410 = vrot.slane %v1408, 4
    %v1411 = vshll.u32 %v1301, 16
    %v1413 = vrot.slane %v1411, 5
    %v1414 = vor.u32 %v1410, %v1413
    %v1415 = vrot.slane %v1414, 4
    %v1417 = vshll.u32 %v1349, 16
    %v1419 = vrot.slane %v1417, 5
    %v1420 = vsel %vm1364, %v1415, %v1419
    %v1422 = vshrl.u32 %v1302, 16
    %v1424 = vrot.slane %v1422, 4
    %v1425 = vshll.u32 %v1302, 16
    %v1427 = vrot.slane %v1425, 5
    %v1428 = vor.u32 %v1424, %v1427
    %v1429 = vrot.slane %v1428, 4
    %v1431 = vshll.u32 %v1350, 16
    %v1433 = vrot.slane %v1431, 5
    %v1434 = vsel %vm1364, %v1429, %v1433
    %v1436 = vshrl.u32 %v1303, 16
    %v1438 = vrot.slane %v1436, 4
    %v1439 = vshll.u32 %v1303, 16
    %v1441 = vrot.slane %v1439, 5
    %v1442 = vor.u32 %v1438, %v1441
    %v1443 = vrot.slane %v1442, 4
    %v1445 = vshll.u32 %v1351, 16
    %v1447 = vrot.slane %v1445, 5
    %v1448 = vsel %vm1364, %v1443, %v1447
    %v1450 = vshrl.u32 %v1304, 16
    %v1452 = vrot.slane %v1450, 4
    %v1453 = vshll.u32 %v1304, 16
    %v1455 = vrot.slane %v1453, 5
    %v1456 = vor.u32 %v1452, %v1455
    %v1457 = vrot.slane %v1456, 4
    %v1459 = vshll.u32 %v1352, 16
    %v1461 = vrot.slane %v1459, 5
    %v1462 = vsel %vm1364, %v1457, %v1461
    %v1464 = vshrl.u32 %v1305, 16
    %v1466 = vrot.slane %v1464, 4
    %v1467 = vshll.u32 %v1305, 16
    %v1469 = vrot.slane %v1467, 5
    %v1470 = vor.u32 %v1466, %v1469
    %v1471 = vrot.slane %v1470, 4
    %v1473 = vshll.u32 %v1353, 16
    %v1475 = vrot.slane %v1473, 5
    %v1476 = vsel %vm1364, %v1471, %v1475
    %v1478 = vshrl.u32 %v1306, 16
    %v1480 = vrot.slane %v1478, 4
    %v1481 = vshll.u32 %v1306, 16
    %v1483 = vrot.slane %v1481, 5
    %v1484 = vor.u32 %v1480, %v1483
    %v1485 = vrot.slane %v1484, 4
    %v1487 = vshll.u32 %v1354, 16
    %v1489 = vrot.slane %v1487, 5
    %v1490 = vsel %vm1364, %v1485, %v1489
    %v1492 = vshrl.u32 %v1307, 16
    %v1494 = vrot.slane %v1492, 4
    %v1495 = vshll.u32 %v1307, 16
    %v1497 = vrot.slane %v1495, 5
    %v1498 = vor.u32 %v1494, %v1497
    %v1499 = vrot.slane %v1498, 4
    %v1501 = vshll.u32 %v1355, 16
    %v1503 = vrot.slane %v1501, 5
    %v1504 = vsel %vm1364, %v1499, %v1503
    %v1506 = vshrl.u32 %v1308, 16
    %v1508 = vrot.slane %v1506, 4
    %v1509 = vshll.u32 %v1308, 16
    %v1511 = vrot.slane %v1509, 5
    %v1512 = vor.u32 %v1508, %v1511
    %v1513 = vrot.slane %v1512, 4
    %v1515 = vshll.u32 %v1356, 16
    %v1517 = vrot.slane %v1515, 5
    %v1518 = vsel %vm1364, %v1513, %v1517
    %v1520 = vshrl.u32 %v1309, 16
    %v1522 = vrot.slane %v1520, 4
    %v1523 = vshll.u32 %v1309, 16
    %v1525 = vrot.slane %v1523, 5
    %v1526 = vor.u32 %v1522, %v1525
    %v1527 = vrot.slane %v1526, 4
    %v1529 = vshll.u32 %v1357, 16
    %v1531 = vrot.slane %v1529, 5
    %v1532 = vsel %vm1364, %v1527, %v1531
    %v1534 = vshrl.u32 %v1310, 16
    %v1536 = vrot.slane %v1534, 4
    %v1537 = vshll.u32 %v1310, 16
    %v1539 = vrot.slane %v1537, 5
    %v1540 = vor.u32 %v1536, %v1539
    %v1541 = vrot.slane %v1540, 4
    %v1543 = vshll.u32 %v1358, 16
    %v1545 = vrot.slane %v1543, 5
    %v1546 = vsel %vm1364, %v1541, %v1545
    %v1548 = vshrl.u32 %v1311, 16
    %v1550 = vrot.slane %v1548, 4
    %v1551 = vshll.u32 %v1311, 16
    %v1553 = vrot.slane %v1551, 5
    %v1554 = vor.u32 %v1550, %v1553
    %v1555 = vrot.slane %v1554, 4
    %v1557 = vshll.u32 %v1359, 16
    %v1559 = vrot.slane %v1557, 5
    %v1560 = vsel %vm1364, %v1555, %v1559
    %v1562 = vshrl.u32 %v1312, 16
    %v1564 = vrot.slane %v1562, 4
    %v1565 = vshll.u32 %v1312, 16
    %v1567 = vrot.slane %v1565, 5
    %v1568 = vor.u32 %v1564, %v1567
    %v1569 = vrot.slane %v1568, 4
    %v1571 = vshll.u32 %v1360, 16
    %v1573 = vrot.slane %v1571, 5
    %v1574 = vsel %vm1364, %v1569, %v1573
    %v1576 = vshrl.u32 %v1313, 16
    %v1578 = vrot.slane %v1576, 4
    %v1579 = vshll.u32 %v1313, 16
    %v1581 = vrot.slane %v1579, 5
    %v1582 = vor.u32 %v1578, %v1581
    %v1583 = vrot.slane %v1582, 4
    %v1585 = vshll.u32 %v1361, 16
    %v1587 = vrot.slane %v1585, 5
    %v1588 = vsel %vm1364, %v1583, %v1587
    %s1589 = scalar_lea.vmem [#allocation12], 256
    %v1590 = vld [vmem:[%s1589] sm:$0xff]
    %v1591 = vld [vmem:[%s1589 + $0x8] sm:$0xff]
    %v1592 = vld [vmem:[%s1589 + $0x10] sm:$0xff]
    %v1593 = vld [vmem:[%s1589 + $0x18] sm:$0xff]
    %v1594 = vld [vmem:[%s1589 + $0x20] sm:$0xff]
    %v1595 = vld [vmem:[%s1589 + $0x28] sm:$0xff]
    %v1596 = vld [vmem:[%s1589 + $0x30] sm:$0xff]
    %v1597 = vld [vmem:[%s1589 + $0x38] sm:$0xff]
    %v1598 = vld [vmem:[%s1589 + $0x40] sm:$0xff]
    %v1599 = vld [vmem:[%s1589 + $0x48] sm:$0xff]
    %v1600 = vld [vmem:[%s1589 + $0x50] sm:$0xff]
    %v1601 = vld [vmem:[%s1589 + $0x58] sm:$0xff]
    %v1602 = vld [vmem:[%s1589 + $0x60] sm:$0xff]
    %v1603 = vld [vmem:[%s1589 + $0x68] sm:$0xff]
    %v1604 = vld [vmem:[%s1589 + $0x70] sm:$0xff]
    %v1605 = vld [vmem:[%s1589 + $0x78] sm:$0xff]
    %v1606 = vld [vmem:[%s1589 + $0x80] sm:$0xff]
    %v1607 = vld [vmem:[%s1589 + $0x88] sm:$0xff]
    %v1608 = vld [vmem:[%s1589 + $0x90] sm:$0xff]
    %v1609 = vld [vmem:[%s1589 + $0x98] sm:$0xff]
    %v1610 = vld [vmem:[%s1589 + $0xa0] sm:$0xff]
    %v1611 = vld [vmem:[%s1589 + $0xa8] sm:$0xff]
    %v1612 = vld [vmem:[%s1589 + $0xb0] sm:$0xff]
    %v1613 = vld [vmem:[%s1589 + $0xb8] sm:$0xff]
    %v1614 = vld [vmem:[%s1589 + $0xc0] sm:$0xff]
    %v1615 = vld [vmem:[%s1589 + $0xc8] sm:$0xff]
    %v1616 = vld [vmem:[%s1589 + $0xd0] sm:$0xff]
    %v1617 = vld [vmem:[%s1589 + $0xd8] sm:$0xff]
    %v1618 = vld [vmem:[%s1589 + $0xe0] sm:$0xff]
    %v1619 = vld [vmem:[%s1589 + $0xe8] sm:$0xff]
    %v1620 = vld [vmem:[%s1589 + $0xf0] sm:$0xff]
    %v1621 = vld [vmem:[%s1589 + $0xf8] sm:$0xff]
    %v1622 = vunpack.c.l.b16 %v1378
    %v1623 = vunpack.c.h.b16 %v1378
    %v1624 = vunpack.c.l.b16 %v1392
    %v1625 = vunpack.c.h.b16 %v1392
    %v1626 = vunpack.c.l.b16 %v1406
    %v1627 = vunpack.c.h.b16 %v1406
    %v1628 = vunpack.c.l.b16 %v1420
    %v1629 = vunpack.c.h.b16 %v1420
    %v1630 = vunpack.c.l.b16 %v1434
    %v1631 = vunpack.c.h.b16 %v1434
    %v1632 = vunpack.c.l.b16 %v1448
    %v1633 = vunpack.c.h.b16 %v1448
    %v1634 = vunpack.c.l.b16 %v1462
    %v1635 = vunpack.c.h.b16 %v1462
    %v1636 = vunpack.c.l.b16 %v1476
    %v1637 = vunpack.c.h.b16 %v1476
    %v1638 = vunpack.c.l.b16 %v1490
    %v1639 = vunpack.c.h.b16 %v1490
    %v1640 = vunpack.c.l.b16 %v1504
    %v1641 = vunpack.c.h.b16 %v1504
    %v1642 = vunpack.c.l.b16 %v1518
    %v1643 = vunpack.c.h.b16 %v1518
    %v1644 = vunpack.c.l.b16 %v1532
    %v1645 = vunpack.c.h.b16 %v1532
    %v1646 = vunpack.c.l.b16 %v1546
    %v1647 = vunpack.c.h.b16 %v1546
    %v1648 = vunpack.c.l.b16 %v1560
    %v1649 = vunpack.c.h.b16 %v1560
    %v1650 = vunpack.c.l.b16 %v1574
    %v1651 = vunpack.c.h.b16 %v1574
    %v1652 = vunpack.c.l.b16 %v1588
    %v1653 = vunpack.c.h.b16 %v1588
    %v1654 = vpack.c.b16 %v1624, %v1622
    %v1655 = vpack.c.b16 %v1625, %v1623
    %v1656 = vpack.c.b16 %v1628, %v1626
    %v1657 = vpack.c.b16 %v1629, %v1627
    %v1658 = vpack.c.b16 %v1632, %v1630
    %v1659 = vpack.c.b16 %v1633, %v1631
    %v1660 = vpack.c.b16 %v1636, %v1634
    %v1661 = vpack.c.b16 %v1637, %v1635
    %v1662 = vpack.c.b16 %v1640, %v1638
    %v1663 = vpack.c.b16 %v1641, %v1639
    %v1664 = vpack.c.b16 %v1644, %v1642
    %v1665 = vpack.c.b16 %v1645, %v1643
    %v1666 = vpack.c.b16 %v1648, %v1646
    %v1667 = vpack.c.b16 %v1649, %v1647
    %v1668 = vpack.c.b16 %v1652, %v1650
    %v1669 = vpack.c.b16 %v1653, %v1651
    %v1718 = vunpack.c.l.b16 %v1590
    %v1719 = vunpack.c.h.b16 %v1590
    %v1720 = vunpack.c.l.b16 %v1591
    %v1721 = vunpack.c.h.b16 %v1591
    %v1722 = vunpack.c.l.b16 %v1592
    %v1723 = vunpack.c.h.b16 %v1592
    %v1724 = vunpack.c.l.b16 %v1593
    %v1725 = vunpack.c.h.b16 %v1593
    %v1726 = vunpack.c.l.b16 %v1594
    %v1727 = vunpack.c.h.b16 %v1594
    %v1728 = vunpack.c.l.b16 %v1595
    %v1729 = vunpack.c.h.b16 %v1595
    %v1730 = vunpack.c.l.b16 %v1596
    %v1731 = vunpack.c.h.b16 %v1596
    %v1732 = vunpack.c.l.b16 %v1597
    %v1733 = vunpack.c.h.b16 %v1597
    %v1734 = vunpack.c.l.b16 %v1598
    %v1735 = vunpack.c.h.b16 %v1598
    %v1736 = vunpack.c.l.b16 %v1599
    %v1737 = vunpack.c.h.b16 %v1599
    %v1738 = vunpack.c.l.b16 %v1600
    %v1739 = vunpack.c.h.b16 %v1600
    %v1740 = vunpack.c.l.b16 %v1601
    %v1741 = vunpack.c.h.b16 %v1601
    %v1742 = vunpack.c.l.b16 %v1602
    %v1743 = vunpack.c.h.b16 %v1602
    %v1744 = vunpack.c.l.b16 %v1603
    %v1745 = vunpack.c.h.b16 %v1603
    %v1746 = vunpack.c.l.b16 %v1604
    %v1747 = vunpack.c.h.b16 %v1604
    %v1748 = vunpack.c.l.b16 %v1605
    %v1749 = vunpack.c.h.b16 %v1605
    %v1750 = vunpack.c.l.b16 %v1606
    %v1751 = vunpack.c.h.b16 %v1606
    %v1752 = vunpack.c.l.b16 %v1607
    %v1753 = vunpack.c.h.b16 %v1607
    %v1754 = vunpack.c.l.b16 %v1608
    %v1755 = vunpack.c.h.b16 %v1608
    %v1756 = vunpack.c.l.b16 %v1609
    %v1757 = vunpack.c.h.b16 %v1609
    %v1758 = vunpack.c.l.b16 %v1610
    %v1759 = vunpack.c.h.b16 %v1610
    %v1760 = vunpack.c.l.b16 %v1611
    %v1761 = vunpack.c.h.b16 %v1611
    %v1762 = vunpack.c.l.b16 %v1612
    %v1763 = vunpack.c.h.b16 %v1612
    %v1764 = vunpack.c.l.b16 %v1613
    %v1765 = vunpack.c.h.b16 %v1613
    %v1766 = vunpack.c.l.b16 %v1614
    %v1767 = vunpack.c.h.b16 %v1614
    %v1768 = vunpack.c.l.b16 %v1615
    %v1769 = vunpack.c.h.b16 %v1615
    %v1770 = vunpack.c.l.b16 %v1616
    %v1771 = vunpack.c.h.b16 %v1616
    %v1772 = vunpack.c.l.b16 %v1617
    %v1773 = vunpack.c.h.b16 %v1617
    %v1774 = vunpack.c.l.b16 %v1618
    %v1775 = vunpack.c.h.b16 %v1618
    %v1776 = vunpack.c.l.b16 %v1619
    %v1777 = vunpack.c.h.b16 %v1619
    %v1778 = vunpack.c.l.b16 %v1620
    %v1779 = vunpack.c.h.b16 %v1620
    %v1780 = vunpack.c.l.b16 %v1621
    %v1781 = vunpack.c.h.b16 %v1621
    %v1782 = vpack.c.b16 %v1720, %v1718
    %v1783 = vpack.c.b16 %v1721, %v1719
    %v1784 = vpack.c.b16 %v1724, %v1722
    %v1785 = vpack.c.b16 %v1725, %v1723
    %v1786 = vpack.c.b16 %v1728, %v1726
    %v1787 = vpack.c.b16 %v1729, %v1727
    %v1788 = vpack.c.b16 %v1732, %v1730
    %v1789 = vpack.c.b16 %v1733, %v1731
    %v1790 = vpack.c.b16 %v1736, %v1734
    %v1791 = vpack.c.b16 %v1737, %v1735
    %v1792 = vpack.c.b16 %v1740, %v1738
    %v1793 = vpack.c.b16 %v1741, %v1739
    %v1794 = vpack.c.b16 %v1744, %v1742
    %v1795 = vpack.c.b16 %v1745, %v1743
    %v1796 = vpack.c.b16 %v1748, %v1746
    %v1797 = vpack.c.b16 %v1749, %v1747
    %v1798 = vpack.c.b16 %v1752, %v1750
    %v1799 = vpack.c.b16 %v1753, %v1751
    %v1800 = vpack.c.b16 %v1756, %v1754
    %v1801 = vpack.c.b16 %v1757, %v1755
    %v1802 = vpack.c.b16 %v1760, %v1758
    %v1803 = vpack.c.b16 %v1761, %v1759
    %v1804 = vpack.c.b16 %v1764, %v1762
    %v1805 = vpack.c.b16 %v1765, %v1763
    %v1806 = vpack.c.b16 %v1768, %v1766
    %v1807 = vpack.c.b16 %v1769, %v1767
    %v1808 = vpack.c.b16 %v1772, %v1770
    %v1809 = vpack.c.b16 %v1773, %v1771
    %v1810 = vpack.c.b16 %v1776, %v1774
    %v1811 = vpack.c.b16 %v1777, %v1775
    %v1812 = vpack.c.b16 %v1780, %v1778
    %v1813 = vpack.c.b16 %v1781, %v1779
    %1846 = vmatprep.subr.bf16.mxu0 %v1797
    %1847 = vmatpush1.bf16.msra.mxu0 %v1796
    %1848 = vmatprep.subr.bf16.mxu0 %v1795
    %1849 = vmatpush1.bf16.msra.mxu0 %v1794
    %1850 = vmatprep.subr.bf16.mxu0 %v1793
    %1851 = vmatpush1.bf16.msra.mxu0 %v1792
    %1852 = vmatprep.subr.bf16.mxu0 %v1791
    %1853 = vmatpush1.bf16.msra.mxu0 %v1790
    %1854 = vmatprep.subr.bf16.mxu0 %v1789
    %1855 = vmatpush1.bf16.msra.mxu0 %v1788
    %1856 = vmatprep.subr.bf16.mxu0 %v1787
    %1857 = vmatpush1.bf16.msra.mxu0 %v1786
    %1858 = vmatprep.subr.bf16.mxu0 %v1785
    %1859 = vmatpush1.bf16.msra.mxu0 %v1784
    %1860 = vmatprep.subr.bf16.mxu0 %v1783
    %1861 = vmatpush1.bf16.msra.mxu0 %v1782
    %1862 = vmatprep.subr.bf16.mxu0 %v1813
    %1863 = vmatpush2.bf16.msra.mxu0 %v1812
    %1864 = vmatprep.subr.bf16.mxu0 %v1811
    %1865 = vmatpush2.bf16.msra.mxu0 %v1810
    %1866 = vmatprep.subr.bf16.mxu0 %v1809
    %1867 = vmatpush2.bf16.msra.mxu0 %v1808
    %1868 = vmatprep.subr.bf16.mxu0 %v1807
    %1869 = vmatpush2.bf16.msra.mxu0 %v1806
    %1870 = vmatprep.subr.bf16.mxu0 %v1805
    %1871 = vmatpush2.bf16.msra.mxu0 %v1804
    %1872 = vmatprep.subr.bf16.mxu0 %v1803
    %1873 = vmatpush2.bf16.msra.mxu0 %v1802
    %1874 = vmatprep.subr.bf16.mxu0 %v1801
    %1875 = vmatpush2.bf16.msra.mxu0 %v1800
    %1876 = vmatprep.subr.bf16.mxu0 %v1799
    %1877 = vmatpush2.bf16.msra.mxu0 %v1798
    %1878 = vmatprep.mubr.bf16.mxu0 %v1655
    %1879 = vmatmul.mubr.bf16.gmra.mxu0 %v1654
    %v1880 = vpop.f32.mrf.mxu0
    %v1881 = vadd.f32 0.0, %v1880
    %v1882 = vpop.f32.mrf.mxu0
    %v1883 = vadd.f32 0.0, %v1882
    %v1884 = vpop.f32.mrf.mxu0
    %v1885 = vadd.f32 0.0, %v1884
    %v1886 = vpop.f32.mrf.mxu0
    %v1887 = vadd.f32 0.0, %v1886
    %1888 = vmatprep.mubr.bf16.mxu0 %v1657
    %1889 = vmatmul.mubr.bf16.gmra.mxu0 %v1656
    %v1890 = vpop.f32.mrf.mxu0
    %v1891 = vadd.f32 0.0, %v1890
    %v1892 = vpop.f32.mrf.mxu0
    %v1893 = vadd.f32 0.0, %v1892
    %v1894 = vpop.f32.mrf.mxu0
    %v1895 = vadd.f32 0.0, %v1894
    %v1896 = vpop.f32.mrf.mxu0
    %v1897 = vadd.f32 0.0, %v1896
    %1898 = vmatprep.mubr.bf16.mxu0 %v1659
    %1899 = vmatmul.mubr.bf16.gmra.mxu0 %v1658
    %v1900 = vpop.f32.mrf.mxu0
    %v1901 = vadd.f32 0.0, %v1900
    %v1902 = vpop.f32.mrf.mxu0
    %v1903 = vadd.f32 0.0, %v1902
    %v1904 = vpop.f32.mrf.mxu0
    %v1905 = vadd.f32 0.0, %v1904
    %v1906 = vpop.f32.mrf.mxu0
    %v1907 = vadd.f32 0.0, %v1906
    %1908 = vmatprep.mubr.bf16.mxu0 %v1661
    %1909 = vmatmul.mubr.bf16.gmra.mxu0 %v1660
    %v1910 = vpop.f32.mrf.mxu0
    %v1911 = vadd.f32 0.0, %v1910
    %v1912 = vpop.f32.mrf.mxu0
    %v1913 = vadd.f32 0.0, %v1912
    %v1914 = vpop.f32.mrf.mxu0
    %v1915 = vadd.f32 0.0, %v1914
    %v1916 = vpop.f32.mrf.mxu0
    %v1917 = vadd.f32 0.0, %v1916
    %1918 = vmatprep.mubr.bf16.mxu0 %v1663
    %1919 = vmatmul.mubr.bf16.gmra.mxu0 %v1662
    %v1920 = vpop.f32.mrf.mxu0
    %v1921 = vadd.f32 0.0, %v1920
    %v1922 = vpop.f32.mrf.mxu0
    %v1923 = vadd.f32 0.0, %v1922
    %v1924 = vpop.f32.mrf.mxu0
    %v1925 = vadd.f32 0.0, %v1924
    %v1926 = vpop.f32.mrf.mxu0
    %v1927 = vadd.f32 0.0, %v1926
    %1928 = vmatprep.mubr.bf16.mxu0 %v1665
    %1929 = vmatmul.mubr.bf16.gmra.mxu0 %v1664
    %v1930 = vpop.f32.mrf.mxu0
    %v1931 = vadd.f32 0.0, %v1930
    %v1932 = vpop.f32.mrf.mxu0
    %v1933 = vadd.f32 0.0, %v1932
    %v1934 = vpop.f32.mrf.mxu0
    %v1935 = vadd.f32 0.0, %v1934
    %v1936 = vpop.f32.mrf.mxu0
    %v1937 = vadd.f32 0.0, %v1936
    %1938 = vmatprep.mubr.bf16.mxu0 %v1667
    %1939 = vmatmul.mubr.bf16.gmra.mxu0 %v1666
    %v1940 = vpop.f32.mrf.mxu0
    %v1941 = vadd.f32 0.0, %v1940
    %v1942 = vpop.f32.mrf.mxu0
    %v1943 = vadd.f32 0.0, %v1942
    %v1944 = vpop.f32.mrf.mxu0
    %v1945 = vadd.f32 0.0, %v1944
    %v1946 = vpop.f32.mrf.mxu0
    %v1947 = vadd.f32 0.0, %v1946
    %1948 = vmatprep.mubr.bf16.mxu0 %v1669
    %1949 = vmatmul.mubr.bf16.gmra.mxu0 %v1668
    %v1950 = vpop.f32.mrf.mxu0
    %v1951 = vadd.f32 0.0, %v1950
    %v1952 = vpop.f32.mrf.mxu0
    %v1953 = vadd.f32 0.0, %v1952
    %v1954 = vpop.f32.mrf.mxu0
    %v1955 = vadd.f32 0.0, %v1954
    %v1956 = vpop.f32.mrf.mxu0
    %v1957 = vadd.f32 0.0, %v1956
    %1958 = vdwg.mxu0
    %v1975 = vunpack.c.l.b16 %v1298
    %v1976 = vunpack.c.h.b16 %v1298
    %v1977 = vunpack.c.l.b16 %v1299
    %v1978 = vunpack.c.h.b16 %v1299
    %v1979 = vunpack.c.l.b16 %v1300
    %v1980 = vunpack.c.h.b16 %v1300
    %v1981 = vunpack.c.l.b16 %v1301
    %v1982 = vunpack.c.h.b16 %v1301
    %v1983 = vunpack.c.l.b16 %v1302
    %v1984 = vunpack.c.h.b16 %v1302
    %v1985 = vunpack.c.l.b16 %v1303
    %v1986 = vunpack.c.h.b16 %v1303
    %v1987 = vunpack.c.l.b16 %v1304
    %v1988 = vunpack.c.h.b16 %v1304
    %v1989 = vunpack.c.l.b16 %v1305
    %v1990 = vunpack.c.h.b16 %v1305
    %v1991 = vunpack.c.l.b16 %v1306
    %v1992 = vunpack.c.h.b16 %v1306
    %v1993 = vunpack.c.l.b16 %v1307
    %v1994 = vunpack.c.h.b16 %v1307
    %v1995 = vunpack.c.l.b16 %v1308
    %v1996 = vunpack.c.h.b16 %v1308
    %v1997 = vunpack.c.l.b16 %v1309
    %v1998 = vunpack.c.h.b16 %v1309
    %v1999 = vunpack.c.l.b16 %v1310
    %v2000 = vunpack.c.h.b16 %v1310
    %v2001 = vunpack.c.l.b16 %v1311
    %v2002 = vunpack.c.h.b16 %v1311
    %v2003 = vunpack.c.l.b16 %v1312
    %v2004 = vunpack.c.h.b16 %v1312
    %v2005 = vunpack.c.l.b16 %v1313
    %v2006 = vunpack.c.h.b16 %v1313
    %v2007 = vpack.c.b16 %v1977, %v1975
    %v2008 = vpack.c.b16 %v1978, %v1976
    %v2009 = vpack.c.b16 %v1981, %v1979
    %v2010 = vpack.c.b16 %v1982, %v1980
    %v2011 = vpack.c.b16 %v1985, %v1983
    %v2012 = vpack.c.b16 %v1986, %v1984
    %v2013 = vpack.c.b16 %v1989, %v1987
    %v2014 = vpack.c.b16 %v1990, %v1988
    %v2015 = vpack.c.b16 %v1993, %v1991
    %v2016 = vpack.c.b16 %v1994, %v1992
    %v2017 = vpack.c.b16 %v1997, %v1995
    %v2018 = vpack.c.b16 %v1998, %v1996
    %v2019 = vpack.c.b16 %v2001, %v1999
    %v2020 = vpack.c.b16 %v2002, %v2000
    %v2021 = vpack.c.b16 %v2005, %v2003
    %v2022 = vpack.c.b16 %v2006, %v2004
    %v2071 = vunpack.c.l.b16 %v1314
    %v2072 = vunpack.c.h.b16 %v1314
    %v2073 = vunpack.c.l.b16 %v1315
    %v2074 = vunpack.c.h.b16 %v1315
    %v2075 = vunpack.c.l.b16 %v1316
    %v2076 = vunpack.c.h.b16 %v1316
    %v2077 = vunpack.c.l.b16 %v1317
    %v2078 = vunpack.c.h.b16 %v1317
    %v2079 = vunpack.c.l.b16 %v1318
    %v2080 = vunpack.c.h.b16 %v1318
    %v2081 = vunpack.c.l.b16 %v1319
    %v2082 = vunpack.c.h.b16 %v1319
    %v2083 = vunpack.c.l.b16 %v1320
    %v2084 = vunpack.c.h.b16 %v1320
    %v2085 = vunpack.c.l.b16 %v1321
    %v2086 = vunpack.c.h.b16 %v1321
    %v2087 = vunpack.c.l.b16 %v1322
    %v2088 = vunpack.c.h.b16 %v1322
    %v2089 = vunpack.c.l.b16 %v1323
    %v2090 = vunpack.c.h.b16 %v1323
    %v2091 = vunpack.c.l.b16 %v1324
    %v2092 = vunpack.c.h.b16 %v1324
    %v2093 = vunpack.c.l.b16 %v1325
    %v2094 = vunpack.c.h.b16 %v1325
    %v2095 = vunpack.c.l.b16 %v1326
    %v2096 = vunpack.c.h.b16 %v1326
    %v2097 = vunpack.c.l.b16 %v1327
    %v2098 = vunpack.c.h.b16 %v1327
    %v2099 = vunpack.c.l.b16 %v1328
    %v2100 = vunpack.c.h.b16 %v1328
    %v2101 = vunpack.c.l.b16 %v1329
    %v2102 = vunpack.c.h.b16 %v1329
    %v2103 = vunpack.c.l.b16 %v1330
    %v2104 = vunpack.c.h.b16 %v1330
    %v2105 = vunpack.c.l.b16 %v1331
    %v2106 = vunpack.c.h.b16 %v1331
    %v2107 = vunpack.c.l.b16 %v1332
    %v2108 = vunpack.c.h.b16 %v1332
    %v2109 = vunpack.c.l.b16 %v1333
    %v2110 = vunpack.c.h.b16 %v1333
    %v2111 = vunpack.c.l.b16 %v1334
    %v2112 = vunpack.c.h.b16 %v1334
    %v2113 = vunpack.c.l.b16 %v1335
    %v2114 = vunpack.c.h.b16 %v1335
    %v2115 = vunpack.c.l.b16 %v1336
    %v2116 = vunpack.c.h.b16 %v1336
    %v2117 = vunpack.c.l.b16 %v1337
    %v2118 = vunpack.c.h.b16 %v1337
    %v2119 = vunpack.c.l.b16 %v1338
    %v2120 = vunpack.c.h.b16 %v1338
    %v2121 = vunpack.c.l.b16 %v1339
    %v2122 = vunpack.c.h.b16 %v1339
    %v2123 = vunpack.c.l.b16 %v1340
    %v2124 = vunpack.c.h.b16 %v1340
    %v2125 = vunpack.c.l.b16 %v1341
    %v2126 = vunpack.c.h.b16 %v1341
    %v2127 = vunpack.c.l.b16 %v1342
    %v2128 = vunpack.c.h.b16 %v1342
    %v2129 = vunpack.c.l.b16 %v1343
    %v2130 = vunpack.c.h.b16 %v1343
    %v2131 = vunpack.c.l.b16 %v1344
    %v2132 = vunpack.c.h.b16 %v1344
    %v2133 = vunpack.c.l.b16 %v1345
    %v2134 = vunpack.c.h.b16 %v1345
    %v2135 = vpack.c.b16 %v2073, %v2071
    %v2136 = vpack.c.b16 %v2074, %v2072
    %v2137 = vpack.c.b16 %v2077, %v2075
    %v2138 = vpack.c.b16 %v2078, %v2076
    %v2139 = vpack.c.b16 %v2081, %v2079
    %v2140 = vpack.c.b16 %v2082, %v2080
    %v2141 = vpack.c.b16 %v2085, %v2083
    %v2142 = vpack.c.b16 %v2086, %v2084
    %v2143 = vpack.c.b16 %v2089, %v2087
    %v2144 = vpack.c.b16 %v2090, %v2088
    %v2145 = vpack.c.b16 %v2093, %v2091
    %v2146 = vpack.c.b16 %v2094, %v2092
    %v2147 = vpack.c.b16 %v2097, %v2095
    %v2148 = vpack.c.b16 %v2098, %v2096
    %v2149 = vpack.c.b16 %v2101, %v2099
    %v2150 = vpack.c.b16 %v2102, %v2100
    %v2151 = vpack.c.b16 %v2105, %v2103
    %v2152 = vpack.c.b16 %v2106, %v2104
    %v2153 = vpack.c.b16 %v2109, %v2107
    %v2154 = vpack.c.b16 %v2110, %v2108
    %v2155 = vpack.c.b16 %v2113, %v2111
    %v2156 = vpack.c.b16 %v2114, %v2112
    %v2157 = vpack.c.b16 %v2117, %v2115
    %v2158 = vpack.c.b16 %v2118, %v2116
    %v2159 = vpack.c.b16 %v2121, %v2119
    %v2160 = vpack.c.b16 %v2122, %v2120
    %v2161 = vpack.c.b16 %v2125, %v2123
    %v2162 = vpack.c.b16 %v2126, %v2124
    %v2163 = vpack.c.b16 %v2129, %v2127
    %v2164 = vpack.c.b16 %v2130, %v2128
    %v2165 = vpack.c.b16 %v2133, %v2131
    %v2166 = vpack.c.b16 %v2134, %v2132
    %2199 = vmatprep.subr.bf16.mxu0 %v2150
    %2200 = vmatpush1.bf16.msra.mxu0 %v2149
    %2201 = vmatprep.subr.bf16.mxu0 %v2148
    %2202 = vmatpush1.bf16.msra.mxu0 %v2147
    %2203 = vmatprep.subr.bf16.mxu0 %v2146
    %2204 = vmatpush1.bf16.msra.mxu0 %v2145
    %2205 = vmatprep.subr.bf16.mxu0 %v2144
    %2206 = vmatpush1.bf16.msra.mxu0 %v2143
    %2207 = vmatprep.subr.bf16.mxu0 %v2142
    %2208 = vmatpush1.bf16.msra.mxu0 %v2141
    %2209 = vmatprep.subr.bf16.mxu0 %v2140
    %2210 = vmatpush1.bf16.msra.mxu0 %v2139
    %2211 = vmatprep.subr.bf16.mxu0 %v2138
    %2212 = vmatpush1.bf16.msra.mxu0 %v2137
    %2213 = vmatprep.subr.bf16.mxu0 %v2136
    %2214 = vmatpush1.bf16.msra.mxu0 %v2135
    %2215 = vmatprep.subr.bf16.mxu0 %v2166
    %2216 = vmatpush2.bf16.msra.mxu0 %v2165
    %2217 = vmatprep.subr.bf16.mxu0 %v2164
    %2218 = vmatpush2.bf16.msra.mxu0 %v2163
    %2219 = vmatprep.subr.bf16.mxu0 %v2162
    %2220 = vmatpush2.bf16.msra.mxu0 %v2161
    %2221 = vmatprep.subr.bf16.mxu0 %v2160
    %2222 = vmatpush2.bf16.msra.mxu0 %v2159
    %2223 = vmatprep.subr.bf16.mxu0 %v2158
    %2224 = vmatpush2.bf16.msra.mxu0 %v2157
    %2225 = vmatprep.subr.bf16.mxu0 %v2156
    %2226 = vmatpush2.bf16.msra.mxu0 %v2155
    %2227 = vmatprep.subr.bf16.mxu0 %v2154
    %2228 = vmatpush2.bf16.msra.mxu0 %v2153
    %2229 = vmatprep.subr.bf16.mxu0 %v2152
    %2230 = vmatpush2.bf16.msra.mxu0 %v2151
    %2231 = vmatprep.mubr.bf16.mxu0 %v2008
    %2232 = vmatmul.mubr.bf16.gmra.mxu0 %v2007
    %v2233 = vpop.f32.mrf.mxu0
    %v2234 = vadd.f32 %v1881, %v2233
    %v2235 = vpop.f32.mrf.mxu0
    %v2236 = vadd.f32 %v1883, %v2235
    %v2237 = vpop.f32.mrf.mxu0
    %v2238 = vadd.f32 %v1885, %v2237
    %v2239 = vpop.f32.mrf.mxu0
    %v2240 = vadd.f32 %v1887, %v2239
    %2241 = vmatprep.mubr.bf16.mxu0 %v2010
    %2242 = vmatmul.mubr.bf16.gmra.mxu0 %v2009
    %v2243 = vpop.f32.mrf.mxu0
    %v2244 = vadd.f32 %v1891, %v2243
    %v2245 = vpop.f32.mrf.mxu0
    %v2246 = vadd.f32 %v1893, %v2245
    %v2247 = vpop.f32.mrf.mxu0
    %v2248 = vadd.f32 %v1895, %v2247
    %v2249 = vpop.f32.mrf.mxu0
    %v2250 = vadd.f32 %v1897, %v2249
    %2251 = vmatprep.mubr.bf16.mxu0 %v2012
    %2252 = vmatmul.mubr.bf16.gmra.mxu0 %v2011
    %v2253 = vpop.f32.mrf.mxu0
    %v2254 = vadd.f32 %v1901, %v2253
    %v2255 = vpop.f32.mrf.mxu0
    %v2256 = vadd.f32 %v1903, %v2255
    %v2257 = vpop.f32.mrf.mxu0
    %v2258 = vadd.f32 %v1905, %v2257
    %v2259 = vpop.f32.mrf.mxu0
    %v2260 = vadd.f32 %v1907, %v2259
    %2261 = vmatprep.mubr.bf16.mxu0 %v2014
    %2262 = vmatmul.mubr.bf16.gmra.mxu0 %v2013
    %v2263 = vpop.f32.mrf.mxu0
    %v2264 = vadd.f32 %v1911, %v2263
    %v2265 = vpop.f32.mrf.mxu0
    %v2266 = vadd.f32 %v1913, %v2265
    %v2267 = vpop.f32.mrf.mxu0
    %v2268 = vadd.f32 %v1915, %v2267
    %v2269 = vpop.f32.mrf.mxu0
    %v2270 = vadd.f32 %v1917, %v2269
    %2271 = vmatprep.mubr.bf16.mxu0 %v2016
    %2272 = vmatmul.mubr.bf16.gmra.mxu0 %v2015
    %v2273 = vpop.f32.mrf.mxu0
    %v2274 = vadd.f32 %v1921, %v2273
    %v2275 = vpop.f32.mrf.mxu0
    %v2276 = vadd.f32 %v1923, %v2275
    %v2277 = vpop.f32.mrf.mxu0
    %v2278 = vadd.f32 %v1925, %v2277
    %v2279 = vpop.f32.mrf.mxu0
    %v2280 = vadd.f32 %v1927, %v2279
    %2281 = vmatprep.mubr.bf16.mxu0 %v2018
    %2282 = vmatmul.mubr.bf16.gmra.mxu0 %v2017
    %v2283 = vpop.f32.mrf.mxu0
    %v2284 = vadd.f32 %v1931, %v2283
    %v2285 = vpop.f32.mrf.mxu0
    %v2286 = vadd.f32 %v1933, %v2285
    %v2287 = vpop.f32.mrf.mxu0
    %v2288 = vadd.f32 %v1935, %v2287
    %v2289 = vpop.f32.mrf.mxu0
    %v2290 = vadd.f32 %v1937, %v2289
    %2291 = vmatprep.mubr.bf16.mxu0 %v2020
    %2292 = vmatmul.mubr.bf16.gmra.mxu0 %v2019
    %v2293 = vpop.f32.mrf.mxu0
    %v2294 = vadd.f32 %v1941, %v2293
    %v2295 = vpop.f32.mrf.mxu0
    %v2296 = vadd.f32 %v1943, %v2295
    %v2297 = vpop.f32.mrf.mxu0
    %v2298 = vadd.f32 %v1945, %v2297
    %v2299 = vpop.f32.mrf.mxu0
    %v2300 = vadd.f32 %v1947, %v2299
    %2301 = vmatprep.mubr.bf16.mxu0 %v2022
    %2302 = vmatmul.mubr.bf16.gmra.mxu0 %v2021
    %v2303 = vpop.f32.mrf.mxu0
    %v2304 = vadd.f32 %v1951, %v2303
    %v2305 = vpop.f32.mrf.mxu0
    %v2306 = vadd.f32 %v1953, %v2305
    %v2307 = vpop.f32.mrf.mxu0
    %v2308 = vadd.f32 %v1955, %v2307
    %v2309 = vpop.f32.mrf.mxu0
    %v2310 = vadd.f32 %v1957, %v2309
    %2311 = vdwg.mxu0
    %v2312 = vld [vmem:[#allocation2] sm:$0xee]
    %v2313 = vld [vmem:[#allocation2 + $0x10] sm:$0xee]
    %v2314 = vld [vmem:[#allocation2 + $0x20] sm:$0xee]
    %v2315 = vld [vmem:[#allocation2 + $0x30] sm:$0xee]
    %v2316 = vld [vmem:[#allocation2 + $0x40] sm:$0xee]
    %v2317 = vld [vmem:[#allocation2 + $0x50] sm:$0xee]
    %v2318 = vld [vmem:[#allocation2 + $0x60] sm:$0xee]
    %v2319 = vld [vmem:[#allocation2 + $0x70] sm:$0xee]
    %v2320 = vld [vmem:[#allocation2 + $0xa0] sm:$0xee]
    %v2321 = vld [vmem:[#allocation2 + $0xb0] sm:$0xee]
    %v2322 = vld [vmem:[#allocation2 + $0xc0] sm:$0xee]
    %v2323 = vld [vmem:[#allocation2 + $0xd0] sm:$0xee]
    %v2324 = vld [vmem:[#allocation2 + $0xe0] sm:$0xee]
    %v2325 = vld [vmem:[#allocation2 + $0xf0] sm:$0xee]
    %v2326 = vld [vmem:[#allocation2 + $0x100] sm:$0xee]
    %v2327 = vld [vmem:[#allocation2 + $0x110] sm:$0xee]
    %vm2360 = vcmask 1042432
    %vm2361 = vcmask 1046532
    %vm2362 = vmor %vm2360, %vm2361
    %v2363 = vrot.slane %v2312, 5
    %v2364 = vrot.slane %v2363, 4
    %v2365 = vrot.slane %v1346, 5
    %v2366 = vsel %vm2362, %v2364, %v2365
    %v2367 = vrot.slane %v2313, 5
    %v2368 = vrot.slane %v2367, 4
    %v2369 = vrot.slane %v1347, 5
    %v2370 = vsel %vm2362, %v2368, %v2369
    %v2371 = vrot.slane %v2314, 5
    %v2372 = vrot.slane %v2371, 4
    %v2373 = vrot.slane %v1348, 5
    %v2374 = vsel %vm2362, %v2372, %v2373
    %v2375 = vrot.slane %v2315, 5
    %v2376 = vrot.slane %v2375, 4
    %v2377 = vrot.slane %v1349, 5
    %v2378 = vsel %vm2362, %v2376, %v2377
    %v2379 = vrot.slane %v2316, 5
    %v2380 = vrot.slane %v2379, 4
    %v2381 = vrot.slane %v1350, 5
    %v2382 = vsel %vm2362, %v2380, %v2381
    %v2383 = vrot.slane %v2317, 5
    %v2384 = vrot.slane %v2383, 4
    %v2385 = vrot.slane %v1351, 5
    %v2386 = vsel %vm2362, %v2384, %v2385
    %v2387 = vrot.slane %v2318, 5
    %v2388 = vrot.slane %v2387, 4
    %v2389 = vrot.slane %v1352, 5
    %v2390 = vsel %vm2362, %v2388, %v2389
    %v2391 = vrot.slane %v2319, 5
    %v2392 = vrot.slane %v2391, 4
    %v2393 = vrot.slane %v1353, 5
    %v2394 = vsel %vm2362, %v2392, %v2393
    %v2395 = vrot.slane %v2320, 5
    %v2396 = vrot.slane %v2395, 4
    %v2397 = vrot.slane %v1354, 5
    %v2398 = vsel %vm2362, %v2396, %v2397
    %v2399 = vrot.slane %v2321, 5
    %v2400 = vrot.slane %v2399, 4
    %v2401 = vrot.slane %v1355, 5
    %v2402 = vsel %vm2362, %v2400, %v2401
    %v2403 = vrot.slane %v2322, 5
    %v2404 = vrot.slane %v2403, 4
    %v2405 = vrot.slane %v1356, 5
    %v2406 = vsel %vm2362, %v2404, %v2405
    %v2407 = vrot.slane %v2323, 5
    %v2408 = vrot.slane %v2407, 4
    %v2409 = vrot.slane %v1357, 5
    %v2410 = vsel %vm2362, %v2408, %v2409
    %v2411 = vrot.slane %v2324, 5
    %v2412 = vrot.slane %v2411, 4
    %v2413 = vrot.slane %v1358, 5
    %v2414 = vsel %vm2362, %v2412, %v2413
    %v2415 = vrot.slane %v2325, 5
    %v2416 = vrot.slane %v2415, 4
    %v2417 = vrot.slane %v1359, 5
    %v2418 = vsel %vm2362, %v2416, %v2417
    %v2419 = vrot.slane %v2326, 5
    %v2420 = vrot.slane %v2419, 4
    %v2421 = vrot.slane %v1360, 5
    %v2422 = vsel %vm2362, %v2420, %v2421
    %v2423 = vrot.slane %v2327, 5
    %v2424 = vrot.slane %v2423, 4
    %v2425 = vrot.slane %v1361, 5
    %v2426 = vsel %vm2362, %v2424, %v2425
    %s2427 = scalar_lea.vmem [#allocation12], 512
    %v2428 = vld [vmem:[%s2427] sm:$0xff]
    %v2429 = vld [vmem:[%s2427 + $0x8] sm:$0xff]
    %v2430 = vld [vmem:[%s2427 + $0x10] sm:$0xff]
    %v2431 = vld [vmem:[%s2427 + $0x18] sm:$0xff]
    %v2432 = vld [vmem:[%s2427 + $0x20] sm:$0xff]
    %v2433 = vld [vmem:[%s2427 + $0x28] sm:$0xff]
    %v2434 = vld [vmem:[%s2427 + $0x30] sm:$0xff]
    %v2435 = vld [vmem:[%s2427 + $0x38] sm:$0xff]
    %v2436 = vld [vmem:[%s2427 + $0x40] sm:$0xff]
    %v2437 = vld [vmem:[%s2427 + $0x48] sm:$0xff]
    %v2438 = vld [vmem:[%s2427 + $0x50] sm:$0xff]
    %v2439 = vld [vmem:[%s2427 + $0x58] sm:$0xff]
    %v2440 = vld [vmem:[%s2427 + $0x60] sm:$0xff]
    %v2441 = vld [vmem:[%s2427 + $0x68] sm:$0xff]
    %v2442 = vld [vmem:[%s2427 + $0x70] sm:$0xff]
    %v2443 = vld [vmem:[%s2427 + $0x78] sm:$0xff]
    %v2444 = vld [vmem:[%s2427 + $0x80] sm:$0xff]
    %v2445 = vld [vmem:[%s2427 + $0x88] sm:$0xff]
    %v2446 = vld [vmem:[%s2427 + $0x90] sm:$0xff]
    %v2447 = vld [vmem:[%s2427 + $0x98] sm:$0xff]
    %v2448 = vld [vmem:[%s2427 + $0xa0] sm:$0xff]
    %v2449 = vld [vmem:[%s2427 + $0xa8] sm:$0xff]
    %v2450 = vld [vmem:[%s2427 + $0xb0] sm:$0xff]
    %v2451 = vld [vmem:[%s2427 + $0xb8] sm:$0xff]
    %v2452 = vld [vmem:[%s2427 + $0xc0] sm:$0xff]
    %v2453 = vld [vmem:[%s2427 + $0xc8] sm:$0xff]
    %v2454 = vld [vmem:[%s2427 + $0xd0] sm:$0xff]
    %v2455 = vld [vmem:[%s2427 + $0xd8] sm:$0xff]
    %v2456 = vld [vmem:[%s2427 + $0xe0] sm:$0xff]
    %v2457 = vld [vmem:[%s2427 + $0xe8] sm:$0xff]
    %v2458 = vld [vmem:[%s2427 + $0xf0] sm:$0xff]
    %v2459 = vld [vmem:[%s2427 + $0xf8] sm:$0xff]
    %v2460 = vunpack.c.l.b16 %v2366
    %v2461 = vunpack.c.h.b16 %v2366
    %v2462 = vunpack.c.l.b16 %v2370
    %v2463 = vunpack.c.h.b16 %v2370
    %v2464 = vunpack.c.l.b16 %v2374
    %v2465 = vunpack.c.h.b16 %v2374
    %v2466 = vunpack.c.l.b16 %v2378
    %v2467 = vunpack.c.h.b16 %v2378
    %v2468 = vunpack.c.l.b16 %v2382
    %v2469 = vunpack.c.h.b16 %v2382
    %v2470 = vunpack.c.l.b16 %v2386
    %v2471 = vunpack.c.h.b16 %v2386
    %v2472 = vunpack.c.l.b16 %v2390
    %v2473 = vunpack.c.h.b16 %v2390
    %v2474 = vunpack.c.l.b16 %v2394
    %v2475 = vunpack.c.h.b16 %v2394
    %v2476 = vunpack.c.l.b16 %v2398
    %v2477 = vunpack.c.h.b16 %v2398
    %v2478 = vunpack.c.l.b16 %v2402
    %v2479 = vunpack.c.h.b16 %v2402
    %v2480 = vunpack.c.l.b16 %v2406
    %v2481 = vunpack.c.h.b16 %v2406
    %v2482 = vunpack.c.l.b16 %v2410
    %v2483 = vunpack.c.h.b16 %v2410
    %v2484 = vunpack.c.l.b16 %v2414
    %v2485 = vunpack.c.h.b16 %v2414
    %v2486 = vunpack.c.l.b16 %v2418
    %v2487 = vunpack.c.h.b16 %v2418
    %v2488 = vunpack.c.l.b16 %v2422
    %v2489 = vunpack.c.h.b16 %v2422
    %v2490 = vunpack.c.l.b16 %v2426
    %v2491 = vunpack.c.h.b16 %v2426
    %v2492 = vpack.c.b16 %v2462, %v2460
    %v2493 = vpack.c.b16 %v2463, %v2461
    %v2494 = vpack.c.b16 %v2466, %v2464
    %v2495 = vpack.c.b16 %v2467, %v2465
    %v2496 = vpack.c.b16 %v2470, %v2468
    %v2497 = vpack.c.b16 %v2471, %v2469
    %v2498 = vpack.c.b16 %v2474, %v2472
    %v2499 = vpack.c.b16 %v2475, %v2473
    %v2500 = vpack.c.b16 %v2478, %v2476
    %v2501 = vpack.c.b16 %v2479, %v2477
    %v2502 = vpack.c.b16 %v2482, %v2480
    %v2503 = vpack.c.b16 %v2483, %v2481
    %v2504 = vpack.c.b16 %v2486, %v2484
    %v2505 = vpack.c.b16 %v2487, %v2485
    %v2506 = vpack.c.b16 %v2490, %v2488
    %v2507 = vpack.c.b16 %v2491, %v2489
    %v2556 = vunpack.c.l.b16 %v2428
    %v2557 = vunpack.c.h.b16 %v2428
    %v2558 = vunpack.c.l.b16 %v2429
    %v2559 = vunpack.c.h.b16 %v2429
    %v2560 = vunpack.c.l.b16 %v2430
    %v2561 = vunpack.c.h.b16 %v2430
    %v2562 = vunpack.c.l.b16 %v2431
    %v2563 = vunpack.c.h.b16 %v2431
    %v2564 = vunpack.c.l.b16 %v2432
    %v2565 = vunpack.c.h.b16 %v2432
    %v2566 = vunpack.c.l.b16 %v2433
    %v2567 = vunpack.c.h.b16 %v2433
    %v2568 = vunpack.c.l.b16 %v2434
    %v2569 = vunpack.c.h.b16 %v2434
    %v2570 = vunpack.c.l.b16 %v2435
    %v2571 = vunpack.c.h.b16 %v2435
    %v2572 = vunpack.c.l.b16 %v2436
    %v2573 = vunpack.c.h.b16 %v2436
    %v2574 = vunpack.c.l.b16 %v2437
    %v2575 = vunpack.c.h.b16 %v2437
    %v2576 = vunpack.c.l.b16 %v2438
    %v2577 = vunpack.c.h.b16 %v2438
    %v2578 = vunpack.c.l.b16 %v2439
    %v2579 = vunpack.c.h.b16 %v2439
    %v2580 = vunpack.c.l.b16 %v2440
    %v2581 = vunpack.c.h.b16 %v2440
    %v2582 = vunpack.c.l.b16 %v2441
    %v2583 = vunpack.c.h.b16 %v2441
    %v2584 = vunpack.c.l.b16 %v2442
    %v2585 = vunpack.c.h.b16 %v2442
    %v2586 = vunpack.c.l.b16 %v2443
    %v2587 = vunpack.c.h.b16 %v2443
    %v2588 = vunpack.c.l.b16 %v2444
    %v2589 = vunpack.c.h.b16 %v2444
    %v2590 = vunpack.c.l.b16 %v2445
    %v2591 = vunpack.c.h.b16 %v2445
    %v2592 = vunpack.c.l.b16 %v2446
    %v2593 = vunpack.c.h.b16 %v2446
    %v2594 = vunpack.c.l.b16 %v2447
    %v2595 = vunpack.c.h.b16 %v2447
    %v2596 = vunpack.c.l.b16 %v2448
    %v2597 = vunpack.c.h.b16 %v2448
    %v2598 = vunpack.c.l.b16 %v2449
    %v2599 = vunpack.c.h.b16 %v2449
    %v2600 = vunpack.c.l.b16 %v2450
    %v2601 = vunpack.c.h.b16 %v2450
    %v2602 = vunpack.c.l.b16 %v2451
    %v2603 = vunpack.c.h.b16 %v2451
    %v2604 = vunpack.c.l.b16 %v2452
    %v2605 = vunpack.c.h.b16 %v2452
    %v2606 = vunpack.c.l.b16 %v2453
    %v2607 = vunpack.c.h.b16 %v2453
    %v2608 = vunpack.c.l.b16 %v2454
    %v2609 = vunpack.c.h.b16 %v2454
    %v2610 = vunpack.c.l.b16 %v2455
    %v2611 = vunpack.c.h.b16 %v2455
    %v2612 = vunpack.c.l.b16 %v2456
    %v2613 = vunpack.c.h.b16 %v2456
    %v2614 = vunpack.c.l.b16 %v2457
    %v2615 = vunpack.c.h.b16 %v2457
    %v2616 = vunpack.c.l.b16 %v2458
    %v2617 = vunpack.c.h.b16 %v2458
    %v2618 = vunpack.c.l.b16 %v2459
    %v2619 = vunpack.c.h.b16 %v2459
    %v2620 = vpack.c.b16 %v2558, %v2556
    %v2621 = vpack.c.b16 %v2559, %v2557
    %v2622 = vpack.c.b16 %v2562, %v2560
    %v2623 = vpack.c.b16 %v2563, %v2561
    %v2624 = vpack.c.b16 %v2566, %v2564
    %v2625 = vpack.c.b16 %v2567, %v2565
    %v2626 = vpack.c.b16 %v2570, %v2568
    %v2627 = vpack.c.b16 %v2571, %v2569
    %v2628 = vpack.c.b16 %v2574, %v2572
    %v2629 = vpack.c.b16 %v2575, %v2573
    %v2630 = vpack.c.b16 %v2578, %v2576
    %v2631 = vpack.c.b16 %v2579, %v2577
    %v2632 = vpack.c.b16 %v2582, %v2580
    %v2633 = vpack.c.b16 %v2583, %v2581
    %v2634 = vpack.c.b16 %v2586, %v2584
    %v2635 = vpack.c.b16 %v2587, %v2585
    %v2636 = vpack.c.b16 %v2590, %v2588
    %v2637 = vpack.c.b16 %v2591, %v2589
    %v2638 = vpack.c.b16 %v2594, %v2592
    %v2639 = vpack.c.b16 %v2595, %v2593
    %v2640 = vpack.c.b16 %v2598, %v2596
    %v2641 = vpack.c.b16 %v2599, %v2597
    %v2642 = vpack.c.b16 %v2602, %v2600
    %v2643 = vpack.c.b16 %v2603, %v2601
    %v2644 = vpack.c.b16 %v2606, %v2604
    %v2645 = vpack.c.b16 %v2607, %v2605
    %v2646 = vpack.c.b16 %v2610, %v2608
    %v2647 = vpack.c.b16 %v2611, %v2609
    %v2648 = vpack.c.b16 %v2614, %v2612
    %v2649 = vpack.c.b16 %v2615, %v2613
    %v2650 = vpack.c.b16 %v2618, %v2616
    %v2651 = vpack.c.b16 %v2619, %v2617
    %2684 = vmatprep.subr.bf16.mxu0 %v2635
    %2685 = vmatpush1.bf16.msra.mxu0 %v2634
    %2686 = vmatprep.subr.bf16.mxu0 %v2633
    %2687 = vmatpush1.bf16.msra.mxu0 %v2632
    %2688 = vmatprep.subr.bf16.mxu0 %v2631
    %2689 = vmatpush1.bf16.msra.mxu0 %v2630
    %2690 = vmatprep.subr.bf16.mxu0 %v2629
    %2691 = vmatpush1.bf16.msra.mxu0 %v2628
    %2692 = vmatprep.subr.bf16.mxu0 %v2627
    %2693 = vmatpush1.bf16.msra.mxu0 %v2626
    %2694 = vmatprep.subr.bf16.mxu0 %v2625
    %2695 = vmatpush1.bf16.msra.mxu0 %v2624
    %2696 = vmatprep.subr.bf16.mxu0 %v2623
    %2697 = vmatpush1.bf16.msra.mxu0 %v2622
    %2698 = vmatprep.subr.bf16.mxu0 %v2621
    %2699 = vmatpush1.bf16.msra.mxu0 %v2620
    %2700 = vmatprep.subr.bf16.mxu0 %v2651
    %2701 = vmatpush2.bf16.msra.mxu0 %v2650
    %2702 = vmatprep.subr.bf16.mxu0 %v2649
    %2703 = vmatpush2.bf16.msra.mxu0 %v2648
    %2704 = vmatprep.subr.bf16.mxu0 %v2647
    %2705 = vmatpush2.bf16.msra.mxu0 %v2646
    %2706 = vmatprep.subr.bf16.mxu0 %v2645
    %2707 = vmatpush2.bf16.msra.mxu0 %v2644
    %2708 = vmatprep.subr.bf16.mxu0 %v2643
    %2709 = vmatpush2.bf16.msra.mxu0 %v2642
    %2710 = vmatprep.subr.bf16.mxu0 %v2641
    %2711 = vmatpush2.bf16.msra.mxu0 %v2640
    %2712 = vmatprep.subr.bf16.mxu0 %v2639
    %2713 = vmatpush2.bf16.msra.mxu0 %v2638
    %2714 = vmatprep.subr.bf16.mxu0 %v2637
    %2715 = vmatpush2.bf16.msra.mxu0 %v2636
    %2716 = vmatprep.mubr.bf16.mxu0 %v2493
    %2717 = vmatmul.mubr.bf16.gmra.mxu0 %v2492
    %v2718 = vpop.f32.mrf.mxu0
    %v2719 = vadd.f32 0.0, %v2718
    %v2720 = vpop.f32.mrf.mxu0
    %v2721 = vadd.f32 0.0, %v2720
    %v2722 = vpop.f32.mrf.mxu0
    %v2723 = vadd.f32 0.0, %v2722
    %v2724 = vpop.f32.mrf.mxu0
    %v2725 = vadd.f32 0.0, %v2724
    %2726 = vmatprep.mubr.bf16.mxu0 %v2495
    %2727 = vmatmul.mubr.bf16.gmra.mxu0 %v2494
    %v2728 = vpop.f32.mrf.mxu0
    %v2729 = vadd.f32 0.0, %v2728
    %v2730 = vpop.f32.mrf.mxu0
    %v2731 = vadd.f32 0.0, %v2730
    %v2732 = vpop.f32.mrf.mxu0
    %v2733 = vadd.f32 0.0, %v2732
    %v2734 = vpop.f32.mrf.mxu0
    %v2735 = vadd.f32 0.0, %v2734
    %2736 = vmatprep.mubr.bf16.mxu0 %v2497
    %2737 = vmatmul.mubr.bf16.gmra.mxu0 %v2496
    %v2738 = vpop.f32.mrf.mxu0
    %v2739 = vadd.f32 0.0, %v2738
    %v2740 = vpop.f32.mrf.mxu0
    %v2741 = vadd.f32 0.0, %v2740
    %v2742 = vpop.f32.mrf.mxu0
    %v2743 = vadd.f32 0.0, %v2742
    %v2744 = vpop.f32.mrf.mxu0
    %v2745 = vadd.f32 0.0, %v2744
    %2746 = vmatprep.mubr.bf16.mxu0 %v2499
    %2747 = vmatmul.mubr.bf16.gmra.mxu0 %v2498
    %v2748 = vpop.f32.mrf.mxu0
    %v2749 = vadd.f32 0.0, %v2748
    %v2750 = vpop.f32.mrf.mxu0
    %v2751 = vadd.f32 0.0, %v2750
    %v2752 = vpop.f32.mrf.mxu0
    %v2753 = vadd.f32 0.0, %v2752
    %v2754 = vpop.f32.mrf.mxu0
    %v2755 = vadd.f32 0.0, %v2754
    %2756 = vmatprep.mubr.bf16.mxu0 %v2501
    %2757 = vmatmul.mubr.bf16.gmra.mxu0 %v2500
    %v2758 = vpop.f32.mrf.mxu0
    %v2759 = vadd.f32 0.0, %v2758
    %v2760 = vpop.f32.mrf.mxu0
    %v2761 = vadd.f32 0.0, %v2760
    %v2762 = vpop.f32.mrf.mxu0
    %v2763 = vadd.f32 0.0, %v2762
    %v2764 = vpop.f32.mrf.mxu0
    %v2765 = vadd.f32 0.0, %v2764
    %2766 = vmatprep.mubr.bf16.mxu0 %v2503
    %2767 = vmatmul.mubr.bf16.gmra.mxu0 %v2502
    %v2768 = vpop.f32.mrf.mxu0
    %v2769 = vadd.f32 0.0, %v2768
    %v2770 = vpop.f32.mrf.mxu0
    %v2771 = vadd.f32 0.0, %v2770
    %v2772 = vpop.f32.mrf.mxu0
    %v2773 = vadd.f32 0.0, %v2772
    %v2774 = vpop.f32.mrf.mxu0
    %v2775 = vadd.f32 0.0, %v2774
    %2776 = vmatprep.mubr.bf16.mxu0 %v2505
    %2777 = vmatmul.mubr.bf16.gmra.mxu0 %v2504
    %v2778 = vpop.f32.mrf.mxu0
    %v2779 = vadd.f32 0.0, %v2778
    %v2780 = vpop.f32.mrf.mxu0
    %v2781 = vadd.f32 0.0, %v2780
    %v2782 = vpop.f32.mrf.mxu0
    %v2783 = vadd.f32 0.0, %v2782
    %v2784 = vpop.f32.mrf.mxu0
    %v2785 = vadd.f32 0.0, %v2784
    %2786 = vmatprep.mubr.bf16.mxu0 %v2507
    %2787 = vmatmul.mubr.bf16.gmra.mxu0 %v2506
    %v2788 = vpop.f32.mrf.mxu0
    %v2789 = vadd.f32 0.0, %v2788
    %v2790 = vpop.f32.mrf.mxu0
    %v2791 = vadd.f32 0.0, %v2790
    %v2792 = vpop.f32.mrf.mxu0
    %v2793 = vadd.f32 0.0, %v2792
    %v2794 = vpop.f32.mrf.mxu0
    %v2795 = vadd.f32 0.0, %v2794
    %2796 = vdwg.mxu0
    %v2797 = vadd.f32 %v2234, %v2719
    %v2798 = vadd.f32 %v2236, %v2721
    %v2799 = vadd.f32 %v2238, %v2723
    %v2800 = vadd.f32 %v2240, %v2725
    %v2801 = vadd.f32 %v2244, %v2729
    %v2802 = vadd.f32 %v2246, %v2731
    %v2803 = vadd.f32 %v2248, %v2733
    %v2804 = vadd.f32 %v2250, %v2735
    %v2805 = vadd.f32 %v2254, %v2739
    %v2806 = vadd.f32 %v2256, %v2741
    %v2807 = vadd.f32 %v2258, %v2743
    %v2808 = vadd.f32 %v2260, %v2745
    %v2809 = vadd.f32 %v2264, %v2749
    %v2810 = vadd.f32 %v2266, %v2751
    %v2811 = vadd.f32 %v2268, %v2753
    %v2812 = vadd.f32 %v2270, %v2755
    %v2813 = vadd.f32 %v2274, %v2759
    %v2814 = vadd.f32 %v2276, %v2761
    %v2815 = vadd.f32 %v2278, %v2763
    %v2816 = vadd.f32 %v2280, %v2765
    %v2817 = vadd.f32 %v2284, %v2769
    %v2818 = vadd.f32 %v2286, %v2771
    %v2819 = vadd.f32 %v2288, %v2773
    %v2820 = vadd.f32 %v2290, %v2775
    %v2821 = vadd.f32 %v2294, %v2779
    %v2822 = vadd.f32 %v2296, %v2781
    %v2823 = vadd.f32 %v2298, %v2783
    %v2824 = vadd.f32 %v2300, %v2785
    %v2825 = vadd.f32 %v2304, %v2789
    %v2826 = vadd.f32 %v2306, %v2791
    %v2827 = vadd.f32 %v2308, %v2793
    %v2828 = vadd.f32 %v2310, %v2795
    %v2829 = vld [vmem:[%s491] sm:$0xff]
    %v2830 = vld [vmem:[%s491 + $0x10] sm:$0xff]
    %v2831 = vld [vmem:[%s491 + $0x20] sm:$0xff]
    %v2832 = vld [vmem:[%s491 + $0x30] sm:$0xff]
    %v2833 = vld [vmem:[%s491 + $0x40] sm:$0xff]
    %v2834 = vld [vmem:[%s491 + $0x50] sm:$0xff]
    %v2835 = vld [vmem:[%s491 + $0x60] sm:$0xff]
    %v2836 = vld [vmem:[%s491 + $0x70] sm:$0xff]
    %v2837 = vld [vmem:[%s491 + $0xa0] sm:$0xff]
    %v2838 = vld [vmem:[%s491 + $0xb0] sm:$0xff]
    %v2839 = vld [vmem:[%s491 + $0xc0] sm:$0xff]
    %v2840 = vld [vmem:[%s491 + $0xd0] sm:$0xff]
    %v2841 = vld [vmem:[%s491 + $0xe0] sm:$0xff]
    %v2842 = vld [vmem:[%s491 + $0xf0] sm:$0xff]
    %v2843 = vld [vmem:[%s491 + $0x100] sm:$0xff]
    %v2844 = vld [vmem:[%s491 + $0x110] sm:$0xff]
    %s2845 = scalar_lea.vmem [#allocation12], 768
    %v2846 = vld [vmem:[%s2845] sm:$0xff]
    %v2847 = vld [vmem:[%s2845 + $0x8] sm:$0xff]
    %v2848 = vld [vmem:[%s2845 + $0x10] sm:$0xff]
    %v2849 = vld [vmem:[%s2845 + $0x18] sm:$0xff]
    %v2850 = vld [vmem:[%s2845 + $0x20] sm:$0xff]
    %v2851 = vld [vmem:[%s2845 + $0x28] sm:$0xff]
    %v2852 = vld [vmem:[%s2845 + $0x30] sm:$0xff]
    %v2853 = vld [vmem:[%s2845 + $0x38] sm:$0xff]
    %v2854 = vld [vmem:[%s2845 + $0x40] sm:$0xff]
    %v2855 = vld [vmem:[%s2845 + $0x48] sm:$0xff]
    %v2856 = vld [vmem:[%s2845 + $0x50] sm:$0xff]
    %v2857 = vld [vmem:[%s2845 + $0x58] sm:$0xff]
    %v2858 = vld [vmem:[%s2845 + $0x60] sm:$0xff]
    %v2859 = vld [vmem:[%s2845 + $0x68] sm:$0xff]
    %v2860 = vld [vmem:[%s2845 + $0x70] sm:$0xff]
    %v2861 = vld [vmem:[%s2845 + $0x78] sm:$0xff]
    %v2862 = vld [vmem:[%s2845 + $0x80] sm:$0xff]
    %v2863 = vld [vmem:[%s2845 + $0x88] sm:$0xff]
    %v2864 = vld [vmem:[%s2845 + $0x90] sm:$0xff]
    %v2865 = vld [vmem:[%s2845 + $0x98] sm:$0xff]
    %v2866 = vld [vmem:[%s2845 + $0xa0] sm:$0xff]
    %v2867 = vld [vmem:[%s2845 + $0xa8] sm:$0xff]
    %v2868 = vld [vmem:[%s2845 + $0xb0] sm:$0xff]
    %v2869 = vld [vmem:[%s2845 + $0xb8] sm:$0xff]
    %v2870 = vld [vmem:[%s2845 + $0xc0] sm:$0xff]
    %v2871 = vld [vmem:[%s2845 + $0xc8] sm:$0xff]
    %v2872 = vld [vmem:[%s2845 + $0xd0] sm:$0xff]
    %v2873 = vld [vmem:[%s2845 + $0xd8] sm:$0xff]
    %v2874 = vld [vmem:[%s2845 + $0xe0] sm:$0xff]
    %v2875 = vld [vmem:[%s2845 + $0xe8] sm:$0xff]
    %v2876 = vld [vmem:[%s2845 + $0xf0] sm:$0xff]
    %v2877 = vld [vmem:[%s2845 + $0xf8] sm:$0xff]
    %v2894 = vunpack.c.l.b16 %v2829
    %v2895 = vunpack.c.h.b16 %v2829
    %v2896 = vunpack.c.l.b16 %v2830
    %v2897 = vunpack.c.h.b16 %v2830
    %v2898 = vunpack.c.l.b16 %v2831
    %v2899 = vunpack.c.h.b16 %v2831
    %v2900 = vunpack.c.l.b16 %v2832
    %v2901 = vunpack.c.h.b16 %v2832
    %v2902 = vunpack.c.l.b16 %v2833
    %v2903 = vunpack.c.h.b16 %v2833
    %v2904 = vunpack.c.l.b16 %v2834
    %v2905 = vunpack.c.h.b16 %v2834
    %v2906 = vunpack.c.l.b16 %v2835
    %v2907 = vunpack.c.h.b16 %v2835
    %v2908 = vunpack.c.l.b16 %v2836
    %v2909 = vunpack.c.h.b16 %v2836
    %v2910 = vunpack.c.l.b16 %v2837
    %v2911 = vunpack.c.h.b16 %v2837
    %v2912 = vunpack.c.l.b16 %v2838
    %v2913 = vunpack.c.h.b16 %v2838
    %v2914 = vunpack.c.l.b16 %v2839
    %v2915 = vunpack.c.h.b16 %v2839
    %v2916 = vunpack.c.l.b16 %v2840
    %v2917 = vunpack.c.h.b16 %v2840
    %v2918 = vunpack.c.l.b16 %v2841
    %v2919 = vunpack.c.h.b16 %v2841
    %v2920 = vunpack.c.l.b16 %v2842
    %v2921 = vunpack.c.h.b16 %v2842
    %v2922 = vunpack.c.l.b16 %v2843
    %v2923 = vunpack.c.h.b16 %v2843
    %v2924 = vunpack.c.l.b16 %v2844
    %v2925 = vunpack.c.h.b16 %v2844
    %v2926 = vpack.c.b16 %v2896, %v2894
    %v2927 = vpack.c.b16 %v2897, %v2895
    %v2928 = vpack.c.b16 %v2900, %v2898
    %v2929 = vpack.c.b16 %v2901, %v2899
    %v2930 = vpack.c.b16 %v2904, %v2902
    %v2931 = vpack.c.b16 %v2905, %v2903
    %v2932 = vpack.c.b16 %v2908, %v2906
    %v2933 = vpack.c.b16 %v2909, %v2907
    %v2934 = vpack.c.b16 %v2912, %v2910
    %v2935 = vpack.c.b16 %v2913, %v2911
    %v2936 = vpack.c.b16 %v2916, %v2914
    %v2937 = vpack.c.b16 %v2917, %v2915
    %v2938 = vpack.c.b16 %v2920, %v2918
    %v2939 = vpack.c.b16 %v2921, %v2919
    %v2940 = vpack.c.b16 %v2924, %v2922
    %v2941 = vpack.c.b16 %v2925, %v2923
    %v2990 = vunpack.c.l.b16 %v2846
    %v2991 = vunpack.c.h.b16 %v2846
    %v2992 = vunpack.c.l.b16 %v2847
    %v2993 = vunpack.c.h.b16 %v2847
    %v2994 = vunpack.c.l.b16 %v2848
    %v2995 = vunpack.c.h.b16 %v2848
    %v2996 = vunpack.c.l.b16 %v2849
    %v2997 = vunpack.c.h.b16 %v2849
    %v2998 = vunpack.c.l.b16 %v2850
    %v2999 = vunpack.c.h.b16 %v2850
    %v3000 = vunpack.c.l.b16 %v2851
    %v3001 = vunpack.c.h.b16 %v2851
    %v3002 = vunpack.c.l.b16 %v2852
    %v3003 = vunpack.c.h.b16 %v2852
    %v3004 = vunpack.c.l.b16 %v2853
    %v3005 = vunpack.c.h.b16 %v2853
    %v3006 = vunpack.c.l.b16 %v2854
    %v3007 = vunpack.c.h.b16 %v2854
    %v3008 = vunpack.c.l.b16 %v2855
    %v3009 = vunpack.c.h.b16 %v2855
    %v3010 = vunpack.c.l.b16 %v2856
    %v3011 = vunpack.c.h.b16 %v2856
    %v3012 = vunpack.c.l.b16 %v2857
    %v3013 = vunpack.c.h.b16 %v2857
    %v3014 = vunpack.c.l.b16 %v2858
    %v3015 = vunpack.c.h.b16 %v2858
    %v3016 = vunpack.c.l.b16 %v2859
    %v3017 = vunpack.c.h.b16 %v2859
    %v3018 = vunpack.c.l.b16 %v2860
    %v3019 = vunpack.c.h.b16 %v2860
    %v3020 = vunpack.c.l.b16 %v2861
    %v3021 = vunpack.c.h.b16 %v2861
    %v3022 = vunpack.c.l.b16 %v2862
    %v3023 = vunpack.c.h.b16 %v2862
    %v3024 = vunpack.c.l.b16 %v2863
    %v3025 = vunpack.c.h.b16 %v2863
    %v3026 = vunpack.c.l.b16 %v2864
    %v3027 = vunpack.c.h.b16 %v2864
    %v3028 = vunpack.c.l.b16 %v2865
    %v3029 = vunpack.c.h.b16 %v2865
    %v3030 = vunpack.c.l.b16 %v2866
    %v3031 = vunpack.c.h.b16 %v2866
    %v3032 = vunpack.c.l.b16 %v2867
    %v3033 = vunpack.c.h.b16 %v2867
    %v3034 = vunpack.c.l.b16 %v2868
    %v3035 = vunpack.c.h.b16 %v2868
    %v3036 = vunpack.c.l.b16 %v2869
    %v3037 = vunpack.c.h.b16 %v2869
    %v3038 = vunpack.c.l.b16 %v2870
    %v3039 = vunpack.c.h.b16 %v2870
    %v3040 = vunpack.c.l.b16 %v2871
    %v3041 = vunpack.c.h.b16 %v2871
    %v3042 = vunpack.c.l.b16 %v2872
    %v3043 = vunpack.c.h.b16 %v2872
    %v3044 = vunpack.c.l.b16 %v2873
    %v3045 = vunpack.c.h.b16 %v2873
    %v3046 = vunpack.c.l.b16 %v2874
    %v3047 = vunpack.c.h.b16 %v2874
    %v3048 = vunpack.c.l.b16 %v2875
    %v3049 = vunpack.c.h.b16 %v2875
    %v3050 = vunpack.c.l.b16 %v2876
    %v3051 = vunpack.c.h.b16 %v2876
    %v3052 = vunpack.c.l.b16 %v2877
    %v3053 = vunpack.c.h.b16 %v2877
    %v3054 = vpack.c.b16 %v2992, %v2990
    %v3055 = vpack.c.b16 %v2993, %v2991
    %v3056 = vpack.c.b16 %v2996, %v2994
    %v3057 = vpack.c.b16 %v2997, %v2995
    %v3058 = vpack.c.b16 %v3000, %v2998
    %v3059 = vpack.c.b16 %v3001, %v2999
    %v3060 = vpack.c.b16 %v3004, %v3002
    %v3061 = vpack.c.b16 %v3005, %v3003
    %v3062 = vpack.c.b16 %v3008, %v3006
    %v3063 = vpack.c.b16 %v3009, %v3007
    %v3064 = vpack.c.b16 %v3012, %v3010
    %v3065 = vpack.c.b16 %v3013, %v3011
    %v3066 = vpack.c.b16 %v3016, %v3014
    %v3067 = vpack.c.b16 %v3017, %v3015
    %v3068 = vpack.c.b16 %v3020, %v3018
    %v3069 = vpack.c.b16 %v3021, %v3019
    %v3070 = vpack.c.b16 %v3024, %v3022
    %v3071 = vpack.c.b16 %v3025, %v3023
    %v3072 = vpack.c.b16 %v3028, %v3026
    %v3073 = vpack.c.b16 %v3029, %v3027
    %v3074 = vpack.c.b16 %v3032, %v3030
    %v3075 = vpack.c.b16 %v3033, %v3031
    %v3076 = vpack.c.b16 %v3036, %v3034
    %v3077 = vpack.c.b16 %v3037, %v3035
    %v3078 = vpack.c.b16 %v3040, %v3038
    %v3079 = vpack.c.b16 %v3041, %v3039
    %v3080 = vpack.c.b16 %v3044, %v3042
    %v3081 = vpack.c.b16 %v3045, %v3043
    %v3082 = vpack.c.b16 %v3048, %v3046
    %v3083 = vpack.c.b16 %v3049, %v3047
    %v3084 = vpack.c.b16 %v3052, %v3050
    %v3085 = vpack.c.b16 %v3053, %v3051
    %3118 = vmatprep.subr.bf16.mxu0 %v3069
    %3119 = vmatpush1.bf16.msra.mxu0 %v3068
    %3120 = vmatprep.subr.bf16.mxu0 %v3067
    %3121 = vmatpush1.bf16.msra.mxu0 %v3066
    %3122 = vmatprep.subr.bf16.mxu0 %v3065
    %3123 = vmatpush1.bf16.msra.mxu0 %v3064
    %3124 = vmatprep.subr.bf16.mxu0 %v3063
    %3125 = vmatpush1.bf16.msra.mxu0 %v3062
    %3126 = vmatprep.subr.bf16.mxu0 %v3061
    %3127 = vmatpush1.bf16.msra.mxu0 %v3060
    %3128 = vmatprep.subr.bf16.mxu0 %v3059
    %3129 = vmatpush1.bf16.msra.mxu0 %v3058
    %3130 = vmatprep.subr.bf16.mxu0 %v3057
    %3131 = vmatpush1.bf16.msra.mxu0 %v3056
    %3132 = vmatprep.subr.bf16.mxu0 %v3055
    %3133 = vmatpush1.bf16.msra.mxu0 %v3054
    %3134 = vmatprep.subr.bf16.mxu0 %v3085
    %3135 = vmatpush2.bf16.msra.mxu0 %v3084
    %3136 = vmatprep.subr.bf16.mxu0 %v3083
    %3137 = vmatpush2.bf16.msra.mxu0 %v3082
    %3138 = vmatprep.subr.bf16.mxu0 %v3081
    %3139 = vmatpush2.bf16.msra.mxu0 %v3080
    %3140 = vmatprep.subr.bf16.mxu0 %v3079
    %3141 = vmatpush2.bf16.msra.mxu0 %v3078
    %3142 = vmatprep.subr.bf16.mxu0 %v3077
    %3143 = vmatpush2.bf16.msra.mxu0 %v3076
    %3144 = vmatprep.subr.bf16.mxu0 %v3075
    %3145 = vmatpush2.bf16.msra.mxu0 %v3074
    %3146 = vmatprep.subr.bf16.mxu0 %v3073
    %3147 = vmatpush2.bf16.msra.mxu0 %v3072
    %3148 = vmatprep.subr.bf16.mxu0 %v3071
    %3149 = vmatpush2.bf16.msra.mxu0 %v3070
    %3150 = vmatprep.mubr.bf16.mxu0 %v2927
    %3151 = vmatmul.mubr.bf16.gmra.mxu0 %v2926
    %v3152 = vpop.f32.mrf.mxu0
    %v3153 = vadd.f32 0.0, %v3152
    %v3154 = vpop.f32.mrf.mxu0
    %v3155 = vadd.f32 0.0, %v3154
    %v3156 = vpop.f32.mrf.mxu0
    %v3157 = vadd.f32 0.0, %v3156
    %v3158 = vpop.f32.mrf.mxu0
    %v3159 = vadd.f32 0.0, %v3158
    %3160 = vmatprep.mubr.bf16.mxu0 %v2929
    %3161 = vmatmul.mubr.bf16.gmra.mxu0 %v2928
    %v3162 = vpop.f32.mrf.mxu0
    %v3163 = vadd.f32 0.0, %v3162
    %v3164 = vpop.f32.mrf.mxu0
    %v3165 = vadd.f32 0.0, %v3164
    %v3166 = vpop.f32.mrf.mxu0
    %v3167 = vadd.f32 0.0, %v3166
    %v3168 = vpop.f32.mrf.mxu0
    %v3169 = vadd.f32 0.0, %v3168
    %3170 = vmatprep.mubr.bf16.mxu0 %v2931
    %3171 = vmatmul.mubr.bf16.gmra.mxu0 %v2930
    %v3172 = vpop.f32.mrf.mxu0
    %v3173 = vadd.f32 0.0, %v3172
    %v3174 = vpop.f32.mrf.mxu0
    %v3175 = vadd.f32 0.0, %v3174
    %v3176 = vpop.f32.mrf.mxu0
    %v3177 = vadd.f32 0.0, %v3176
    %v3178 = vpop.f32.mrf.mxu0
    %v3179 = vadd.f32 0.0, %v3178
    %3180 = vmatprep.mubr.bf16.mxu0 %v2933
    %3181 = vmatmul.mubr.bf16.gmra.mxu0 %v2932
    %v3182 = vpop.f32.mrf.mxu0
    %v3183 = vadd.f32 0.0, %v3182
    %v3184 = vpop.f32.mrf.mxu0
    %v3185 = vadd.f32 0.0, %v3184
    %v3186 = vpop.f32.mrf.mxu0
    %v3187 = vadd.f32 0.0, %v3186
    %v3188 = vpop.f32.mrf.mxu0
    %v3189 = vadd.f32 0.0, %v3188
    %3190 = vmatprep.mubr.bf16.mxu0 %v2935
    %3191 = vmatmul.mubr.bf16.gmra.mxu0 %v2934
    %v3192 = vpop.f32.mrf.mxu0
    %v3193 = vadd.f32 0.0, %v3192
    %v3194 = vpop.f32.mrf.mxu0
    %v3195 = vadd.f32 0.0, %v3194
    %v3196 = vpop.f32.mrf.mxu0
    %v3197 = vadd.f32 0.0, %v3196
    %v3198 = vpop.f32.mrf.mxu0
    %v3199 = vadd.f32 0.0, %v3198
    %3200 = vmatprep.mubr.bf16.mxu0 %v2937
    %3201 = vmatmul.mubr.bf16.gmra.mxu0 %v2936
    %v3202 = vpop.f32.mrf.mxu0
    %v3203 = vadd.f32 0.0, %v3202
    %v3204 = vpop.f32.mrf.mxu0
    %v3205 = vadd.f32 0.0, %v3204
    %v3206 = vpop.f32.mrf.mxu0
    %v3207 = vadd.f32 0.0, %v3206
    %v3208 = vpop.f32.mrf.mxu0
    %v3209 = vadd.f32 0.0, %v3208
    %3210 = vmatprep.mubr.bf16.mxu0 %v2939
    %3211 = vmatmul.mubr.bf16.gmra.mxu0 %v2938
    %v3212 = vpop.f32.mrf.mxu0
    %v3213 = vadd.f32 0.0, %v3212
    %v3214 = vpop.f32.mrf.mxu0
    %v3215 = vadd.f32 0.0, %v3214
    %v3216 = vpop.f32.mrf.mxu0
    %v3217 = vadd.f32 0.0, %v3216
    %v3218 = vpop.f32.mrf.mxu0
    %v3219 = vadd.f32 0.0, %v3218
    %3220 = vmatprep.mubr.bf16.mxu0 %v2941
    %3221 = vmatmul.mubr.bf16.gmra.mxu0 %v2940
    %v3222 = vpop.f32.mrf.mxu0
    %v3223 = vadd.f32 0.0, %v3222
    %v3224 = vpop.f32.mrf.mxu0
    %v3225 = vadd.f32 0.0, %v3224
    %v3226 = vpop.f32.mrf.mxu0
    %v3227 = vadd.f32 0.0, %v3226
    %v3228 = vpop.f32.mrf.mxu0
    %v3229 = vadd.f32 0.0, %v3228
    %3230 = vdwg.mxu0
    %v3231 = vadd.f32 %v2797, %v3153
    %v3232 = vadd.f32 %v2798, %v3155
    %v3233 = vadd.f32 %v2799, %v3157
    %v3234 = vadd.f32 %v2800, %v3159
    %v3235 = vadd.f32 %v2801, %v3163
    %v3236 = vadd.f32 %v2802, %v3165
    %v3237 = vadd.f32 %v2803, %v3167
    %v3238 = vadd.f32 %v2804, %v3169
    %v3239 = vadd.f32 %v2805, %v3173
    %v3240 = vadd.f32 %v2806, %v3175
    %v3241 = vadd.f32 %v2807, %v3177
    %v3242 = vadd.f32 %v2808, %v3179
    %v3243 = vadd.f32 %v2809, %v3183
    %v3244 = vadd.f32 %v2810, %v3185
    %v3245 = vadd.f32 %v2811, %v3187
    %v3246 = vadd.f32 %v2812, %v3189
    %v3247 = vadd.f32 %v2813, %v3193
    %v3248 = vadd.f32 %v2814, %v3195
    %v3249 = vadd.f32 %v2815, %v3197
    %v3250 = vadd.f32 %v2816, %v3199
    %v3251 = vadd.f32 %v2817, %v3203
    %v3252 = vadd.f32 %v2818, %v3205
    %v3253 = vadd.f32 %v2819, %v3207
    %v3254 = vadd.f32 %v2820, %v3209
    %v3255 = vadd.f32 %v2821, %v3213
    %v3256 = vadd.f32 %v2822, %v3215
    %v3257 = vadd.f32 %v2823, %v3217
    %v3258 = vadd.f32 %v2824, %v3219
    %v3259 = vadd.f32 %v2825, %v3223
    %v3260 = vadd.f32 %v2826, %v3225
    %v3261 = vadd.f32 %v2827, %v3227
    %v3262 = vadd.f32 %v2828, %v3229
    %v3263 = vld [vmem:[%s491] sm:$0xff]
    %v3264 = vld [vmem:[%s491 + $0x8] sm:$0x11]
    %v3265 = vld [vmem:[%s491 + $0x10] sm:$0xff]
    %v3266 = vld [vmem:[%s491 + $0x18] sm:$0x11]
    %v3267 = vld [vmem:[%s491 + $0x20] sm:$0xff]
    %v3268 = vld [vmem:[%s491 + $0x28] sm:$0x11]
    %v3269 = vld [vmem:[%s491 + $0x30] sm:$0xff]
    %v3270 = vld [vmem:[%s491 + $0x38] sm:$0x11]
    %v3271 = vld [vmem:[%s491 + $0x40] sm:$0xff]
    %v3272 = vld [vmem:[%s491 + $0x48] sm:$0x11]
    %v3273 = vld [vmem:[%s491 + $0x50] sm:$0xff]
    %v3274 = vld [vmem:[%s491 + $0x58] sm:$0x11]
    %v3275 = vld [vmem:[%s491 + $0x60] sm:$0xff]
    %v3276 = vld [vmem:[%s491 + $0x68] sm:$0x11]
    %v3277 = vld [vmem:[%s491 + $0x70] sm:$0xff]
    %v3278 = vld [vmem:[%s491 + $0x78] sm:$0x11]
    %v3279 = vld [vmem:[%s491 + $0xa0] sm:$0xff]
    %v3280 = vld [vmem:[%s491 + $0xa8] sm:$0x11]
    %v3281 = vld [vmem:[%s491 + $0xb0] sm:$0xff]
    %v3282 = vld [vmem:[%s491 + $0xb8] sm:$0x11]
    %v3283 = vld [vmem:[%s491 + $0xc0] sm:$0xff]
    %v3284 = vld [vmem:[%s491 + $0xc8] sm:$0x11]
    %v3285 = vld [vmem:[%s491 + $0xd0] sm:$0xff]
    %v3286 = vld [vmem:[%s491 + $0xd8] sm:$0x11]
    %v3287 = vld [vmem:[%s491 + $0xe0] sm:$0xff]
    %v3288 = vld [vmem:[%s491 + $0xe8] sm:$0x11]
    %v3289 = vld [vmem:[%s491 + $0xf0] sm:$0xff]
    %v3290 = vld [vmem:[%s491 + $0xf8] sm:$0x11]
    %v3291 = vld [vmem:[%s491 + $0x100] sm:$0xff]
    %v3292 = vld [vmem:[%s491 + $0x108] sm:$0x11]
    %v3293 = vld [vmem:[%s491 + $0x110] sm:$0xff]
    %v3294 = vld [vmem:[%s491 + $0x118] sm:$0x11]
    %v3296 = vshrl.u32 %v3263, 16
    %v3298 = vrot.slane %v3296, 4
    %v3299 = vshll.u32 %v3263, 16
    %v3301 = vrot.slane %v3299, 5
    %v3302 = vor.u32 %v3298, %v3301
    %v3303 = vrot.slane %v3302, 4
    %v3305 = vshll.u32 %v3264, 16
    %v3307 = vrot.slane %v3305, 5
    %v3308 = vsel %vm1364, %v3303, %v3307
    %v3310 = vshrl.u32 %v3265, 16
    %v3312 = vrot.slane %v3310, 4
    %v3313 = vshll.u32 %v3265, 16
    %v3315 = vrot.slane %v3313, 5
    %v3316 = vor.u32 %v3312, %v3315
    %v3317 = vrot.slane %v3316, 4
    %v3319 = vshll.u32 %v3266, 16
    %v3321 = vrot.slane %v3319, 5
    %v3322 = vsel %vm1364, %v3317, %v3321
    %v3324 = vshrl.u32 %v3267, 16
    %v3326 = vrot.slane %v3324, 4
    %v3327 = vshll.u32 %v3267, 16
    %v3329 = vrot.slane %v3327, 5
    %v3330 = vor.u32 %v3326, %v3329
    %v3331 = vrot.slane %v3330, 4
    %v3333 = vshll.u32 %v3268, 16
    %v3335 = vrot.slane %v3333, 5
    %v3336 = vsel %vm1364, %v3331, %v3335
    %v3338 = vshrl.u32 %v3269, 16
    %v3340 = vrot.slane %v3338, 4
    %v3341 = vshll.u32 %v3269, 16
    %v3343 = vrot.slane %v3341, 5
    %v3344 = vor.u32 %v3340, %v3343
    %v3345 = vrot.slane %v3344, 4
    %v3347 = vshll.u32 %v3270, 16
    %v3349 = vrot.slane %v3347, 5
    %v3350 = vsel %vm1364, %v3345, %v3349
    %v3352 = vshrl.u32 %v3271, 16
    %v3354 = vrot.slane %v3352, 4
    %v3355 = vshll.u32 %v3271, 16
    %v3357 = vrot.slane %v3355, 5
    %v3358 = vor.u32 %v3354, %v3357
    %v3359 = vrot.slane %v3358, 4
    %v3361 = vshll.u32 %v3272, 16
    %v3363 = vrot.slane %v3361, 5
    %v3364 = vsel %vm1364, %v3359, %v3363
    %v3366 = vshrl.u32 %v3273, 16
    %v3368 = vrot.slane %v3366, 4
    %v3369 = vshll.u32 %v3273, 16
    %v3371 = vrot.slane %v3369, 5
    %v3372 = vor.u32 %v3368, %v3371
    %v3373 = vrot.slane %v3372, 4
    %v3375 = vshll.u32 %v3274, 16
    %v3377 = vrot.slane %v3375, 5
    %v3378 = vsel %vm1364, %v3373, %v3377
    %v3380 = vshrl.u32 %v3275, 16
    %v3382 = vrot.slane %v3380, 4
    %v3383 = vshll.u32 %v3275, 16
    %v3385 = vrot.slane %v3383, 5
    %v3386 = vor.u32 %v3382, %v3385
    %v3387 = vrot.slane %v3386, 4
    %v3389 = vshll.u32 %v3276, 16
    %v3391 = vrot.slane %v3389, 5
    %v3392 = vsel %vm1364, %v3387, %v3391
    %v3394 = vshrl.u32 %v3277, 16
    %v3396 = vrot.slane %v3394, 4
    %v3397 = vshll.u32 %v3277, 16
    %v3399 = vrot.slane %v3397, 5
    %v3400 = vor.u32 %v3396, %v3399
    %v3401 = vrot.slane %v3400, 4
    %v3403 = vshll.u32 %v3278, 16
    %v3405 = vrot.slane %v3403, 5
    %v3406 = vsel %vm1364, %v3401, %v3405
    %v3408 = vshrl.u32 %v3279, 16
    %v3410 = vrot.slane %v3408, 4
    %v3411 = vshll.u32 %v3279, 16
    %v3413 = vrot.slane %v3411, 5
    %v3414 = vor.u32 %v3410, %v3413
    %v3415 = vrot.slane %v3414, 4
    %v3417 = vshll.u32 %v3280, 16
    %v3419 = vrot.slane %v3417, 5
    %v3420 = vsel %vm1364, %v3415, %v3419
    %v3422 = vshrl.u32 %v3281, 16
    %v3424 = vrot.slane %v3422, 4
    %v3425 = vshll.u32 %v3281, 16
    %v3427 = vrot.slane %v3425, 5
    %v3428 = vor.u32 %v3424, %v3427
    %v3429 = vrot.slane %v3428, 4
    %v3431 = vshll.u32 %v3282, 16
    %v3433 = vrot.slane %v3431, 5
    %v3434 = vsel %vm1364, %v3429, %v3433
    %v3436 = vshrl.u32 %v3283, 16
    %v3438 = vrot.slane %v3436, 4
    %v3439 = vshll.u32 %v3283, 16
    %v3441 = vrot.slane %v3439, 5
    %v3442 = vor.u32 %v3438, %v3441
    %v3443 = vrot.slane %v3442, 4
    %v3445 = vshll.u32 %v3284, 16
    %v3447 = vrot.slane %v3445, 5
    %v3448 = vsel %vm1364, %v3443, %v3447
    %v3450 = vshrl.u32 %v3285, 16
    %v3452 = vrot.slane %v3450, 4
    %v3453 = vshll.u32 %v3285, 16
    %v3455 = vrot.slane %v3453, 5
    %v3456 = vor.u32 %v3452, %v3455
    %v3457 = vrot.slane %v3456, 4
    %v3459 = vshll.u32 %v3286, 16
    %v3461 = vrot.slane %v3459, 5
    %v3462 = vsel %vm1364, %v3457, %v3461
    %v3464 = vshrl.u32 %v3287, 16
    %v3466 = vrot.slane %v3464, 4
    %v3467 = vshll.u32 %v3287, 16
    %v3469 = vrot.slane %v3467, 5
    %v3470 = vor.u32 %v3466, %v3469
    %v3471 = vrot.slane %v3470, 4
    %v3473 = vshll.u32 %v3288, 16
    %v3475 = vrot.slane %v3473, 5
    %v3476 = vsel %vm1364, %v3471, %v3475
    %v3478 = vshrl.u32 %v3289, 16
    %v3480 = vrot.slane %v3478, 4
    %v3481 = vshll.u32 %v3289, 16
    %v3483 = vrot.slane %v3481, 5
    %v3484 = vor.u32 %v3480, %v3483
    %v3485 = vrot.slane %v3484, 4
    %v3487 = vshll.u32 %v3290, 16
    %v3489 = vrot.slane %v3487, 5
    %v3490 = vsel %vm1364, %v3485, %v3489
    %v3492 = vshrl.u32 %v3291, 16
    %v3494 = vrot.slane %v3492, 4
    %v3495 = vshll.u32 %v3291, 16
    %v3497 = vrot.slane %v3495, 5
    %v3498 = vor.u32 %v3494, %v3497
    %v3499 = vrot.slane %v3498, 4
    %v3501 = vshll.u32 %v3292, 16
    %v3503 = vrot.slane %v3501, 5
    %v3504 = vsel %vm1364, %v3499, %v3503
    %v3506 = vshrl.u32 %v3293, 16
    %v3508 = vrot.slane %v3506, 4
    %v3509 = vshll.u32 %v3293, 16
    %v3511 = vrot.slane %v3509, 5
    %v3512 = vor.u32 %v3508, %v3511
    %v3513 = vrot.slane %v3512, 4
    %v3515 = vshll.u32 %v3294, 16
    %v3517 = vrot.slane %v3515, 5
    %v3518 = vsel %vm1364, %v3513, %v3517
    %s3519 = scalar_lea.vmem [#allocation12], 1024
    %v3520 = vld [vmem:[%s3519] sm:$0xff]
    %v3521 = vld [vmem:[%s3519 + $0x8] sm:$0xff]
    %v3522 = vld [vmem:[%s3519 + $0x10] sm:$0xff]
    %v3523 = vld [vmem:[%s3519 + $0x18] sm:$0xff]
    %v3524 = vld [vmem:[%s3519 + $0x20] sm:$0xff]
    %v3525 = vld [vmem:[%s3519 + $0x28] sm:$0xff]
    %v3526 = vld [vmem:[%s3519 + $0x30] sm:$0xff]
    %v3527 = vld [vmem:[%s3519 + $0x38] sm:$0xff]
    %v3528 = vld [vmem:[%s3519 + $0x40] sm:$0xff]
    %v3529 = vld [vmem:[%s3519 + $0x48] sm:$0xff]
    %v3530 = vld [vmem:[%s3519 + $0x50] sm:$0xff]
    %v3531 = vld [vmem:[%s3519 + $0x58] sm:$0xff]
    %v3532 = vld [vmem:[%s3519 + $0x60] sm:$0xff]
    %v3533 = vld [vmem:[%s3519 + $0x68] sm:$0xff]
    %v3534 = vld [vmem:[%s3519 + $0x70] sm:$0xff]
    %v3535 = vld [vmem:[%s3519 + $0x78] sm:$0xff]
    %v3536 = vld [vmem:[%s3519 + $0x80] sm:$0xff]
    %v3537 = vld [vmem:[%s3519 + $0x88] sm:$0xff]
    %v3538 = vld [vmem:[%s3519 + $0x90] sm:$0xff]
    %v3539 = vld [vmem:[%s3519 + $0x98] sm:$0xff]
    %v3540 = vld [vmem:[%s3519 + $0xa0] sm:$0xff]
    %v3541 = vld [vmem:[%s3519 + $0xa8] sm:$0xff]
    %v3542 = vld [vmem:[%s3519 + $0xb0] sm:$0xff]
    %v3543 = vld [vmem:[%s3519 + $0xb8] sm:$0xff]
    %v3544 = vld [vmem:[%s3519 + $0xc0] sm:$0xff]
    %v3545 = vld [vmem:[%s3519 + $0xc8] sm:$0xff]
    %v3546 = vld [vmem:[%s3519 + $0xd0] sm:$0xff]
    %v3547 = vld [vmem:[%s3519 + $0xd8] sm:$0xff]
    %v3548 = vld [vmem:[%s3519 + $0xe0] sm:$0xff]
    %v3549 = vld [vmem:[%s3519 + $0xe8] sm:$0xff]
    %v3550 = vld [vmem:[%s3519 + $0xf0] sm:$0xff]
    %v3551 = vld [vmem:[%s3519 + $0xf8] sm:$0xff]
    %v3552 = vunpack.c.l.b16 %v3308
    %v3553 = vunpack.c.h.b16 %v3308
    %v3554 = vunpack.c.l.b16 %v3322
    %v3555 = vunpack.c.h.b16 %v3322
    %v3556 = vunpack.c.l.b16 %v3336
    %v3557 = vunpack.c.h.b16 %v3336
    %v3558 = vunpack.c.l.b16 %v3350
    %v3559 = vunpack.c.h.b16 %v3350
    %v3560 = vunpack.c.l.b16 %v3364
    %v3561 = vunpack.c.h.b16 %v3364
    %v3562 = vunpack.c.l.b16 %v3378
    %v3563 = vunpack.c.h.b16 %v3378
    %v3564 = vunpack.c.l.b16 %v3392
    %v3565 = vunpack.c.h.b16 %v3392
    %v3566 = vunpack.c.l.b16 %v3406
    %v3567 = vunpack.c.h.b16 %v3406
    %v3568 = vunpack.c.l.b16 %v3420
    %v3569 = vunpack.c.h.b16 %v3420
    %v3570 = vunpack.c.l.b16 %v3434
    %v3571 = vunpack.c.h.b16 %v3434
    %v3572 = vunpack.c.l.b16 %v3448
    %v3573 = vunpack.c.h.b16 %v3448
    %v3574 = vunpack.c.l.b16 %v3462
    %v3575 = vunpack.c.h.b16 %v3462
    %v3576 = vunpack.c.l.b16 %v3476
    %v3577 = vunpack.c.h.b16 %v3476
    %v3578 = vunpack.c.l.b16 %v3490
    %v3579 = vunpack.c.h.b16 %v3490
    %v3580 = vunpack.c.l.b16 %v3504
    %v3581 = vunpack.c.h.b16 %v3504
    %v3582 = vunpack.c.l.b16 %v3518
    %v3583 = vunpack.c.h.b16 %v3518
    %v3584 = vpack.c.b16 %v3554, %v3552
    %v3585 = vpack.c.b16 %v3555, %v3553
    %v3586 = vpack.c.b16 %v3558, %v3556
    %v3587 = vpack.c.b16 %v3559, %v3557
    %v3588 = vpack.c.b16 %v3562, %v3560
    %v3589 = vpack.c.b16 %v3563, %v3561
    %v3590 = vpack.c.b16 %v3566, %v3564
    %v3591 = vpack.c.b16 %v3567, %v3565
    %v3592 = vpack.c.b16 %v3570, %v3568
    %v3593 = vpack.c.b16 %v3571, %v3569
    %v3594 = vpack.c.b16 %v3574, %v3572
    %v3595 = vpack.c.b16 %v3575, %v3573
    %v3596 = vpack.c.b16 %v3578, %v3576
    %v3597 = vpack.c.b16 %v3579, %v3577
    %v3598 = vpack.c.b16 %v3582, %v3580
    %v3599 = vpack.c.b16 %v3583, %v3581
    %v3648 = vunpack.c.l.b16 %v3520
    %v3649 = vunpack.c.h.b16 %v3520
    %v3650 = vunpack.c.l.b16 %v3521
    %v3651 = vunpack.c.h.b16 %v3521
    %v3652 = vunpack.c.l.b16 %v3522
    %v3653 = vunpack.c.h.b16 %v3522
    %v3654 = vunpack.c.l.b16 %v3523
    %v3655 = vunpack.c.h.b16 %v3523
    %v3656 = vunpack.c.l.b16 %v3524
    %v3657 = vunpack.c.h.b16 %v3524
    %v3658 = vunpack.c.l.b16 %v3525
    %v3659 = vunpack.c.h.b16 %v3525
    %v3660 = vunpack.c.l.b16 %v3526
    %v3661 = vunpack.c.h.b16 %v3526
    %v3662 = vunpack.c.l.b16 %v3527
    %v3663 = vunpack.c.h.b16 %v3527
    %v3664 = vunpack.c.l.b16 %v3528
    %v3665 = vunpack.c.h.b16 %v3528
    %v3666 = vunpack.c.l.b16 %v3529
    %v3667 = vunpack.c.h.b16 %v3529
    %v3668 = vunpack.c.l.b16 %v3530
    %v3669 = vunpack.c.h.b16 %v3530
    %v3670 = vunpack.c.l.b16 %v3531
    %v3671 = vunpack.c.h.b16 %v3531
    %v3672 = vunpack.c.l.b16 %v3532
    %v3673 = vunpack.c.h.b16 %v3532
    %v3674 = vunpack.c.l.b16 %v3533
    %v3675 = vunpack.c.h.b16 %v3533
    %v3676 = vunpack.c.l.b16 %v3534
    %v3677 = vunpack.c.h.b16 %v3534
    %v3678 = vunpack.c.l.b16 %v3535
    %v3679 = vunpack.c.h.b16 %v3535
    %v3680 = vunpack.c.l.b16 %v3536
    %v3681 = vunpack.c.h.b16 %v3536
    %v3682 = vunpack.c.l.b16 %v3537
    %v3683 = vunpack.c.h.b16 %v3537
    %v3684 = vunpack.c.l.b16 %v3538
    %v3685 = vunpack.c.h.b16 %v3538
    %v3686 = vunpack.c.l.b16 %v3539
    %v3687 = vunpack.c.h.b16 %v3539
    %v3688 = vunpack.c.l.b16 %v3540
    %v3689 = vunpack.c.h.b16 %v3540
    %v3690 = vunpack.c.l.b16 %v3541
    %v3691 = vunpack.c.h.b16 %v3541
    %v3692 = vunpack.c.l.b16 %v3542
    %v3693 = vunpack.c.h.b16 %v3542
    %v3694 = vunpack.c.l.b16 %v3543
    %v3695 = vunpack.c.h.b16 %v3543
    %v3696 = vunpack.c.l.b16 %v3544
    %v3697 = vunpack.c.h.b16 %v3544
    %v3698 = vunpack.c.l.b16 %v3545
    %v3699 = vunpack.c.h.b16 %v3545
    %v3700 = vunpack.c.l.b16 %v3546
    %v3701 = vunpack.c.h.b16 %v3546
    %v3702 = vunpack.c.l.b16 %v3547
    %v3703 = vunpack.c.h.b16 %v3547
    %v3704 = vunpack.c.l.b16 %v3548
    %v3705 = vunpack.c.h.b16 %v3548
    %v3706 = vunpack.c.l.b16 %v3549
    %v3707 = vunpack.c.h.b16 %v3549
    %v3708 = vunpack.c.l.b16 %v3550
    %v3709 = vunpack.c.h.b16 %v3550
    %v3710 = vunpack.c.l.b16 %v3551
    %v3711 = vunpack.c.h.b16 %v3551
    %v3712 = vpack.c.b16 %v3650, %v3648
    %v3713 = vpack.c.b16 %v3651, %v3649
    %v3714 = vpack.c.b16 %v3654, %v3652
    %v3715 = vpack.c.b16 %v3655, %v3653
    %v3716 = vpack.c.b16 %v3658, %v3656
    %v3717 = vpack.c.b16 %v3659, %v3657
    %v3718 = vpack.c.b16 %v3662, %v3660
    %v3719 = vpack.c.b16 %v3663, %v3661
    %v3720 = vpack.c.b16 %v3666, %v3664
    %v3721 = vpack.c.b16 %v3667, %v3665
    %v3722 = vpack.c.b16 %v3670, %v3668
    %v3723 = vpack.c.b16 %v3671, %v3669
    %v3724 = vpack.c.b16 %v3674, %v3672
    %v3725 = vpack.c.b16 %v3675, %v3673
    %v3726 = vpack.c.b16 %v3678, %v3676
    %v3727 = vpack.c.b16 %v3679, %v3677
    %v3728 = vpack.c.b16 %v3682, %v3680
    %v3729 = vpack.c.b16 %v3683, %v3681
    %v3730 = vpack.c.b16 %v3686, %v3684
    %v3731 = vpack.c.b16 %v3687, %v3685
    %v3732 = vpack.c.b16 %v3690, %v3688
    %v3733 = vpack.c.b16 %v3691, %v3689
    %v3734 = vpack.c.b16 %v3694, %v3692
    %v3735 = vpack.c.b16 %v3695, %v3693
    %v3736 = vpack.c.b16 %v3698, %v3696
    %v3737 = vpack.c.b16 %v3699, %v3697
    %v3738 = vpack.c.b16 %v3702, %v3700
    %v3739 = vpack.c.b16 %v3703, %v3701
    %v3740 = vpack.c.b16 %v3706, %v3704
    %v3741 = vpack.c.b16 %v3707, %v3705
    %v3742 = vpack.c.b16 %v3710, %v3708
    %v3743 = vpack.c.b16 %v3711, %v3709
    %3776 = vmatprep.subr.bf16.mxu0 %v3727
    %3777 = vmatpush1.bf16.msra.mxu0 %v3726
    %3778 = vmatprep.subr.bf16.mxu0 %v3725
    %3779 = vmatpush1.bf16.msra.mxu0 %v3724
    %3780 = vmatprep.subr.bf16.mxu0 %v3723
    %3781 = vmatpush1.bf16.msra.mxu0 %v3722
    %3782 = vmatprep.subr.bf16.mxu0 %v3721
    %3783 = vmatpush1.bf16.msra.mxu0 %v3720
    %3784 = vmatprep.subr.bf16.mxu0 %v3719
    %3785 = vmatpush1.bf16.msra.mxu0 %v3718
    %3786 = vmatprep.subr.bf16.mxu0 %v3717
    %3787 = vmatpush1.bf16.msra.mxu0 %v3716
    %3788 = vmatprep.subr.bf16.mxu0 %v3715
    %3789 = vmatpush1.bf16.msra.mxu0 %v3714
    %3790 = vmatprep.subr.bf16.mxu0 %v3713
    %3791 = vmatpush1.bf16.msra.mxu0 %v3712
    %3792 = vmatprep.subr.bf16.mxu0 %v3743
    %3793 = vmatpush2.bf16.msra.mxu0 %v3742
    %3794 = vmatprep.subr.bf16.mxu0 %v3741
    %3795 = vmatpush2.bf16.msra.mxu0 %v3740
    %3796 = vmatprep.subr.bf16.mxu0 %v3739
    %3797 = vmatpush2.bf16.msra.mxu0 %v3738
    %3798 = vmatprep.subr.bf16.mxu0 %v3737
    %3799 = vmatpush2.bf16.msra.mxu0 %v3736
    %3800 = vmatprep.subr.bf16.mxu0 %v3735
    %3801 = vmatpush2.bf16.msra.mxu0 %v3734
    %3802 = vmatprep.subr.bf16.mxu0 %v3733
    %3803 = vmatpush2.bf16.msra.mxu0 %v3732
    %3804 = vmatprep.subr.bf16.mxu0 %v3731
    %3805 = vmatpush2.bf16.msra.mxu0 %v3730
    %3806 = vmatprep.subr.bf16.mxu0 %v3729
    %3807 = vmatpush2.bf16.msra.mxu0 %v3728
    %3808 = vmatprep.mubr.bf16.mxu0 %v3585
    %3809 = vmatmul.mubr.bf16.gmra.mxu0 %v3584
    %v3810 = vpop.f32.mrf.mxu0
    %v3811 = vadd.f32 0.0, %v3810
    %v3812 = vpop.f32.mrf.mxu0
    %v3813 = vadd.f32 0.0, %v3812
    %v3814 = vpop.f32.mrf.mxu0
    %v3815 = vadd.f32 0.0, %v3814
    %v3816 = vpop.f32.mrf.mxu0
    %v3817 = vadd.f32 0.0, %v3816
    %3818 = vmatprep.mubr.bf16.mxu0 %v3587
    %3819 = vmatmul.mubr.bf16.gmra.mxu0 %v3586
    %v3820 = vpop.f32.mrf.mxu0
    %v3821 = vadd.f32 0.0, %v3820
    %v3822 = vpop.f32.mrf.mxu0
    %v3823 = vadd.f32 0.0, %v3822
    %v3824 = vpop.f32.mrf.mxu0
    %v3825 = vadd.f32 0.0, %v3824
    %v3826 = vpop.f32.mrf.mxu0
    %v3827 = vadd.f32 0.0, %v3826
    %3828 = vmatprep.mubr.bf16.mxu0 %v3589
    %3829 = vmatmul.mubr.bf16.gmra.mxu0 %v3588
    %v3830 = vpop.f32.mrf.mxu0
    %v3831 = vadd.f32 0.0, %v3830
    %v3832 = vpop.f32.mrf.mxu0
    %v3833 = vadd.f32 0.0, %v3832
    %v3834 = vpop.f32.mrf.mxu0
    %v3835 = vadd.f32 0.0, %v3834
    %v3836 = vpop.f32.mrf.mxu0
    %v3837 = vadd.f32 0.0, %v3836
    %3838 = vmatprep.mubr.bf16.mxu0 %v3591
    %3839 = vmatmul.mubr.bf16.gmra.mxu0 %v3590
    %v3840 = vpop.f32.mrf.mxu0
    %v3841 = vadd.f32 0.0, %v3840
    %v3842 = vpop.f32.mrf.mxu0
    %v3843 = vadd.f32 0.0, %v3842
    %v3844 = vpop.f32.mrf.mxu0
    %v3845 = vadd.f32 0.0, %v3844
    %v3846 = vpop.f32.mrf.mxu0
    %v3847 = vadd.f32 0.0, %v3846
    %3848 = vmatprep.mubr.bf16.mxu0 %v3593
    %3849 = vmatmul.mubr.bf16.gmra.mxu0 %v3592
    %v3850 = vpop.f32.mrf.mxu0
    %v3851 = vadd.f32 0.0, %v3850
    %v3852 = vpop.f32.mrf.mxu0
    %v3853 = vadd.f32 0.0, %v3852
    %v3854 = vpop.f32.mrf.mxu0
    %v3855 = vadd.f32 0.0, %v3854
    %v3856 = vpop.f32.mrf.mxu0
    %v3857 = vadd.f32 0.0, %v3856
    %3858 = vmatprep.mubr.bf16.mxu0 %v3595
    %3859 = vmatmul.mubr.bf16.gmra.mxu0 %v3594
    %v3860 = vpop.f32.mrf.mxu0
    %v3861 = vadd.f32 0.0, %v3860
    %v3862 = vpop.f32.mrf.mxu0
    %v3863 = vadd.f32 0.0, %v3862
    %v3864 = vpop.f32.mrf.mxu0
    %v3865 = vadd.f32 0.0, %v3864
    %v3866 = vpop.f32.mrf.mxu0
    %v3867 = vadd.f32 0.0, %v3866
    %3868 = vmatprep.mubr.bf16.mxu0 %v3597
    %3869 = vmatmul.mubr.bf16.gmra.mxu0 %v3596
    %v3870 = vpop.f32.mrf.mxu0
    %v3871 = vadd.f32 0.0, %v3870
    %v3872 = vpop.f32.mrf.mxu0
    %v3873 = vadd.f32 0.0, %v3872
    %v3874 = vpop.f32.mrf.mxu0
    %v3875 = vadd.f32 0.0, %v3874
    %v3876 = vpop.f32.mrf.mxu0
    %v3877 = vadd.f32 0.0, %v3876
    %3878 = vmatprep.mubr.bf16.mxu0 %v3599
    %3879 = vmatmul.mubr.bf16.gmra.mxu0 %v3598
    %v3880 = vpop.f32.mrf.mxu0
    %v3881 = vadd.f32 0.0, %v3880
    %v3882 = vpop.f32.mrf.mxu0
    %v3883 = vadd.f32 0.0, %v3882
    %v3884 = vpop.f32.mrf.mxu0
    %v3885 = vadd.f32 0.0, %v3884
    %v3886 = vpop.f32.mrf.mxu0
    %v3887 = vadd.f32 0.0, %v3886
    %3888 = vdwg.mxu0
    %v3889 = vadd.f32 %v3231, %v3811
    %v3890 = vadd.f32 %v3232, %v3813
    %v3891 = vadd.f32 %v3233, %v3815
    %v3892 = vadd.f32 %v3234, %v3817
    %v3893 = vadd.f32 %v3235, %v3821
    %v3894 = vadd.f32 %v3236, %v3823
    %v3895 = vadd.f32 %v3237, %v3825
    %v3896 = vadd.f32 %v3238, %v3827
    %v3897 = vadd.f32 %v3239, %v3831
    %v3898 = vadd.f32 %v3240, %v3833
    %v3899 = vadd.f32 %v3241, %v3835
    %v3900 = vadd.f32 %v3242, %v3837
    %v3901 = vadd.f32 %v3243, %v3841
    %v3902 = vadd.f32 %v3244, %v3843
    %v3903 = vadd.f32 %v3245, %v3845
    %v3904 = vadd.f32 %v3246, %v3847
    %v3905 = vadd.f32 %v3247, %v3851
    %v3906 = vadd.f32 %v3248, %v3853
    %v3907 = vadd.f32 %v3249, %v3855
    %v3908 = vadd.f32 %v3250, %v3857
    %v3909 = vadd.f32 %v3251, %v3861
    %v3910 = vadd.f32 %v3252, %v3863
    %v3911 = vadd.f32 %v3253, %v3865
    %v3912 = vadd.f32 %v3254, %v3867
    %v3913 = vadd.f32 %v3255, %v3871
    %v3914 = vadd.f32 %v3256, %v3873
    %v3915 = vadd.f32 %v3257, %v3875
    %v3916 = vadd.f32 %v3258, %v3877
    %v3917 = vadd.f32 %v3259, %v3881
    %v3918 = vadd.f32 %v3260, %v3883
    %v3919 = vadd.f32 %v3261, %v3885
    %v3920 = vadd.f32 %v3262, %v3887
    %v3921 = vld [vmem:[%s491] sm:$0xee]
    %v3922 = vld [vmem:[%s491 + $0x10] sm:$0xee]
    %v3923 = vld [vmem:[%s491 + $0x20] sm:$0xee]
    %v3924 = vld [vmem:[%s491 + $0x30] sm:$0xee]
    %v3925 = vld [vmem:[%s491 + $0x40] sm:$0xee]
    %v3926 = vld [vmem:[%s491 + $0x50] sm:$0xee]
    %v3927 = vld [vmem:[%s491 + $0x60] sm:$0xee]
    %v3928 = vld [vmem:[%s491 + $0x70] sm:$0xee]
    %v3929 = vld [vmem:[%s491 + $0xa0] sm:$0xee]
    %v3930 = vld [vmem:[%s491 + $0xb0] sm:$0xee]
    %v3931 = vld [vmem:[%s491 + $0xc0] sm:$0xee]
    %v3932 = vld [vmem:[%s491 + $0xd0] sm:$0xee]
    %v3933 = vld [vmem:[%s491 + $0xe0] sm:$0xee]
    %v3934 = vld [vmem:[%s491 + $0xf0] sm:$0xee]
    %v3935 = vld [vmem:[%s491 + $0x100] sm:$0xee]
    %v3936 = vld [vmem:[%s491 + $0x110] sm:$0xee]
    %v3969 = vrot.slane %v3921, 5
    %v3970 = vrot.slane %v3969, 4
    %v3971 = vrot.slane %v3264, 5
    %v3972 = vsel %vm2362, %v3970, %v3971
    %v3973 = vrot.slane %v3922, 5
    %v3974 = vrot.slane %v3973, 4
    %v3975 = vrot.slane %v3266, 5
    %v3976 = vsel %vm2362, %v3974, %v3975
    %v3977 = vrot.slane %v3923, 5
    %v3978 = vrot.slane %v3977, 4
    %v3979 = vrot.slane %v3268, 5
    %v3980 = vsel %vm2362, %v3978, %v3979
    %v3981 = vrot.slane %v3924, 5
    %v3982 = vrot.slane %v3981, 4
    %v3983 = vrot.slane %v3270, 5
    %v3984 = vsel %vm2362, %v3982, %v3983
    %v3985 = vrot.slane %v3925, 5
    %v3986 = vrot.slane %v3985, 4
    %v3987 = vrot.slane %v3272, 5
    %v3988 = vsel %vm2362, %v3986, %v3987
    %v3989 = vrot.slane %v3926, 5
    %v3990 = vrot.slane %v3989, 4
    %v3991 = vrot.slane %v3274, 5
    %v3992 = vsel %vm2362, %v3990, %v3991
    %v3993 = vrot.slane %v3927, 5
    %v3994 = vrot.slane %v3993, 4
    %v3995 = vrot.slane %v3276, 5
    %v3996 = vsel %vm2362, %v3994, %v3995
    %v3997 = vrot.slane %v3928, 5
    %v3998 = vrot.slane %v3997, 4
    %v3999 = vrot.slane %v3278, 5
    %v4000 = vsel %vm2362, %v3998, %v3999
    %v4001 = vrot.slane %v3929, 5
    %v4002 = vrot.slane %v4001, 4
    %v4003 = vrot.slane %v3280, 5
    %v4004 = vsel %vm2362, %v4002, %v4003
    %v4005 = vrot.slane %v3930, 5
    %v4006 = vrot.slane %v4005, 4
    %v4007 = vrot.slane %v3282, 5
    %v4008 = vsel %vm2362, %v4006, %v4007
    %v4009 = vrot.slane %v3931, 5
    %v4010 = vrot.slane %v4009, 4
    %v4011 = vrot.slane %v3284, 5
    %v4012 = vsel %vm2362, %v4010, %v4011
    %v4013 = vrot.slane %v3932, 5
    %v4014 = vrot.slane %v4013, 4
    %v4015 = vrot.slane %v3286, 5
    %v4016 = vsel %vm2362, %v4014, %v4015
    %v4017 = vrot.slane %v3933, 5
    %v4018 = vrot.slane %v4017, 4
    %v4019 = vrot.slane %v3288, 5
    %v4020 = vsel %vm2362, %v4018, %v4019
    %v4021 = vrot.slane %v3934, 5
    %v4022 = vrot.slane %v4021, 4
    %v4023 = vrot.slane %v3290, 5
    %v4024 = vsel %vm2362, %v4022, %v4023
    %v4025 = vrot.slane %v3935, 5
    %v4026 = vrot.slane %v4025, 4
    %v4027 = vrot.slane %v3292, 5
    %v4028 = vsel %vm2362, %v4026, %v4027
    %v4029 = vrot.slane %v3936, 5
    %v4030 = vrot.slane %v4029, 4
    %v4031 = vrot.slane %v3294, 5
    %v4032 = vsel %vm2362, %v4030, %v4031
    %s4033 = scalar_lea.vmem [#allocation12], 1280
    %v4034 = vld [vmem:[%s4033] sm:$0xff]
    %v4035 = vld [vmem:[%s4033 + $0x8] sm:$0xff]
    %v4036 = vld [vmem:[%s4033 + $0x10] sm:$0xff]
    %v4037 = vld [vmem:[%s4033 + $0x18] sm:$0xff]
    %v4038 = vld [vmem:[%s4033 + $0x20] sm:$0xff]
    %v4039 = vld [vmem:[%s4033 + $0x28] sm:$0xff]
    %v4040 = vld [vmem:[%s4033 + $0x30] sm:$0xff]
    %v4041 = vld [vmem:[%s4033 + $0x38] sm:$0xff]
    %v4042 = vld [vmem:[%s4033 + $0x40] sm:$0xff]
    %v4043 = vld [vmem:[%s4033 + $0x48] sm:$0xff]
    %v4044 = vld [vmem:[%s4033 + $0x50] sm:$0xff]
    %v4045 = vld [vmem:[%s4033 + $0x58] sm:$0xff]
    %v4046 = vld [vmem:[%s4033 + $0x60] sm:$0xff]
    %v4047 = vld [vmem:[%s4033 + $0x68] sm:$0xff]
    %v4048 = vld [vmem:[%s4033 + $0x70] sm:$0xff]
    %v4049 = vld [vmem:[%s4033 + $0x78] sm:$0xff]
    %v4050 = vld [vmem:[%s4033 + $0x80] sm:$0xff]
    %v4051 = vld [vmem:[%s4033 + $0x88] sm:$0xff]
    %v4052 = vld [vmem:[%s4033 + $0x90] sm:$0xff]
    %v4053 = vld [vmem:[%s4033 + $0x98] sm:$0xff]
    %v4054 = vld [vmem:[%s4033 + $0xa0] sm:$0xff]
    %v4055 = vld [vmem:[%s4033 + $0xa8] sm:$0xff]
    %v4056 = vld [vmem:[%s4033 + $0xb0] sm:$0xff]
    %v4057 = vld [vmem:[%s4033 + $0xb8] sm:$0xff]
    %v4058 = vld [vmem:[%s4033 + $0xc0] sm:$0xff]
    %v4059 = vld [vmem:[%s4033 + $0xc8] sm:$0xff]
    %v4060 = vld [vmem:[%s4033 + $0xd0] sm:$0xff]
    %v4061 = vld [vmem:[%s4033 + $0xd8] sm:$0xff]
    %v4062 = vld [vmem:[%s4033 + $0xe0] sm:$0xff]
    %v4063 = vld [vmem:[%s4033 + $0xe8] sm:$0xff]
    %v4064 = vld [vmem:[%s4033 + $0xf0] sm:$0xff]
    %v4065 = vld [vmem:[%s4033 + $0xf8] sm:$0xff]
    %v4066 = vunpack.c.l.b16 %v3972
    %v4067 = vunpack.c.h.b16 %v3972
    %v4068 = vunpack.c.l.b16 %v3976
    %v4069 = vunpack.c.h.b16 %v3976
    %v4070 = vunpack.c.l.b16 %v3980
    %v4071 = vunpack.c.h.b16 %v3980
    %v4072 = vunpack.c.l.b16 %v3984
    %v4073 = vunpack.c.h.b16 %v3984
    %v4074 = vunpack.c.l.b16 %v3988
    %v4075 = vunpack.c.h.b16 %v3988
    %v4076 = vunpack.c.l.b16 %v3992
    %v4077 = vunpack.c.h.b16 %v3992
    %v4078 = vunpack.c.l.b16 %v3996
    %v4079 = vunpack.c.h.b16 %v3996
    %v4080 = vunpack.c.l.b16 %v4000
    %v4081 = vunpack.c.h.b16 %v4000
    %v4082 = vunpack.c.l.b16 %v4004
    %v4083 = vunpack.c.h.b16 %v4004
    %v4084 = vunpack.c.l.b16 %v4008
    %v4085 = vunpack.c.h.b16 %v4008
    %v4086 = vunpack.c.l.b16 %v4012
    %v4087 = vunpack.c.h.b16 %v4012
    %v4088 = vunpack.c.l.b16 %v4016
    %v4089 = vunpack.c.h.b16 %v4016
    %v4090 = vunpack.c.l.b16 %v4020
    %v4091 = vunpack.c.h.b16 %v4020
    %v4092 = vunpack.c.l.b16 %v4024
    %v4093 = vunpack.c.h.b16 %v4024
    %v4094 = vunpack.c.l.b16 %v4028
    %v4095 = vunpack.c.h.b16 %v4028
    %v4096 = vunpack.c.l.b16 %v4032
    %v4097 = vunpack.c.h.b16 %v4032
    %v4098 = vpack.c.b16 %v4068, %v4066
    %v4099 = vpack.c.b16 %v4069, %v4067
    %v4100 = vpack.c.b16 %v4072, %v4070
    %v4101 = vpack.c.b16 %v4073, %v4071
    %v4102 = vpack.c.b16 %v4076, %v4074
    %v4103 = vpack.c.b16 %v4077, %v4075
    %v4104 = vpack.c.b16 %v4080, %v4078
    %v4105 = vpack.c.b16 %v4081, %v4079
    %v4106 = vpack.c.b16 %v4084, %v4082
    %v4107 = vpack.c.b16 %v4085, %v4083
    %v4108 = vpack.c.b16 %v4088, %v4086
    %v4109 = vpack.c.b16 %v4089, %v4087
    %v4110 = vpack.c.b16 %v4092, %v4090
    %v4111 = vpack.c.b16 %v4093, %v4091
    %v4112 = vpack.c.b16 %v4096, %v4094
    %v4113 = vpack.c.b16 %v4097, %v4095
    %v4162 = vunpack.c.l.b16 %v4034
    %v4163 = vunpack.c.h.b16 %v4034
    %v4164 = vunpack.c.l.b16 %v4035
    %v4165 = vunpack.c.h.b16 %v4035
    %v4166 = vunpack.c.l.b16 %v4036
    %v4167 = vunpack.c.h.b16 %v4036
    %v4168 = vunpack.c.l.b16 %v4037
    %v4169 = vunpack.c.h.b16 %v4037
    %v4170 = vunpack.c.l.b16 %v4038
    %v4171 = vunpack.c.h.b16 %v4038
    %v4172 = vunpack.c.l.b16 %v4039
    %v4173 = vunpack.c.h.b16 %v4039
    %v4174 = vunpack.c.l.b16 %v4040
    %v4175 = vunpack.c.h.b16 %v4040
    %v4176 = vunpack.c.l.b16 %v4041
    %v4177 = vunpack.c.h.b16 %v4041
    %v4178 = vunpack.c.l.b16 %v4042
    %v4179 = vunpack.c.h.b16 %v4042
    %v4180 = vunpack.c.l.b16 %v4043
    %v4181 = vunpack.c.h.b16 %v4043
    %v4182 = vunpack.c.l.b16 %v4044
    %v4183 = vunpack.c.h.b16 %v4044
    %v4184 = vunpack.c.l.b16 %v4045
    %v4185 = vunpack.c.h.b16 %v4045
    %v4186 = vunpack.c.l.b16 %v4046
    %v4187 = vunpack.c.h.b16 %v4046
    %v4188 = vunpack.c.l.b16 %v4047
    %v4189 = vunpack.c.h.b16 %v4047
    %v4190 = vunpack.c.l.b16 %v4048
    %v4191 = vunpack.c.h.b16 %v4048
    %v4192 = vunpack.c.l.b16 %v4049
    %v4193 = vunpack.c.h.b16 %v4049
    %v4194 = vunpack.c.l.b16 %v4050
    %v4195 = vunpack.c.h.b16 %v4050
    %v4196 = vunpack.c.l.b16 %v4051
    %v4197 = vunpack.c.h.b16 %v4051
    %v4198 = vunpack.c.l.b16 %v4052
    %v4199 = vunpack.c.h.b16 %v4052
    %v4200 = vunpack.c.l.b16 %v4053
    %v4201 = vunpack.c.h.b16 %v4053
    %v4202 = vunpack.c.l.b16 %v4054
    %v4203 = vunpack.c.h.b16 %v4054
    %v4204 = vunpack.c.l.b16 %v4055
    %v4205 = vunpack.c.h.b16 %v4055
    %v4206 = vunpack.c.l.b16 %v4056
    %v4207 = vunpack.c.h.b16 %v4056
    %v4208 = vunpack.c.l.b16 %v4057
    %v4209 = vunpack.c.h.b16 %v4057
    %v4210 = vunpack.c.l.b16 %v4058
    %v4211 = vunpack.c.h.b16 %v4058
    %v4212 = vunpack.c.l.b16 %v4059
    %v4213 = vunpack.c.h.b16 %v4059
    %v4214 = vunpack.c.l.b16 %v4060
    %v4215 = vunpack.c.h.b16 %v4060
    %v4216 = vunpack.c.l.b16 %v4061
    %v4217 = vunpack.c.h.b16 %v4061
    %v4218 = vunpack.c.l.b16 %v4062
    %v4219 = vunpack.c.h.b16 %v4062
    %v4220 = vunpack.c.l.b16 %v4063
    %v4221 = vunpack.c.h.b16 %v4063
    %v4222 = vunpack.c.l.b16 %v4064
    %v4223 = vunpack.c.h.b16 %v4064
    %v4224 = vunpack.c.l.b16 %v4065
    %v4225 = vunpack.c.h.b16 %v4065
    %v4226 = vpack.c.b16 %v4164, %v4162
    %v4227 = vpack.c.b16 %v4165, %v4163
    %v4228 = vpack.c.b16 %v4168, %v4166
    %v4229 = vpack.c.b16 %v4169, %v4167
    %v4230 = vpack.c.b16 %v4172, %v4170
    %v4231 = vpack.c.b16 %v4173, %v4171
    %v4232 = vpack.c.b16 %v4176, %v4174
    %v4233 = vpack.c.b16 %v4177, %v4175
    %v4234 = vpack.c.b16 %v4180, %v4178
    %v4235 = vpack.c.b16 %v4181, %v4179
    %v4236 = vpack.c.b16 %v4184, %v4182
    %v4237 = vpack.c.b16 %v4185, %v4183
    %v4238 = vpack.c.b16 %v4188, %v4186
    %v4239 = vpack.c.b16 %v4189, %v4187
    %v4240 = vpack.c.b16 %v4192, %v4190
    %v4241 = vpack.c.b16 %v4193, %v4191
    %v4242 = vpack.c.b16 %v4196, %v4194
    %v4243 = vpack.c.b16 %v4197, %v4195
    %v4244 = vpack.c.b16 %v4200, %v4198
    %v4245 = vpack.c.b16 %v4201, %v4199
    %v4246 = vpack.c.b16 %v4204, %v4202
    %v4247 = vpack.c.b16 %v4205, %v4203
    %v4248 = vpack.c.b16 %v4208, %v4206
    %v4249 = vpack.c.b16 %v4209, %v4207
    %v4250 = vpack.c.b16 %v4212, %v4210
    %v4251 = vpack.c.b16 %v4213, %v4211
    %v4252 = vpack.c.b16 %v4216, %v4214
    %v4253 = vpack.c.b16 %v4217, %v4215
    %v4254 = vpack.c.b16 %v4220, %v4218
    %v4255 = vpack.c.b16 %v4221, %v4219
    %v4256 = vpack.c.b16 %v4224, %v4222
    %v4257 = vpack.c.b16 %v4225, %v4223
    %4290 = vmatprep.subr.bf16.mxu0 %v4241
    %4291 = vmatpush1.bf16.msra.mxu0 %v4240
    %4292 = vmatprep.subr.bf16.mxu0 %v4239
    %4293 = vmatpush1.bf16.msra.mxu0 %v4238
    %4294 = vmatprep.subr.bf16.mxu0 %v4237
    %4295 = vmatpush1.bf16.msra.mxu0 %v4236
    %4296 = vmatprep.subr.bf16.mxu0 %v4235
    %4297 = vmatpush1.bf16.msra.mxu0 %v4234
    %4298 = vmatprep.subr.bf16.mxu0 %v4233
    %4299 = vmatpush1.bf16.msra.mxu0 %v4232
    %4300 = vmatprep.subr.bf16.mxu0 %v4231
    %4301 = vmatpush1.bf16.msra.mxu0 %v4230
    %4302 = vmatprep.subr.bf16.mxu0 %v4229
    %4303 = vmatpush1.bf16.msra.mxu0 %v4228
    %4304 = vmatprep.subr.bf16.mxu0 %v4227
    %4305 = vmatpush1.bf16.msra.mxu0 %v4226
    %4306 = vmatprep.subr.bf16.mxu0 %v4257
    %4307 = vmatpush2.bf16.msra.mxu0 %v4256
    %4308 = vmatprep.subr.bf16.mxu0 %v4255
    %4309 = vmatpush2.bf16.msra.mxu0 %v4254
    %4310 = vmatprep.subr.bf16.mxu0 %v4253
    %4311 = vmatpush2.bf16.msra.mxu0 %v4252
    %4312 = vmatprep.subr.bf16.mxu0 %v4251
    %4313 = vmatpush2.bf16.msra.mxu0 %v4250
    %4314 = vmatprep.subr.bf16.mxu0 %v4249
    %4315 = vmatpush2.bf16.msra.mxu0 %v4248
    %4316 = vmatprep.subr.bf16.mxu0 %v4247
    %4317 = vmatpush2.bf16.msra.mxu0 %v4246
    %4318 = vmatprep.subr.bf16.mxu0 %v4245
    %4319 = vmatpush2.bf16.msra.mxu0 %v4244
    %4320 = vmatprep.subr.bf16.mxu0 %v4243
    %4321 = vmatpush2.bf16.msra.mxu0 %v4242
    %4322 = vmatprep.mubr.bf16.mxu0 %v4099
    %4323 = vmatmul.mubr.bf16.gmra.mxu0 %v4098
    %v4324 = vpop.f32.mrf.mxu0
    %v4325 = vadd.f32 0.0, %v4324
    %v4326 = vpop.f32.mrf.mxu0
    %v4327 = vadd.f32 0.0, %v4326
    %v4328 = vpop.f32.mrf.mxu0
    %v4329 = vadd.f32 0.0, %v4328
    %v4330 = vpop.f32.mrf.mxu0
    %v4331 = vadd.f32 0.0, %v4330
    %4332 = vmatprep.mubr.bf16.mxu0 %v4101
    %4333 = vmatmul.mubr.bf16.gmra.mxu0 %v4100
    %v4334 = vpop.f32.mrf.mxu0
    %v4335 = vadd.f32 0.0, %v4334
    %v4336 = vpop.f32.mrf.mxu0
    %v4337 = vadd.f32 0.0, %v4336
    %v4338 = vpop.f32.mrf.mxu0
    %v4339 = vadd.f32 0.0, %v4338
    %v4340 = vpop.f32.mrf.mxu0
    %v4341 = vadd.f32 0.0, %v4340
    %4342 = vmatprep.mubr.bf16.mxu0 %v4103
    %4343 = vmatmul.mubr.bf16.gmra.mxu0 %v4102
    %v4344 = vpop.f32.mrf.mxu0
    %v4345 = vadd.f32 0.0, %v4344
    %v4346 = vpop.f32.mrf.mxu0
    %v4347 = vadd.f32 0.0, %v4346
    %v4348 = vpop.f32.mrf.mxu0
    %v4349 = vadd.f32 0.0, %v4348
    %v4350 = vpop.f32.mrf.mxu0
    %v4351 = vadd.f32 0.0, %v4350
    %4352 = vmatprep.mubr.bf16.mxu0 %v4105
    %4353 = vmatmul.mubr.bf16.gmra.mxu0 %v4104
    %v4354 = vpop.f32.mrf.mxu0
    %v4355 = vadd.f32 0.0, %v4354
    %v4356 = vpop.f32.mrf.mxu0
    %v4357 = vadd.f32 0.0, %v4356
    %v4358 = vpop.f32.mrf.mxu0
    %v4359 = vadd.f32 0.0, %v4358
    %v4360 = vpop.f32.mrf.mxu0
    %v4361 = vadd.f32 0.0, %v4360
    %4362 = vmatprep.mubr.bf16.mxu0 %v4107
    %4363 = vmatmul.mubr.bf16.gmra.mxu0 %v4106
    %v4364 = vpop.f32.mrf.mxu0
    %v4365 = vadd.f32 0.0, %v4364
    %v4366 = vpop.f32.mrf.mxu0
    %v4367 = vadd.f32 0.0, %v4366
    %v4368 = vpop.f32.mrf.mxu0
    %v4369 = vadd.f32 0.0, %v4368
    %v4370 = vpop.f32.mrf.mxu0
    %v4371 = vadd.f32 0.0, %v4370
    %4372 = vmatprep.mubr.bf16.mxu0 %v4109
    %4373 = vmatmul.mubr.bf16.gmra.mxu0 %v4108
    %v4374 = vpop.f32.mrf.mxu0
    %v4375 = vadd.f32 0.0, %v4374
    %v4376 = vpop.f32.mrf.mxu0
    %v4377 = vadd.f32 0.0, %v4376
    %v4378 = vpop.f32.mrf.mxu0
    %v4379 = vadd.f32 0.0, %v4378
    %v4380 = vpop.f32.mrf.mxu0
    %v4381 = vadd.f32 0.0, %v4380
    %4382 = vmatprep.mubr.bf16.mxu0 %v4111
    %4383 = vmatmul.mubr.bf16.gmra.mxu0 %v4110
    %v4384 = vpop.f32.mrf.mxu0
    %v4385 = vadd.f32 0.0, %v4384
    %v4386 = vpop.f32.mrf.mxu0
    %v4387 = vadd.f32 0.0, %v4386
    %v4388 = vpop.f32.mrf.mxu0
    %v4389 = vadd.f32 0.0, %v4388
    %v4390 = vpop.f32.mrf.mxu0
    %v4391 = vadd.f32 0.0, %v4390
    %4392 = vmatprep.mubr.bf16.mxu0 %v4113
    %4393 = vmatmul.mubr.bf16.gmra.mxu0 %v4112
    %v4394 = vpop.f32.mrf.mxu0
    %v4395 = vadd.f32 0.0, %v4394
    %v4396 = vpop.f32.mrf.mxu0
    %v4397 = vadd.f32 0.0, %v4396
    %v4398 = vpop.f32.mrf.mxu0
    %v4399 = vadd.f32 0.0, %v4398
    %v4400 = vpop.f32.mrf.mxu0
    %v4401 = vadd.f32 0.0, %v4400
    %4402 = vdwg.mxu0
    %v4403 = vadd.f32 %v3889, %v4325
    %v4404 = vadd.f32 %v3890, %v4327
    %v4405 = vadd.f32 %v3891, %v4329
    %v4406 = vadd.f32 %v3892, %v4331
    %v4407 = vadd.f32 %v3893, %v4335
    %v4408 = vadd.f32 %v3894, %v4337
    %v4409 = vadd.f32 %v3895, %v4339
    %v4410 = vadd.f32 %v3896, %v4341
    %v4411 = vadd.f32 %v3897, %v4345
    %v4412 = vadd.f32 %v3898, %v4347
    %v4413 = vadd.f32 %v3899, %v4349
    %v4414 = vadd.f32 %v3900, %v4351
    %v4415 = vadd.f32 %v3901, %v4355
    %v4416 = vadd.f32 %v3902, %v4357
    %v4417 = vadd.f32 %v3903, %v4359
    %v4418 = vadd.f32 %v3904, %v4361
    %v4419 = vadd.f32 %v3905, %v4365
    %v4420 = vadd.f32 %v3906, %v4367
    %v4421 = vadd.f32 %v3907, %v4369
    %v4422 = vadd.f32 %v3908, %v4371
    %v4423 = vadd.f32 %v3909, %v4375
    %v4424 = vadd.f32 %v3910, %v4377
    %v4425 = vadd.f32 %v3911, %v4379
    %v4426 = vadd.f32 %v3912, %v4381
    %v4427 = vadd.f32 %v3913, %v4385
    %v4428 = vadd.f32 %v3914, %v4387
    %v4429 = vadd.f32 %v3915, %v4389
    %v4430 = vadd.f32 %v3916, %v4391
    %v4431 = vadd.f32 %v3917, %v4395
    %v4432 = vadd.f32 %v3918, %v4397
    %v4433 = vadd.f32 %v3919, %v4399
    %v4434 = vadd.f32 %v3920, %v4401
    %s4435 = scalar_lea.vmem [#allocation2], 32
    %v4436 = vld [vmem:[%s4435] sm:$0xff]
    %v4437 = vld [vmem:[%s4435 + $0x10] sm:$0xff]
    %v4438 = vld [vmem:[%s4435 + $0x20] sm:$0xff]
    %v4439 = vld [vmem:[%s4435 + $0x30] sm:$0xff]
    %v4440 = vld [vmem:[%s4435 + $0x40] sm:$0xff]
    %v4441 = vld [vmem:[%s4435 + $0x50] sm:$0xff]
    %v4442 = vld [vmem:[%s4435 + $0x60] sm:$0xff]
    %v4443 = vld [vmem:[%s4435 + $0x70] sm:$0xff]
    %v4444 = vld [vmem:[%s4435 + $0xa0] sm:$0xff]
    %v4445 = vld [vmem:[%s4435 + $0xb0] sm:$0xff]
    %v4446 = vld [vmem:[%s4435 + $0xc0] sm:$0xff]
    %v4447 = vld [vmem:[%s4435 + $0xd0] sm:$0xff]
    %v4448 = vld [vmem:[%s4435 + $0xe0] sm:$0xff]
    %v4449 = vld [vmem:[%s4435 + $0xf0] sm:$0xff]
    %v4450 = vld [vmem:[%s4435 + $0x100] sm:$0xff]
    %v4451 = vld [vmem:[%s4435 + $0x110] sm:$0xff]
    %s4452 = scalar_lea.vmem [#allocation12], 1536
    %v4453 = vld [vmem:[%s4452] sm:$0xff]
    %v4454 = vld [vmem:[%s4452 + $0x8] sm:$0xff]
    %v4455 = vld [vmem:[%s4452 + $0x10] sm:$0xff]
    %v4456 = vld [vmem:[%s4452 + $0x18] sm:$0xff]
    %v4457 = vld [vmem:[%s4452 + $0x20] sm:$0xff]
    %v4458 = vld [vmem:[%s4452 + $0x28] sm:$0xff]
    %v4459 = vld [vmem:[%s4452 + $0x30] sm:$0xff]
    %v4460 = vld [vmem:[%s4452 + $0x38] sm:$0xff]
    %v4461 = vld [vmem:[%s4452 + $0x40] sm:$0xff]
    %v4462 = vld [vmem:[%s4452 + $0x48] sm:$0xff]
    %v4463 = vld [vmem:[%s4452 + $0x50] sm:$0xff]
    %v4464 = vld [vmem:[%s4452 + $0x58] sm:$0xff]
    %v4465 = vld [vmem:[%s4452 + $0x60] sm:$0xff]
    %v4466 = vld [vmem:[%s4452 + $0x68] sm:$0xff]
    %v4467 = vld [vmem:[%s4452 + $0x70] sm:$0xff]
    %v4468 = vld [vmem:[%s4452 + $0x78] sm:$0xff]
    %v4469 = vld [vmem:[%s4452 + $0x80] sm:$0xff]
    %v4470 = vld [vmem:[%s4452 + $0x88] sm:$0xff]
    %v4471 = vld [vmem:[%s4452 + $0x90] sm:$0xff]
    %v4472 = vld [vmem:[%s4452 + $0x98] sm:$0xff]
    %v4473 = vld [vmem:[%s4452 + $0xa0] sm:$0xff]
    %v4474 = vld [vmem:[%s4452 + $0xa8] sm:$0xff]
    %v4475 = vld [vmem:[%s4452 + $0xb0] sm:$0xff]
    %v4476 = vld [vmem:[%s4452 + $0xb8] sm:$0xff]
    %v4477 = vld [vmem:[%s4452 + $0xc0] sm:$0xff]
    %v4478 = vld [vmem:[%s4452 + $0xc8] sm:$0xff]
    %v4479 = vld [vmem:[%s4452 + $0xd0] sm:$0xff]
    %v4480 = vld [vmem:[%s4452 + $0xd8] sm:$0xff]
    %v4481 = vld [vmem:[%s4452 + $0xe0] sm:$0xff]
    %v4482 = vld [vmem:[%s4452 + $0xe8] sm:$0xff]
    %v4483 = vld [vmem:[%s4452 + $0xf0] sm:$0xff]
    %v4484 = vld [vmem:[%s4452 + $0xf8] sm:$0xff]
    %v4501 = vunpack.c.l.b16 %v4436
    %v4502 = vunpack.c.h.b16 %v4436
    %v4503 = vunpack.c.l.b16 %v4437
    %v4504 = vunpack.c.h.b16 %v4437
    %v4505 = vunpack.c.l.b16 %v4438
    %v4506 = vunpack.c.h.b16 %v4438
    %v4507 = vunpack.c.l.b16 %v4439
    %v4508 = vunpack.c.h.b16 %v4439
    %v4509 = vunpack.c.l.b16 %v4440
    %v4510 = vunpack.c.h.b16 %v4440
    %v4511 = vunpack.c.l.b16 %v4441
    %v4512 = vunpack.c.h.b16 %v4441
    %v4513 = vunpack.c.l.b16 %v4442
    %v4514 = vunpack.c.h.b16 %v4442
    %v4515 = vunpack.c.l.b16 %v4443
    %v4516 = vunpack.c.h.b16 %v4443
    %v4517 = vunpack.c.l.b16 %v4444
    %v4518 = vunpack.c.h.b16 %v4444
    %v4519 = vunpack.c.l.b16 %v4445
    %v4520 = vunpack.c.h.b16 %v4445
    %v4521 = vunpack.c.l.b16 %v4446
    %v4522 = vunpack.c.h.b16 %v4446
    %v4523 = vunpack.c.l.b16 %v4447
    %v4524 = vunpack.c.h.b16 %v4447
    %v4525 = vunpack.c.l.b16 %v4448
    %v4526 = vunpack.c.h.b16 %v4448
    %v4527 = vunpack.c.l.b16 %v4449
    %v4528 = vunpack.c.h.b16 %v4449
    %v4529 = vunpack.c.l.b16 %v4450
    %v4530 = vunpack.c.h.b16 %v4450
    %v4531 = vunpack.c.l.b16 %v4451
    %v4532 = vunpack.c.h.b16 %v4451
    %v4533 = vpack.c.b16 %v4503, %v4501
    %v4534 = vpack.c.b16 %v4504, %v4502
    %v4535 = vpack.c.b16 %v4507, %v4505
    %v4536 = vpack.c.b16 %v4508, %v4506
    %v4537 = vpack.c.b16 %v4511, %v4509
    %v4538 = vpack.c.b16 %v4512, %v4510
    %v4539 = vpack.c.b16 %v4515, %v4513
    %v4540 = vpack.c.b16 %v4516, %v4514
    %v4541 = vpack.c.b16 %v4519, %v4517
    %v4542 = vpack.c.b16 %v4520, %v4518
    %v4543 = vpack.c.b16 %v4523, %v4521
    %v4544 = vpack.c.b16 %v4524, %v4522
    %v4545 = vpack.c.b16 %v4527, %v4525
    %v4546 = vpack.c.b16 %v4528, %v4526
    %v4547 = vpack.c.b16 %v4531, %v4529
    %v4548 = vpack.c.b16 %v4532, %v4530
    %v4597 = vunpack.c.l.b16 %v4453
    %v4598 = vunpack.c.h.b16 %v4453
    %v4599 = vunpack.c.l.b16 %v4454
    %v4600 = vunpack.c.h.b16 %v4454
    %v4601 = vunpack.c.l.b16 %v4455
    %v4602 = vunpack.c.h.b16 %v4455
    %v4603 = vunpack.c.l.b16 %v4456
    %v4604 = vunpack.c.h.b16 %v4456
    %v4605 = vunpack.c.l.b16 %v4457
    %v4606 = vunpack.c.h.b16 %v4457
    %v4607 = vunpack.c.l.b16 %v4458
    %v4608 = vunpack.c.h.b16 %v4458
    %v4609 = vunpack.c.l.b16 %v4459
    %v4610 = vunpack.c.h.b16 %v4459
    %v4611 = vunpack.c.l.b16 %v4460
    %v4612 = vunpack.c.h.b16 %v4460
    %v4613 = vunpack.c.l.b16 %v4461
    %v4614 = vunpack.c.h.b16 %v4461
    %v4615 = vunpack.c.l.b16 %v4462
    %v4616 = vunpack.c.h.b16 %v4462
    %v4617 = vunpack.c.l.b16 %v4463
    %v4618 = vunpack.c.h.b16 %v4463
    %v4619 = vunpack.c.l.b16 %v4464
    %v4620 = vunpack.c.h.b16 %v4464
    %v4621 = vunpack.c.l.b16 %v4465
    %v4622 = vunpack.c.h.b16 %v4465
    %v4623 = vunpack.c.l.b16 %v4466
    %v4624 = vunpack.c.h.b16 %v4466
    %v4625 = vunpack.c.l.b16 %v4467
    %v4626 = vunpack.c.h.b16 %v4467
    %v4627 = vunpack.c.l.b16 %v4468
    %v4628 = vunpack.c.h.b16 %v4468
    %v4629 = vunpack.c.l.b16 %v4469
    %v4630 = vunpack.c.h.b16 %v4469
    %v4631 = vunpack.c.l.b16 %v4470
    %v4632 = vunpack.c.h.b16 %v4470
    %v4633 = vunpack.c.l.b16 %v4471
    %v4634 = vunpack.c.h.b16 %v4471
    %v4635 = vunpack.c.l.b16 %v4472
    %v4636 = vunpack.c.h.b16 %v4472
    %v4637 = vunpack.c.l.b16 %v4473
    %v4638 = vunpack.c.h.b16 %v4473
    %v4639 = vunpack.c.l.b16 %v4474
    %v4640 = vunpack.c.h.b16 %v4474
    %v4641 = vunpack.c.l.b16 %v4475
    %v4642 = vunpack.c.h.b16 %v4475
    %v4643 = vunpack.c.l.b16 %v4476
    %v4644 = vunpack.c.h.b16 %v4476
    %v4645 = vunpack.c.l.b16 %v4477
    %v4646 = vunpack.c.h.b16 %v4477
    %v4647 = vunpack.c.l.b16 %v4478
    %v4648 = vunpack.c.h.b16 %v4478
    %v4649 = vunpack.c.l.b16 %v4479
    %v4650 = vunpack.c.h.b16 %v4479
    %v4651 = vunpack.c.l.b16 %v4480
    %v4652 = vunpack.c.h.b16 %v4480
    %v4653 = vunpack.c.l.b16 %v4481
    %v4654 = vunpack.c.h.b16 %v4481
    %v4655 = vunpack.c.l.b16 %v4482
    %v4656 = vunpack.c.h.b16 %v4482
    %v4657 = vunpack.c.l.b16 %v4483
    %v4658 = vunpack.c.h.b16 %v4483
    %v4659 = vunpack.c.l.b16 %v4484
    %v4660 = vunpack.c.h.b16 %v4484
    %v4661 = vpack.c.b16 %v4599, %v4597
    %v4662 = vpack.c.b16 %v4600, %v4598
    %v4663 = vpack.c.b16 %v4603, %v4601
    %v4664 = vpack.c.b16 %v4604, %v4602
    %v4665 = vpack.c.b16 %v4607, %v4605
    %v4666 = vpack.c.b16 %v4608, %v4606
    %v4667 = vpack.c.b16 %v4611, %v4609
    %v4668 = vpack.c.b16 %v4612, %v4610
    %v4669 = vpack.c.b16 %v4615, %v4613
    %v4670 = vpack.c.b16 %v4616, %v4614
    %v4671 = vpack.c.b16 %v4619, %v4617
    %v4672 = vpack.c.b16 %v4620, %v4618
    %v4673 = vpack.c.b16 %v4623, %v4621
    %v4674 = vpack.c.b16 %v4624, %v4622
    %v4675 = vpack.c.b16 %v4627, %v4625
    %v4676 = vpack.c.b16 %v4628, %v4626
    %v4677 = vpack.c.b16 %v4631, %v4629
    %v4678 = vpack.c.b16 %v4632, %v4630
    %v4679 = vpack.c.b16 %v4635, %v4633
    %v4680 = vpack.c.b16 %v4636, %v4634
    %v4681 = vpack.c.b16 %v4639, %v4637
    %v4682 = vpack.c.b16 %v4640, %v4638
    %v4683 = vpack.c.b16 %v4643, %v4641
    %v4684 = vpack.c.b16 %v4644, %v4642
    %v4685 = vpack.c.b16 %v4647, %v4645
    %v4686 = vpack.c.b16 %v4648, %v4646
    %v4687 = vpack.c.b16 %v4651, %v4649
    %v4688 = vpack.c.b16 %v4652, %v4650
    %v4689 = vpack.c.b16 %v4655, %v4653
    %v4690 = vpack.c.b16 %v4656, %v4654
    %v4691 = vpack.c.b16 %v4659, %v4657
    %v4692 = vpack.c.b16 %v4660, %v4658
    %4725 = vmatprep.subr.bf16.mxu0 %v4676
    %4726 = vmatpush1.bf16.msra.mxu0 %v4675
    %4727 = vmatprep.subr.bf16.mxu0 %v4674
    %4728 = vmatpush1.bf16.msra.mxu0 %v4673
    %4729 = vmatprep.subr.bf16.mxu0 %v4672
    %4730 = vmatpush1.bf16.msra.mxu0 %v4671
    %4731 = vmatprep.subr.bf16.mxu0 %v4670
    %4732 = vmatpush1.bf16.msra.mxu0 %v4669
    %4733 = vmatprep.subr.bf16.mxu0 %v4668
    %4734 = vmatpush1.bf16.msra.mxu0 %v4667
    %4735 = vmatprep.subr.bf16.mxu0 %v4666
    %4736 = vmatpush1.bf16.msra.mxu0 %v4665
    %4737 = vmatprep.subr.bf16.mxu0 %v4664
    %4738 = vmatpush1.bf16.msra.mxu0 %v4663
    %4739 = vmatprep.subr.bf16.mxu0 %v4662
    %4740 = vmatpush1.bf16.msra.mxu0 %v4661
    %4741 = vmatprep.subr.bf16.mxu0 %v4692
    %4742 = vmatpush2.bf16.msra.mxu0 %v4691
    %4743 = vmatprep.subr.bf16.mxu0 %v4690
    %4744 = vmatpush2.bf16.msra.mxu0 %v4689
    %4745 = vmatprep.subr.bf16.mxu0 %v4688
    %4746 = vmatpush2.bf16.msra.mxu0 %v4687
    %4747 = vmatprep.subr.bf16.mxu0 %v4686
    %4748 = vmatpush2.bf16.msra.mxu0 %v4685
    %4749 = vmatprep.subr.bf16.mxu0 %v4684
    %4750 = vmatpush2.bf16.msra.mxu0 %v4683
    %4751 = vmatprep.subr.bf16.mxu0 %v4682
    %4752 = vmatpush2.bf16.msra.mxu0 %v4681
    %4753 = vmatprep.subr.bf16.mxu0 %v4680
    %4754 = vmatpush2.bf16.msra.mxu0 %v4679
    %4755 = vmatprep.subr.bf16.mxu0 %v4678
    %4756 = vmatpush2.bf16.msra.mxu0 %v4677
    %4757 = vmatprep.mubr.bf16.mxu0 %v4534
    %4758 = vmatmul.mubr.bf16.gmra.mxu0 %v4533
    %v4759 = vpop.f32.mrf.mxu0
    %v4760 = vadd.f32 0.0, %v4759
    %v4761 = vpop.f32.mrf.mxu0
    %v4762 = vadd.f32 0.0, %v4761
    %v4763 = vpop.f32.mrf.mxu0
    %v4764 = vadd.f32 0.0, %v4763
    %v4765 = vpop.f32.mrf.mxu0
    %v4766 = vadd.f32 0.0, %v4765
    %4767 = vmatprep.mubr.bf16.mxu0 %v4536
    %4768 = vmatmul.mubr.bf16.gmra.mxu0 %v4535
    %v4769 = vpop.f32.mrf.mxu0
    %v4770 = vadd.f32 0.0, %v4769
    %v4771 = vpop.f32.mrf.mxu0
    %v4772 = vadd.f32 0.0, %v4771
    %v4773 = vpop.f32.mrf.mxu0
    %v4774 = vadd.f32 0.0, %v4773
    %v4775 = vpop.f32.mrf.mxu0
    %v4776 = vadd.f32 0.0, %v4775
    %4777 = vmatprep.mubr.bf16.mxu0 %v4538
    %4778 = vmatmul.mubr.bf16.gmra.mxu0 %v4537
    %v4779 = vpop.f32.mrf.mxu0
    %v4780 = vadd.f32 0.0, %v4779
    %v4781 = vpop.f32.mrf.mxu0
    %v4782 = vadd.f32 0.0, %v4781
    %v4783 = vpop.f32.mrf.mxu0
    %v4784 = vadd.f32 0.0, %v4783
    %v4785 = vpop.f32.mrf.mxu0
    %v4786 = vadd.f32 0.0, %v4785
    %4787 = vmatprep.mubr.bf16.mxu0 %v4540
    %4788 = vmatmul.mubr.bf16.gmra.mxu0 %v4539
    %v4789 = vpop.f32.mrf.mxu0
    %v4790 = vadd.f32 0.0, %v4789
    %v4791 = vpop.f32.mrf.mxu0
    %v4792 = vadd.f32 0.0, %v4791
    %v4793 = vpop.f32.mrf.mxu0
    %v4794 = vadd.f32 0.0, %v4793
    %v4795 = vpop.f32.mrf.mxu0
    %v4796 = vadd.f32 0.0, %v4795
    %4797 = vmatprep.mubr.bf16.mxu0 %v4542
    %4798 = vmatmul.mubr.bf16.gmra.mxu0 %v4541
    %v4799 = vpop.f32.mrf.mxu0
    %v4800 = vadd.f32 0.0, %v4799
    %v4801 = vpop.f32.mrf.mxu0
    %v4802 = vadd.f32 0.0, %v4801
    %v4803 = vpop.f32.mrf.mxu0
    %v4804 = vadd.f32 0.0, %v4803
    %v4805 = vpop.f32.mrf.mxu0
    %v4806 = vadd.f32 0.0, %v4805
    %4807 = vmatprep.mubr.bf16.mxu0 %v4544
    %4808 = vmatmul.mubr.bf16.gmra.mxu0 %v4543
    %v4809 = vpop.f32.mrf.mxu0
    %v4810 = vadd.f32 0.0, %v4809
    %v4811 = vpop.f32.mrf.mxu0
    %v4812 = vadd.f32 0.0, %v4811
    %v4813 = vpop.f32.mrf.mxu0
    %v4814 = vadd.f32 0.0, %v4813
    %v4815 = vpop.f32.mrf.mxu0
    %v4816 = vadd.f32 0.0, %v4815
    %4817 = vmatprep.mubr.bf16.mxu0 %v4546
    %4818 = vmatmul.mubr.bf16.gmra.mxu0 %v4545
    %v4819 = vpop.f32.mrf.mxu0
    %v4820 = vadd.f32 0.0, %v4819
    %v4821 = vpop.f32.mrf.mxu0
    %v4822 = vadd.f32 0.0, %v4821
    %v4823 = vpop.f32.mrf.mxu0
    %v4824 = vadd.f32 0.0, %v4823
    %v4825 = vpop.f32.mrf.mxu0
    %v4826 = vadd.f32 0.0, %v4825
    %4827 = vmatprep.mubr.bf16.mxu0 %v4548
    %4828 = vmatmul.mubr.bf16.gmra.mxu0 %v4547
    %v4829 = vpop.f32.mrf.mxu0
    %v4830 = vadd.f32 0.0, %v4829
    %v4831 = vpop.f32.mrf.mxu0
    %v4832 = vadd.f32 0.0, %v4831
    %v4833 = vpop.f32.mrf.mxu0
    %v4834 = vadd.f32 0.0, %v4833
    %v4835 = vpop.f32.mrf.mxu0
    %v4836 = vadd.f32 0.0, %v4835
    %4837 = vdwg.mxu0
    %v4838 = vadd.f32 %v4403, %v4760
    %v4839 = vadd.f32 %v4404, %v4762
    %v4840 = vadd.f32 %v4405, %v4764
    %v4841 = vadd.f32 %v4406, %v4766
    %v4842 = vadd.f32 %v4407, %v4770
    %v4843 = vadd.f32 %v4408, %v4772
    %v4844 = vadd.f32 %v4409, %v4774
    %v4845 = vadd.f32 %v4410, %v4776
    %v4846 = vadd.f32 %v4411, %v4780
    %v4847 = vadd.f32 %v4412, %v4782
    %v4848 = vadd.f32 %v4413, %v4784
    %v4849 = vadd.f32 %v4414, %v4786
    %v4850 = vadd.f32 %v4415, %v4790
    %v4851 = vadd.f32 %v4416, %v4792
    %v4852 = vadd.f32 %v4417, %v4794
    %v4853 = vadd.f32 %v4418, %v4796
    %v4854 = vadd.f32 %v4419, %v4800
    %v4855 = vadd.f32 %v4420, %v4802
    %v4856 = vadd.f32 %v4421, %v4804
    %v4857 = vadd.f32 %v4422, %v4806
    %v4858 = vadd.f32 %v4423, %v4810
    %v4859 = vadd.f32 %v4424, %v4812
    %v4860 = vadd.f32 %v4425, %v4814
    %v4861 = vadd.f32 %v4426, %v4816
    %v4862 = vadd.f32 %v4427, %v4820
    %v4863 = vadd.f32 %v4428, %v4822
    %v4864 = vadd.f32 %v4429, %v4824
    %v4865 = vadd.f32 %v4430, %v4826
    %v4866 = vadd.f32 %v4431, %v4830
    %v4867 = vadd.f32 %v4432, %v4832
    %v4868 = vadd.f32 %v4433, %v4834
    %v4869 = vadd.f32 %v4434, %v4836
    %v4870 = vld [vmem:[%s4435] sm:$0xff]
    %v4871 = vld [vmem:[%s4435 + $0x8] sm:$0x11]
    %v4872 = vld [vmem:[%s4435 + $0x10] sm:$0xff]
    %v4873 = vld [vmem:[%s4435 + $0x18] sm:$0x11]
    %v4874 = vld [vmem:[%s4435 + $0x20] sm:$0xff]
    %v4875 = vld [vmem:[%s4435 + $0x28] sm:$0x11]
    %v4876 = vld [vmem:[%s4435 + $0x30] sm:$0xff]
    %v4877 = vld [vmem:[%s4435 + $0x38] sm:$0x11]
    %v4878 = vld [vmem:[%s4435 + $0x40] sm:$0xff]
    %v4879 = vld [vmem:[%s4435 + $0x48] sm:$0x11]
    %v4880 = vld [vmem:[%s4435 + $0x50] sm:$0xff]
    %v4881 = vld [vmem:[%s4435 + $0x58] sm:$0x11]
    %v4882 = vld [vmem:[%s4435 + $0x60] sm:$0xff]
    %v4883 = vld [vmem:[%s4435 + $0x68] sm:$0x11]
    %v4884 = vld [vmem:[%s4435 + $0x70] sm:$0xff]
    %v4885 = vld [vmem:[%s4435 + $0x78] sm:$0x11]
    %v4886 = vld [vmem:[%s4435 + $0xa0] sm:$0xff]
    %v4887 = vld [vmem:[%s4435 + $0xa8] sm:$0x11]
    %v4888 = vld [vmem:[%s4435 + $0xb0] sm:$0xff]
    %v4889 = vld [vmem:[%s4435 + $0xb8] sm:$0x11]
    %v4890 = vld [vmem:[%s4435 + $0xc0] sm:$0xff]
    %v4891 = vld [vmem:[%s4435 + $0xc8] sm:$0x11]
    %v4892 = vld [vmem:[%s4435 + $0xd0] sm:$0xff]
    %v4893 = vld [vmem:[%s4435 + $0xd8] sm:$0x11]
    %v4894 = vld [vmem:[%s4435 + $0xe0] sm:$0xff]
    %v4895 = vld [vmem:[%s4435 + $0xe8] sm:$0x11]
    %v4896 = vld [vmem:[%s4435 + $0xf0] sm:$0xff]
    %v4897 = vld [vmem:[%s4435 + $0xf8] sm:$0x11]
    %v4898 = vld [vmem:[%s4435 + $0x100] sm:$0xff]
    %v4899 = vld [vmem:[%s4435 + $0x108] sm:$0x11]
    %v4900 = vld [vmem:[%s4435 + $0x110] sm:$0xff]
    %v4901 = vld [vmem:[%s4435 + $0x118] sm:$0x11]
    %v4903 = vshrl.u32 %v4870, 16
    %v4905 = vrot.slane %v4903, 4
    %v4906 = vshll.u32 %v4870, 16
    %v4908 = vrot.slane %v4906, 5
    %v4909 = vor.u32 %v4905, %v4908
    %v4910 = vrot.slane %v4909, 4
    %v4912 = vshll.u32 %v4871, 16
    %v4914 = vrot.slane %v4912, 5
    %v4915 = vsel %vm1364, %v4910, %v4914
    %v4917 = vshrl.u32 %v4872, 16
    %v4919 = vrot.slane %v4917, 4
    %v4920 = vshll.u32 %v4872, 16
    %v4922 = vrot.slane %v4920, 5
    %v4923 = vor.u32 %v4919, %v4922
    %v4924 = vrot.slane %v4923, 4
    %v4926 = vshll.u32 %v4873, 16
    %v4928 = vrot.slane %v4926, 5
    %v4929 = vsel %vm1364, %v4924, %v4928
    %v4931 = vshrl.u32 %v4874, 16
    %v4933 = vrot.slane %v4931, 4
    %v4934 = vshll.u32 %v4874, 16
    %v4936 = vrot.slane %v4934, 5
    %v4937 = vor.u32 %v4933, %v4936
    %v4938 = vrot.slane %v4937, 4
    %v4940 = vshll.u32 %v4875, 16
    %v4942 = vrot.slane %v4940, 5
    %v4943 = vsel %vm1364, %v4938, %v4942
    %v4945 = vshrl.u32 %v4876, 16
    %v4947 = vrot.slane %v4945, 4
    %v4948 = vshll.u32 %v4876, 16
    %v4950 = vrot.slane %v4948, 5
    %v4951 = vor.u32 %v4947, %v4950
    %v4952 = vrot.slane %v4951, 4
    %v4954 = vshll.u32 %v4877, 16
    %v4956 = vrot.slane %v4954, 5
    %v4957 = vsel %vm1364, %v4952, %v4956
    %v4959 = vshrl.u32 %v4878, 16
    %v4961 = vrot.slane %v4959, 4
    %v4962 = vshll.u32 %v4878, 16
    %v4964 = vrot.slane %v4962, 5
    %v4965 = vor.u32 %v4961, %v4964
    %v4966 = vrot.slane %v4965, 4
    %v4968 = vshll.u32 %v4879, 16
    %v4970 = vrot.slane %v4968, 5
    %v4971 = vsel %vm1364, %v4966, %v4970
    %v4973 = vshrl.u32 %v4880, 16
    %v4975 = vrot.slane %v4973, 4
    %v4976 = vshll.u32 %v4880, 16
    %v4978 = vrot.slane %v4976, 5
    %v4979 = vor.u32 %v4975, %v4978
    %v4980 = vrot.slane %v4979, 4
    %v4982 = vshll.u32 %v4881, 16
    %v4984 = vrot.slane %v4982, 5
    %v4985 = vsel %vm1364, %v4980, %v4984
    %v4987 = vshrl.u32 %v4882, 16
    %v4989 = vrot.slane %v4987, 4
    %v4990 = vshll.u32 %v4882, 16
    %v4992 = vrot.slane %v4990, 5
    %v4993 = vor.u32 %v4989, %v4992
    %v4994 = vrot.slane %v4993, 4
    %v4996 = vshll.u32 %v4883, 16
    %v4998 = vrot.slane %v4996, 5
    %v4999 = vsel %vm1364, %v4994, %v4998
    %v5001 = vshrl.u32 %v4884, 16
    %v5003 = vrot.slane %v5001, 4
    %v5004 = vshll.u32 %v4884, 16
    %v5006 = vrot.slane %v5004, 5
    %v5007 = vor.u32 %v5003, %v5006
    %v5008 = vrot.slane %v5007, 4
    %v5010 = vshll.u32 %v4885, 16
    %v5012 = vrot.slane %v5010, 5
    %v5013 = vsel %vm1364, %v5008, %v5012
    %v5015 = vshrl.u32 %v4886, 16
    %v5017 = vrot.slane %v5015, 4
    %v5018 = vshll.u32 %v4886, 16
    %v5020 = vrot.slane %v5018, 5
    %v5021 = vor.u32 %v5017, %v5020
    %v5022 = vrot.slane %v5021, 4
    %v5024 = vshll.u32 %v4887, 16
    %v5026 = vrot.slane %v5024, 5
    %v5027 = vsel %vm1364, %v5022, %v5026
    %v5029 = vshrl.u32 %v4888, 16
    %v5031 = vrot.slane %v5029, 4
    %v5032 = vshll.u32 %v4888, 16
    %v5034 = vrot.slane %v5032, 5
    %v5035 = vor.u32 %v5031, %v5034
    %v5036 = vrot.slane %v5035, 4
    %v5038 = vshll.u32 %v4889, 16
    %v5040 = vrot.slane %v5038, 5
    %v5041 = vsel %vm1364, %v5036, %v5040
    %v5043 = vshrl.u32 %v4890, 16
    %v5045 = vrot.slane %v5043, 4
    %v5046 = vshll.u32 %v4890, 16
    %v5048 = vrot.slane %v5046, 5
    %v5049 = vor.u32 %v5045, %v5048
    %v5050 = vrot.slane %v5049, 4
    %v5052 = vshll.u32 %v4891, 16
    %v5054 = vrot.slane %v5052, 5
    %v5055 = vsel %vm1364, %v5050, %v5054
    %v5057 = vshrl.u32 %v4892, 16
    %v5059 = vrot.slane %v5057, 4
    %v5060 = vshll.u32 %v4892, 16
    %v5062 = vrot.slane %v5060, 5
    %v5063 = vor.u32 %v5059, %v5062
    %v5064 = vrot.slane %v5063, 4
    %v5066 = vshll.u32 %v4893, 16
    %v5068 = vrot.slane %v5066, 5
    %v5069 = vsel %vm1364, %v5064, %v5068
    %v5071 = vshrl.u32 %v4894, 16
    %v5073 = vrot.slane %v5071, 4
    %v5074 = vshll.u32 %v4894, 16
    %v5076 = vrot.slane %v5074, 5
    %v5077 = vor.u32 %v5073, %v5076
    %v5078 = vrot.slane %v5077, 4
    %v5080 = vshll.u32 %v4895, 16
    %v5082 = vrot.slane %v5080, 5
    %v5083 = vsel %vm1364, %v5078, %v5082
    %v5085 = vshrl.u32 %v4896, 16
    %v5087 = vrot.slane %v5085, 4
    %v5088 = vshll.u32 %v4896, 16
    %v5090 = vrot.slane %v5088, 5
    %v5091 = vor.u32 %v5087, %v5090
    %v5092 = vrot.slane %v5091, 4
    %v5094 = vshll.u32 %v4897, 16
    %v5096 = vrot.slane %v5094, 5
    %v5097 = vsel %vm1364, %v5092, %v5096
    %v5099 = vshrl.u32 %v4898, 16
    %v5101 = vrot.slane %v5099, 4
    %v5102 = vshll.u32 %v4898, 16
    %v5104 = vrot.slane %v5102, 5
    %v5105 = vor.u32 %v5101, %v5104
    %v5106 = vrot.slane %v5105, 4
    %v5108 = vshll.u32 %v4899, 16
    %v5110 = vrot.slane %v5108, 5
    %v5111 = vsel %vm1364, %v5106, %v5110
    %v5113 = vshrl.u32 %v4900, 16
    %v5115 = vrot.slane %v5113, 4
    %v5116 = vshll.u32 %v4900, 16
    %v5118 = vrot.slane %v5116, 5
    %v5119 = vor.u32 %v5115, %v5118
    %v5120 = vrot.slane %v5119, 4
    %v5122 = vshll.u32 %v4901, 16
    %v5124 = vrot.slane %v5122, 5
    %v5125 = vsel %vm1364, %v5120, %v5124
    %s5126 = scalar_lea.vmem [#allocation12], 1792
    %v5127 = vld [vmem:[%s5126] sm:$0xff]
    %v5128 = vld [vmem:[%s5126 + $0x8] sm:$0xff]
    %v5129 = vld [vmem:[%s5126 + $0x10] sm:$0xff]
    %v5130 = vld [vmem:[%s5126 + $0x18] sm:$0xff]
    %v5131 = vld [vmem:[%s5126 + $0x20] sm:$0xff]
    %v5132 = vld [vmem:[%s5126 + $0x28] sm:$0xff]
    %v5133 = vld [vmem:[%s5126 + $0x30] sm:$0xff]
    %v5134 = vld [vmem:[%s5126 + $0x38] sm:$0xff]
    %v5135 = vld [vmem:[%s5126 + $0x40] sm:$0xff]
    %v5136 = vld [vmem:[%s5126 + $0x48] sm:$0xff]
    %v5137 = vld [vmem:[%s5126 + $0x50] sm:$0xff]
    %v5138 = vld [vmem:[%s5126 + $0x58] sm:$0xff]
    %v5139 = vld [vmem:[%s5126 + $0x60] sm:$0xff]
    %v5140 = vld [vmem:[%s5126 + $0x68] sm:$0xff]
    %v5141 = vld [vmem:[%s5126 + $0x70] sm:$0xff]
    %v5142 = vld [vmem:[%s5126 + $0x78] sm:$0xff]
    %v5143 = vld [vmem:[%s5126 + $0x80] sm:$0xff]
    %v5144 = vld [vmem:[%s5126 + $0x88] sm:$0xff]
    %v5145 = vld [vmem:[%s5126 + $0x90] sm:$0xff]
    %v5146 = vld [vmem:[%s5126 + $0x98] sm:$0xff]
    %v5147 = vld [vmem:[%s5126 + $0xa0] sm:$0xff]
    %v5148 = vld [vmem:[%s5126 + $0xa8] sm:$0xff]
    %v5149 = vld [vmem:[%s5126 + $0xb0] sm:$0xff]
    %v5150 = vld [vmem:[%s5126 + $0xb8] sm:$0xff]
    %v5151 = vld [vmem:[%s5126 + $0xc0] sm:$0xff]
    %v5152 = vld [vmem:[%s5126 + $0xc8] sm:$0xff]
    %v5153 = vld [vmem:[%s5126 + $0xd0] sm:$0xff]
    %v5154 = vld [vmem:[%s5126 + $0xd8] sm:$0xff]
    %v5155 = vld [vmem:[%s5126 + $0xe0] sm:$0xff]
    %v5156 = vld [vmem:[%s5126 + $0xe8] sm:$0xff]
    %v5157 = vld [vmem:[%s5126 + $0xf0] sm:$0xff]
    %v5158 = vld [vmem:[%s5126 + $0xf8] sm:$0xff]
    %v5159 = vunpack.c.l.b16 %v4915
    %v5160 = vunpack.c.h.b16 %v4915
    %v5161 = vunpack.c.l.b16 %v4929
    %v5162 = vunpack.c.h.b16 %v4929
    %v5163 = vunpack.c.l.b16 %v4943
    %v5164 = vunpack.c.h.b16 %v4943
    %v5165 = vunpack.c.l.b16 %v4957
    %v5166 = vunpack.c.h.b16 %v4957
    %v5167 = vunpack.c.l.b16 %v4971
    %v5168 = vunpack.c.h.b16 %v4971
    %v5169 = vunpack.c.l.b16 %v4985
    %v5170 = vunpack.c.h.b16 %v4985
    %v5171 = vunpack.c.l.b16 %v4999
    %v5172 = vunpack.c.h.b16 %v4999
    %v5173 = vunpack.c.l.b16 %v5013
    %v5174 = vunpack.c.h.b16 %v5013
    %v5175 = vunpack.c.l.b16 %v5027
    %v5176 = vunpack.c.h.b16 %v5027
    %v5177 = vunpack.c.l.b16 %v5041
    %v5178 = vunpack.c.h.b16 %v5041
    %v5179 = vunpack.c.l.b16 %v5055
    %v5180 = vunpack.c.h.b16 %v5055
    %v5181 = vunpack.c.l.b16 %v5069
    %v5182 = vunpack.c.h.b16 %v5069
    %v5183 = vunpack.c.l.b16 %v5083
    %v5184 = vunpack.c.h.b16 %v5083
    %v5185 = vunpack.c.l.b16 %v5097
    %v5186 = vunpack.c.h.b16 %v5097
    %v5187 = vunpack.c.l.b16 %v5111
    %v5188 = vunpack.c.h.b16 %v5111
    %v5189 = vunpack.c.l.b16 %v5125
    %v5190 = vunpack.c.h.b16 %v5125
    %v5191 = vpack.c.b16 %v5161, %v5159
    %v5192 = vpack.c.b16 %v5162, %v5160
    %v5193 = vpack.c.b16 %v5165, %v5163
    %v5194 = vpack.c.b16 %v5166, %v5164
    %v5195 = vpack.c.b16 %v5169, %v5167
    %v5196 = vpack.c.b16 %v5170, %v5168
    %v5197 = vpack.c.b16 %v5173, %v5171
    %v5198 = vpack.c.b16 %v5174, %v5172
    %v5199 = vpack.c.b16 %v5177, %v5175
    %v5200 = vpack.c.b16 %v5178, %v5176
    %v5201 = vpack.c.b16 %v5181, %v5179
    %v5202 = vpack.c.b16 %v5182, %v5180
    %v5203 = vpack.c.b16 %v5185, %v5183
    %v5204 = vpack.c.b16 %v5186, %v5184
    %v5205 = vpack.c.b16 %v5189, %v5187
    %v5206 = vpack.c.b16 %v5190, %v5188
    %v5255 = vunpack.c.l.b16 %v5127
    %v5256 = vunpack.c.h.b16 %v5127
    %v5257 = vunpack.c.l.b16 %v5128
    %v5258 = vunpack.c.h.b16 %v5128
    %v5259 = vunpack.c.l.b16 %v5129
    %v5260 = vunpack.c.h.b16 %v5129
    %v5261 = vunpack.c.l.b16 %v5130
    %v5262 = vunpack.c.h.b16 %v5130
    %v5263 = vunpack.c.l.b16 %v5131
    %v5264 = vunpack.c.h.b16 %v5131
    %v5265 = vunpack.c.l.b16 %v5132
    %v5266 = vunpack.c.h.b16 %v5132
    %v5267 = vunpack.c.l.b16 %v5133
    %v5268 = vunpack.c.h.b16 %v5133
    %v5269 = vunpack.c.l.b16 %v5134
    %v5270 = vunpack.c.h.b16 %v5134
    %v5271 = vunpack.c.l.b16 %v5135
    %v5272 = vunpack.c.h.b16 %v5135
    %v5273 = vunpack.c.l.b16 %v5136
    %v5274 = vunpack.c.h.b16 %v5136
    %v5275 = vunpack.c.l.b16 %v5137
    %v5276 = vunpack.c.h.b16 %v5137
    %v5277 = vunpack.c.l.b16 %v5138
    %v5278 = vunpack.c.h.b16 %v5138
    %v5279 = vunpack.c.l.b16 %v5139
    %v5280 = vunpack.c.h.b16 %v5139
    %v5281 = vunpack.c.l.b16 %v5140
    %v5282 = vunpack.c.h.b16 %v5140
    %v5283 = vunpack.c.l.b16 %v5141
    %v5284 = vunpack.c.h.b16 %v5141
    %v5285 = vunpack.c.l.b16 %v5142
    %v5286 = vunpack.c.h.b16 %v5142
    %v5287 = vunpack.c.l.b16 %v5143
    %v5288 = vunpack.c.h.b16 %v5143
    %v5289 = vunpack.c.l.b16 %v5144
    %v5290 = vunpack.c.h.b16 %v5144
    %v5291 = vunpack.c.l.b16 %v5145
    %v5292 = vunpack.c.h.b16 %v5145
    %v5293 = vunpack.c.l.b16 %v5146
    %v5294 = vunpack.c.h.b16 %v5146
    %v5295 = vunpack.c.l.b16 %v5147
    %v5296 = vunpack.c.h.b16 %v5147
    %v5297 = vunpack.c.l.b16 %v5148
    %v5298 = vunpack.c.h.b16 %v5148
    %v5299 = vunpack.c.l.b16 %v5149
    %v5300 = vunpack.c.h.b16 %v5149
    %v5301 = vunpack.c.l.b16 %v5150
    %v5302 = vunpack.c.h.b16 %v5150
    %v5303 = vunpack.c.l.b16 %v5151
    %v5304 = vunpack.c.h.b16 %v5151
    %v5305 = vunpack.c.l.b16 %v5152
    %v5306 = vunpack.c.h.b16 %v5152
    %v5307 = vunpack.c.l.b16 %v5153
    %v5308 = vunpack.c.h.b16 %v5153
    %v5309 = vunpack.c.l.b16 %v5154
    %v5310 = vunpack.c.h.b16 %v5154
    %v5311 = vunpack.c.l.b16 %v5155
    %v5312 = vunpack.c.h.b16 %v5155
    %v5313 = vunpack.c.l.b16 %v5156
    %v5314 = vunpack.c.h.b16 %v5156
    %v5315 = vunpack.c.l.b16 %v5157
    %v5316 = vunpack.c.h.b16 %v5157
    %v5317 = vunpack.c.l.b16 %v5158
    %v5318 = vunpack.c.h.b16 %v5158
    %v5319 = vpack.c.b16 %v5257, %v5255
    %v5320 = vpack.c.b16 %v5258, %v5256
    %v5321 = vpack.c.b16 %v5261, %v5259
    %v5322 = vpack.c.b16 %v5262, %v5260
    %v5323 = vpack.c.b16 %v5265, %v5263
    %v5324 = vpack.c.b16 %v5266, %v5264
    %v5325 = vpack.c.b16 %v5269, %v5267
    %v5326 = vpack.c.b16 %v5270, %v5268
    %v5327 = vpack.c.b16 %v5273, %v5271
    %v5328 = vpack.c.b16 %v5274, %v5272
    %v5329 = vpack.c.b16 %v5277, %v5275
    %v5330 = vpack.c.b16 %v5278, %v5276
    %v5331 = vpack.c.b16 %v5281, %v5279
    %v5332 = vpack.c.b16 %v5282, %v5280
    %v5333 = vpack.c.b16 %v5285, %v5283
    %v5334 = vpack.c.b16 %v5286, %v5284
    %v5335 = vpack.c.b16 %v5289, %v5287
    %v5336 = vpack.c.b16 %v5290, %v5288
    %v5337 = vpack.c.b16 %v5293, %v5291
    %v5338 = vpack.c.b16 %v5294, %v5292
    %v5339 = vpack.c.b16 %v5297, %v5295
    %v5340 = vpack.c.b16 %v5298, %v5296
    %v5341 = vpack.c.b16 %v5301, %v5299
    %v5342 = vpack.c.b16 %v5302, %v5300
    %v5343 = vpack.c.b16 %v5305, %v5303
    %v5344 = vpack.c.b16 %v5306, %v5304
    %v5345 = vpack.c.b16 %v5309, %v5307
    %v5346 = vpack.c.b16 %v5310, %v5308
    %v5347 = vpack.c.b16 %v5313, %v5311
    %v5348 = vpack.c.b16 %v5314, %v5312
    %v5349 = vpack.c.b16 %v5317, %v5315
    %v5350 = vpack.c.b16 %v5318, %v5316
    %5383 = vmatprep.subr.bf16.mxu0 %v5334
    %5384 = vmatpush1.bf16.msra.mxu0 %v5333
    %5385 = vmatprep.subr.bf16.mxu0 %v5332
    %5386 = vmatpush1.bf16.msra.mxu0 %v5331
    %5387 = vmatprep.subr.bf16.mxu0 %v5330
    %5388 = vmatpush1.bf16.msra.mxu0 %v5329
    %5389 = vmatprep.subr.bf16.mxu0 %v5328
    %5390 = vmatpush1.bf16.msra.mxu0 %v5327
    %5391 = vmatprep.subr.bf16.mxu0 %v5326
    %5392 = vmatpush1.bf16.msra.mxu0 %v5325
    %5393 = vmatprep.subr.bf16.mxu0 %v5324
    %5394 = vmatpush1.bf16.msra.mxu0 %v5323
    %5395 = vmatprep.subr.bf16.mxu0 %v5322
    %5396 = vmatpush1.bf16.msra.mxu0 %v5321
    %5397 = vmatprep.subr.bf16.mxu0 %v5320
    %5398 = vmatpush1.bf16.msra.mxu0 %v5319
    %5399 = vmatprep.subr.bf16.mxu0 %v5350
    %5400 = vmatpush2.bf16.msra.mxu0 %v5349
    %5401 = vmatprep.subr.bf16.mxu0 %v5348
    %5402 = vmatpush2.bf16.msra.mxu0 %v5347
    %5403 = vmatprep.subr.bf16.mxu0 %v5346
    %5404 = vmatpush2.bf16.msra.mxu0 %v5345
    %5405 = vmatprep.subr.bf16.mxu0 %v5344
    %5406 = vmatpush2.bf16.msra.mxu0 %v5343
    %5407 = vmatprep.subr.bf16.mxu0 %v5342
    %5408 = vmatpush2.bf16.msra.mxu0 %v5341
    %5409 = vmatprep.subr.bf16.mxu0 %v5340
    %5410 = vmatpush2.bf16.msra.mxu0 %v5339
    %5411 = vmatprep.subr.bf16.mxu0 %v5338
    %5412 = vmatpush2.bf16.msra.mxu0 %v5337
    %5413 = vmatprep.subr.bf16.mxu0 %v5336
    %5414 = vmatpush2.bf16.msra.mxu0 %v5335
    %5415 = vmatprep.mubr.bf16.mxu0 %v5192
    %5416 = vmatmul.mubr.bf16.gmra.mxu0 %v5191
    %v5417 = vpop.f32.mrf.mxu0
    %v5418 = vadd.f32 0.0, %v5417
    %v5419 = vpop.f32.mrf.mxu0
    %v5420 = vadd.f32 0.0, %v5419
    %v5421 = vpop.f32.mrf.mxu0
    %v5422 = vadd.f32 0.0, %v5421
    %v5423 = vpop.f32.mrf.mxu0
    %v5424 = vadd.f32 0.0, %v5423
    %5425 = vmatprep.mubr.bf16.mxu0 %v5194
    %5426 = vmatmul.mubr.bf16.gmra.mxu0 %v5193
    %v5427 = vpop.f32.mrf.mxu0
    %v5428 = vadd.f32 0.0, %v5427
    %v5429 = vpop.f32.mrf.mxu0
    %v5430 = vadd.f32 0.0, %v5429
    %v5431 = vpop.f32.mrf.mxu0
    %v5432 = vadd.f32 0.0, %v5431
    %v5433 = vpop.f32.mrf.mxu0
    %v5434 = vadd.f32 0.0, %v5433
    %5435 = vmatprep.mubr.bf16.mxu0 %v5196
    %5436 = vmatmul.mubr.bf16.gmra.mxu0 %v5195
    %v5437 = vpop.f32.mrf.mxu0
    %v5438 = vadd.f32 0.0, %v5437
    %v5439 = vpop.f32.mrf.mxu0
    %v5440 = vadd.f32 0.0, %v5439
    %v5441 = vpop.f32.mrf.mxu0
    %v5442 = vadd.f32 0.0, %v5441
    %v5443 = vpop.f32.mrf.mxu0
    %v5444 = vadd.f32 0.0, %v5443
    %5445 = vmatprep.mubr.bf16.mxu0 %v5198
    %5446 = vmatmul.mubr.bf16.gmra.mxu0 %v5197
    %v5447 = vpop.f32.mrf.mxu0
    %v5448 = vadd.f32 0.0, %v5447
    %v5449 = vpop.f32.mrf.mxu0
    %v5450 = vadd.f32 0.0, %v5449
    %v5451 = vpop.f32.mrf.mxu0
    %v5452 = vadd.f32 0.0, %v5451
    %v5453 = vpop.f32.mrf.mxu0
    %v5454 = vadd.f32 0.0, %v5453
    %5455 = vmatprep.mubr.bf16.mxu0 %v5200
    %5456 = vmatmul.mubr.bf16.gmra.mxu0 %v5199
    %v5457 = vpop.f32.mrf.mxu0
    %v5458 = vadd.f32 0.0, %v5457
    %v5459 = vpop.f32.mrf.mxu0
    %v5460 = vadd.f32 0.0, %v5459
    %v5461 = vpop.f32.mrf.mxu0
    %v5462 = vadd.f32 0.0, %v5461
    %v5463 = vpop.f32.mrf.mxu0
    %v5464 = vadd.f32 0.0, %v5463
    %5465 = vmatprep.mubr.bf16.mxu0 %v5202
    %5466 = vmatmul.mubr.bf16.gmra.mxu0 %v5201
    %v5467 = vpop.f32.mrf.mxu0
    %v5468 = vadd.f32 0.0, %v5467
    %v5469 = vpop.f32.mrf.mxu0
    %v5470 = vadd.f32 0.0, %v5469
    %v5471 = vpop.f32.mrf.mxu0
    %v5472 = vadd.f32 0.0, %v5471
    %v5473 = vpop.f32.mrf.mxu0
    %v5474 = vadd.f32 0.0, %v5473
    %5475 = vmatprep.mubr.bf16.mxu0 %v5204
    %5476 = vmatmul.mubr.bf16.gmra.mxu0 %v5203
    %v5477 = vpop.f32.mrf.mxu0
    %v5478 = vadd.f32 0.0, %v5477
    %v5479 = vpop.f32.mrf.mxu0
    %v5480 = vadd.f32 0.0, %v5479
    %v5481 = vpop.f32.mrf.mxu0
    %v5482 = vadd.f32 0.0, %v5481
    %v5483 = vpop.f32.mrf.mxu0
    %v5484 = vadd.f32 0.0, %v5483
    %5485 = vmatprep.mubr.bf16.mxu0 %v5206
    %5486 = vmatmul.mubr.bf16.gmra.mxu0 %v5205
    %v5487 = vpop.f32.mrf.mxu0
    %v5488 = vadd.f32 0.0, %v5487
    %v5489 = vpop.f32.mrf.mxu0
    %v5490 = vadd.f32 0.0, %v5489
    %v5491 = vpop.f32.mrf.mxu0
    %v5492 = vadd.f32 0.0, %v5491
    %v5493 = vpop.f32.mrf.mxu0
    %v5494 = vadd.f32 0.0, %v5493
    %5495 = vdwg.mxu0
    %v5496 = vadd.f32 %v4838, %v5418
    %v5497 = vadd.f32 %v4839, %v5420
    %v5498 = vadd.f32 %v4840, %v5422
    %v5499 = vadd.f32 %v4841, %v5424
    %v5500 = vadd.f32 %v4842, %v5428
    %v5501 = vadd.f32 %v4843, %v5430
    %v5502 = vadd.f32 %v4844, %v5432
    %v5503 = vadd.f32 %v4845, %v5434
    %v5504 = vadd.f32 %v4846, %v5438
    %v5505 = vadd.f32 %v4847, %v5440
    %v5506 = vadd.f32 %v4848, %v5442
    %v5507 = vadd.f32 %v4849, %v5444
    %v5508 = vadd.f32 %v4850, %v5448
    %v5509 = vadd.f32 %v4851, %v5450
    %v5510 = vadd.f32 %v4852, %v5452
    %v5511 = vadd.f32 %v4853, %v5454
    %v5512 = vadd.f32 %v4854, %v5458
    %v5513 = vadd.f32 %v4855, %v5460
    %v5514 = vadd.f32 %v4856, %v5462
    %v5515 = vadd.f32 %v4857, %v5464
    %v5516 = vadd.f32 %v4858, %v5468
    %v5517 = vadd.f32 %v4859, %v5470
    %v5518 = vadd.f32 %v4860, %v5472
    %v5519 = vadd.f32 %v4861, %v5474
    %v5520 = vadd.f32 %v4862, %v5478
    %v5521 = vadd.f32 %v4863, %v5480
    %v5522 = vadd.f32 %v4864, %v5482
    %v5523 = vadd.f32 %v4865, %v5484
    %v5524 = vadd.f32 %v4866, %v5488
    %v5525 = vadd.f32 %v4867, %v5490
    %v5526 = vadd.f32 %v4868, %v5492
    %v5527 = vadd.f32 %v4869, %v5494
    %v5528 = vld [vmem:[%s4435] sm:$0xee]
    %v5529 = vld [vmem:[%s4435 + $0x10] sm:$0xee]
    %v5530 = vld [vmem:[%s4435 + $0x20] sm:$0xee]
    %v5531 = vld [vmem:[%s4435 + $0x30] sm:$0xee]
    %v5532 = vld [vmem:[%s4435 + $0x40] sm:$0xee]
    %v5533 = vld [vmem:[%s4435 + $0x50] sm:$0xee]
    %v5534 = vld [vmem:[%s4435 + $0x60] sm:$0xee]
    %v5535 = vld [vmem:[%s4435 + $0x70] sm:$0xee]
    %v5536 = vld [vmem:[%s4435 + $0xa0] sm:$0xee]
    %v5537 = vld [vmem:[%s4435 + $0xb0] sm:$0xee]
    %v5538 = vld [vmem:[%s4435 + $0xc0] sm:$0xee]
    %v5539 = vld [vmem:[%s4435 + $0xd0] sm:$0xee]
    %v5540 = vld [vmem:[%s4435 + $0xe0] sm:$0xee]
    %v5541 = vld [vmem:[%s4435 + $0xf0] sm:$0xee]
    %v5542 = vld [vmem:[%s4435 + $0x100] sm:$0xee]
    %v5543 = vld [vmem:[%s4435 + $0x110] sm:$0xee]
    %v5576 = vrot.slane %v5528, 5
    %v5577 = vrot.slane %v5576, 4
    %v5578 = vrot.slane %v4871, 5
    %v5579 = vsel %vm2362, %v5577, %v5578
    %v5580 = vrot.slane %v5529, 5
    %v5581 = vrot.slane %v5580, 4
    %v5582 = vrot.slane %v4873, 5
    %v5583 = vsel %vm2362, %v5581, %v5582
    %v5584 = vrot.slane %v5530, 5
    %v5585 = vrot.slane %v5584, 4
    %v5586 = vrot.slane %v4875, 5
    %v5587 = vsel %vm2362, %v5585, %v5586
    %v5588 = vrot.slane %v5531, 5
    %v5589 = vrot.slane %v5588, 4
    %v5590 = vrot.slane %v4877, 5
    %v5591 = vsel %vm2362, %v5589, %v5590
    %v5592 = vrot.slane %v5532, 5
    %v5593 = vrot.slane %v5592, 4
    %v5594 = vrot.slane %v4879, 5
    %v5595 = vsel %vm2362, %v5593, %v5594
    %v5596 = vrot.slane %v5533, 5
    %v5597 = vrot.slane %v5596, 4
    %v5598 = vrot.slane %v4881, 5
    %v5599 = vsel %vm2362, %v5597, %v5598
    %v5600 = vrot.slane %v5534, 5
    %v5601 = vrot.slane %v5600, 4
    %v5602 = vrot.slane %v4883, 5
    %v5603 = vsel %vm2362, %v5601, %v5602
    %v5604 = vrot.slane %v5535, 5
    %v5605 = vrot.slane %v5604, 4
    %v5606 = vrot.slane %v4885, 5
    %v5607 = vsel %vm2362, %v5605, %v5606
    %v5608 = vrot.slane %v5536, 5
    %v5609 = vrot.slane %v5608, 4
    %v5610 = vrot.slane %v4887, 5
    %v5611 = vsel %vm2362, %v5609, %v5610
    %v5612 = vrot.slane %v5537, 5
    %v5613 = vrot.slane %v5612, 4
    %v5614 = vrot.slane %v4889, 5
    %v5615 = vsel %vm2362, %v5613, %v5614
    %v5616 = vrot.slane %v5538, 5
    %v5617 = vrot.slane %v5616, 4
    %v5618 = vrot.slane %v4891, 5
    %v5619 = vsel %vm2362, %v5617, %v5618
    %v5620 = vrot.slane %v5539, 5
    %v5621 = vrot.slane %v5620, 4
    %v5622 = vrot.slane %v4893, 5
    %v5623 = vsel %vm2362, %v5621, %v5622
    %v5624 = vrot.slane %v5540, 5
    %v5625 = vrot.slane %v5624, 4
    %v5626 = vrot.slane %v4895, 5
    %v5627 = vsel %vm2362, %v5625, %v5626
    %v5628 = vrot.slane %v5541, 5
    %v5629 = vrot.slane %v5628, 4
    %v5630 = vrot.slane %v4897, 5
    %v5631 = vsel %vm2362, %v5629, %v5630
    %v5632 = vrot.slane %v5542, 5
    %v5633 = vrot.slane %v5632, 4
    %v5634 = vrot.slane %v4899, 5
    %v5635 = vsel %vm2362, %v5633, %v5634
    %v5636 = vrot.slane %v5543, 5
    %v5637 = vrot.slane %v5636, 4
    %v5638 = vrot.slane %v4901, 5
    %v5639 = vsel %vm2362, %v5637, %v5638
    %s5640 = scalar_lea.vmem [#allocation12], 2048
    %v5641 = vld [vmem:[%s5640] sm:$0xff]
    %v5642 = vld [vmem:[%s5640 + $0x8] sm:$0xff]
    %v5643 = vld [vmem:[%s5640 + $0x10] sm:$0xff]
    %v5644 = vld [vmem:[%s5640 + $0x18] sm:$0xff]
    %v5645 = vld [vmem:[%s5640 + $0x20] sm:$0xff]
    %v5646 = vld [vmem:[%s5640 + $0x28] sm:$0xff]
    %v5647 = vld [vmem:[%s5640 + $0x30] sm:$0xff]
    %v5648 = vld [vmem:[%s5640 + $0x38] sm:$0xff]
    %v5649 = vld [vmem:[%s5640 + $0x40] sm:$0xff]
    %v5650 = vld [vmem:[%s5640 + $0x48] sm:$0xff]
    %v5651 = vld [vmem:[%s5640 + $0x50] sm:$0xff]
    %v5652 = vld [vmem:[%s5640 + $0x58] sm:$0xff]
    %v5653 = vld [vmem:[%s5640 + $0x60] sm:$0xff]
    %v5654 = vld [vmem:[%s5640 + $0x68] sm:$0xff]
    %v5655 = vld [vmem:[%s5640 + $0x70] sm:$0xff]
    %v5656 = vld [vmem:[%s5640 + $0x78] sm:$0xff]
    %v5657 = vld [vmem:[%s5640 + $0x80] sm:$0xff]
    %v5658 = vld [vmem:[%s5640 + $0x88] sm:$0xff]
    %v5659 = vld [vmem:[%s5640 + $0x90] sm:$0xff]
    %v5660 = vld [vmem:[%s5640 + $0x98] sm:$0xff]
    %v5661 = vld [vmem:[%s5640 + $0xa0] sm:$0xff]
    %v5662 = vld [vmem:[%s5640 + $0xa8] sm:$0xff]
    %v5663 = vld [vmem:[%s5640 + $0xb0] sm:$0xff]
    %v5664 = vld [vmem:[%s5640 + $0xb8] sm:$0xff]
    %v5665 = vld [vmem:[%s5640 + $0xc0] sm:$0xff]
    %v5666 = vld [vmem:[%s5640 + $0xc8] sm:$0xff]
    %v5667 = vld [vmem:[%s5640 + $0xd0] sm:$0xff]
    %v5668 = vld [vmem:[%s5640 + $0xd8] sm:$0xff]
    %v5669 = vld [vmem:[%s5640 + $0xe0] sm:$0xff]
    %v5670 = vld [vmem:[%s5640 + $0xe8] sm:$0xff]
    %v5671 = vld [vmem:[%s5640 + $0xf0] sm:$0xff]
    %v5672 = vld [vmem:[%s5640 + $0xf8] sm:$0xff]
    %v5673 = vunpack.c.l.b16 %v5579
    %v5674 = vunpack.c.h.b16 %v5579
    %v5675 = vunpack.c.l.b16 %v5583
    %v5676 = vunpack.c.h.b16 %v5583
    %v5677 = vunpack.c.l.b16 %v5587
    %v5678 = vunpack.c.h.b16 %v5587
    %v5679 = vunpack.c.l.b16 %v5591
    %v5680 = vunpack.c.h.b16 %v5591
    %v5681 = vunpack.c.l.b16 %v5595
    %v5682 = vunpack.c.h.b16 %v5595
    %v5683 = vunpack.c.l.b16 %v5599
    %v5684 = vunpack.c.h.b16 %v5599
    %v5685 = vunpack.c.l.b16 %v5603
    %v5686 = vunpack.c.h.b16 %v5603
    %v5687 = vunpack.c.l.b16 %v5607
    %v5688 = vunpack.c.h.b16 %v5607
    %v5689 = vunpack.c.l.b16 %v5611
    %v5690 = vunpack.c.h.b16 %v5611
    %v5691 = vunpack.c.l.b16 %v5615
    %v5692 = vunpack.c.h.b16 %v5615
    %v5693 = vunpack.c.l.b16 %v5619
    %v5694 = vunpack.c.h.b16 %v5619
    %v5695 = vunpack.c.l.b16 %v5623
    %v5696 = vunpack.c.h.b16 %v5623
    %v5697 = vunpack.c.l.b16 %v5627
    %v5698 = vunpack.c.h.b16 %v5627
    %v5699 = vunpack.c.l.b16 %v5631
    %v5700 = vunpack.c.h.b16 %v5631
    %v5701 = vunpack.c.l.b16 %v5635
    %v5702 = vunpack.c.h.b16 %v5635
    %v5703 = vunpack.c.l.b16 %v5639
    %v5704 = vunpack.c.h.b16 %v5639
    %v5705 = vpack.c.b16 %v5675, %v5673
    %v5706 = vpack.c.b16 %v5676, %v5674
    %v5707 = vpack.c.b16 %v5679, %v5677
    %v5708 = vpack.c.b16 %v5680, %v5678
    %v5709 = vpack.c.b16 %v5683, %v5681
    %v5710 = vpack.c.b16 %v5684, %v5682
    %v5711 = vpack.c.b16 %v5687, %v5685
    %v5712 = vpack.c.b16 %v5688, %v5686
    %v5713 = vpack.c.b16 %v5691, %v5689
    %v5714 = vpack.c.b16 %v5692, %v5690
    %v5715 = vpack.c.b16 %v5695, %v5693
    %v5716 = vpack.c.b16 %v5696, %v5694
    %v5717 = vpack.c.b16 %v5699, %v5697
    %v5718 = vpack.c.b16 %v5700, %v5698
    %v5719 = vpack.c.b16 %v5703, %v5701
    %v5720 = vpack.c.b16 %v5704, %v5702
    %v5769 = vunpack.c.l.b16 %v5641
    %v5770 = vunpack.c.h.b16 %v5641
    %v5771 = vunpack.c.l.b16 %v5642
    %v5772 = vunpack.c.h.b16 %v5642
    %v5773 = vunpack.c.l.b16 %v5643
    %v5774 = vunpack.c.h.b16 %v5643
    %v5775 = vunpack.c.l.b16 %v5644
    %v5776 = vunpack.c.h.b16 %v5644
    %v5777 = vunpack.c.l.b16 %v5645
    %v5778 = vunpack.c.h.b16 %v5645
    %v5779 = vunpack.c.l.b16 %v5646
    %v5780 = vunpack.c.h.b16 %v5646
    %v5781 = vunpack.c.l.b16 %v5647
    %v5782 = vunpack.c.h.b16 %v5647
    %v5783 = vunpack.c.l.b16 %v5648
    %v5784 = vunpack.c.h.b16 %v5648
    %v5785 = vunpack.c.l.b16 %v5649
    %v5786 = vunpack.c.h.b16 %v5649
    %v5787 = vunpack.c.l.b16 %v5650
    %v5788 = vunpack.c.h.b16 %v5650
    %v5789 = vunpack.c.l.b16 %v5651
    %v5790 = vunpack.c.h.b16 %v5651
    %v5791 = vunpack.c.l.b16 %v5652
    %v5792 = vunpack.c.h.b16 %v5652
    %v5793 = vunpack.c.l.b16 %v5653
    %v5794 = vunpack.c.h.b16 %v5653
    %v5795 = vunpack.c.l.b16 %v5654
    %v5796 = vunpack.c.h.b16 %v5654
    %v5797 = vunpack.c.l.b16 %v5655
    %v5798 = vunpack.c.h.b16 %v5655
    %v5799 = vunpack.c.l.b16 %v5656
    %v5800 = vunpack.c.h.b16 %v5656
    %v5801 = vunpack.c.l.b16 %v5657
    %v5802 = vunpack.c.h.b16 %v5657
    %v5803 = vunpack.c.l.b16 %v5658
    %v5804 = vunpack.c.h.b16 %v5658
    %v5805 = vunpack.c.l.b16 %v5659
    %v5806 = vunpack.c.h.b16 %v5659
    %v5807 = vunpack.c.l.b16 %v5660
    %v5808 = vunpack.c.h.b16 %v5660
    %v5809 = vunpack.c.l.b16 %v5661
    %v5810 = vunpack.c.h.b16 %v5661
    %v5811 = vunpack.c.l.b16 %v5662
    %v5812 = vunpack.c.h.b16 %v5662
    %v5813 = vunpack.c.l.b16 %v5663
    %v5814 = vunpack.c.h.b16 %v5663
    %v5815 = vunpack.c.l.b16 %v5664
    %v5816 = vunpack.c.h.b16 %v5664
    %v5817 = vunpack.c.l.b16 %v5665
    %v5818 = vunpack.c.h.b16 %v5665
    %v5819 = vunpack.c.l.b16 %v5666
    %v5820 = vunpack.c.h.b16 %v5666
    %v5821 = vunpack.c.l.b16 %v5667
    %v5822 = vunpack.c.h.b16 %v5667
    %v5823 = vunpack.c.l.b16 %v5668
    %v5824 = vunpack.c.h.b16 %v5668
    %v5825 = vunpack.c.l.b16 %v5669
    %v5826 = vunpack.c.h.b16 %v5669
    %v5827 = vunpack.c.l.b16 %v5670
    %v5828 = vunpack.c.h.b16 %v5670
    %v5829 = vunpack.c.l.b16 %v5671
    %v5830 = vunpack.c.h.b16 %v5671
    %v5831 = vunpack.c.l.b16 %v5672
    %v5832 = vunpack.c.h.b16 %v5672
    %v5833 = vpack.c.b16 %v5771, %v5769
    %v5834 = vpack.c.b16 %v5772, %v5770
    %v5835 = vpack.c.b16 %v5775, %v5773
    %v5836 = vpack.c.b16 %v5776, %v5774
    %v5837 = vpack.c.b16 %v5779, %v5777
    %v5838 = vpack.c.b16 %v5780, %v5778
    %v5839 = vpack.c.b16 %v5783, %v5781
    %v5840 = vpack.c.b16 %v5784, %v5782
    %v5841 = vpack.c.b16 %v5787, %v5785
    %v5842 = vpack.c.b16 %v5788, %v5786
    %v5843 = vpack.c.b16 %v5791, %v5789
    %v5844 = vpack.c.b16 %v5792, %v5790
    %v5845 = vpack.c.b16 %v5795, %v5793
    %v5846 = vpack.c.b16 %v5796, %v5794
    %v5847 = vpack.c.b16 %v5799, %v5797
    %v5848 = vpack.c.b16 %v5800, %v5798
    %v5849 = vpack.c.b16 %v5803, %v5801
    %v5850 = vpack.c.b16 %v5804, %v5802
    %v5851 = vpack.c.b16 %v5807, %v5805
    %v5852 = vpack.c.b16 %v5808, %v5806
    %v5853 = vpack.c.b16 %v5811, %v5809
    %v5854 = vpack.c.b16 %v5812, %v5810
    %v5855 = vpack.c.b16 %v5815, %v5813
    %v5856 = vpack.c.b16 %v5816, %v5814
    %v5857 = vpack.c.b16 %v5819, %v5817
    %v5858 = vpack.c.b16 %v5820, %v5818
    %v5859 = vpack.c.b16 %v5823, %v5821
    %v5860 = vpack.c.b16 %v5824, %v5822
    %v5861 = vpack.c.b16 %v5827, %v5825
    %v5862 = vpack.c.b16 %v5828, %v5826
    %v5863 = vpack.c.b16 %v5831, %v5829
    %v5864 = vpack.c.b16 %v5832, %v5830
    %5897 = vmatprep.subr.bf16.mxu0 %v5848
    %5898 = vmatpush1.bf16.msra.mxu0 %v5847
    %5899 = vmatprep.subr.bf16.mxu0 %v5846
    %5900 = vmatpush1.bf16.msra.mxu0 %v5845
    %5901 = vmatprep.subr.bf16.mxu0 %v5844
    %5902 = vmatpush1.bf16.msra.mxu0 %v5843
    %5903 = vmatprep.subr.bf16.mxu0 %v5842
    %5904 = vmatpush1.bf16.msra.mxu0 %v5841
    %5905 = vmatprep.subr.bf16.mxu0 %v5840
    %5906 = vmatpush1.bf16.msra.mxu0 %v5839
    %5907 = vmatprep.subr.bf16.mxu0 %v5838
    %5908 = vmatpush1.bf16.msra.mxu0 %v5837
    %5909 = vmatprep.subr.bf16.mxu0 %v5836
    %5910 = vmatpush1.bf16.msra.mxu0 %v5835
    %5911 = vmatprep.subr.bf16.mxu0 %v5834
    %5912 = vmatpush1.bf16.msra.mxu0 %v5833
    %5913 = vmatprep.subr.bf16.mxu0 %v5864
    %5914 = vmatpush2.bf16.msra.mxu0 %v5863
    %5915 = vmatprep.subr.bf16.mxu0 %v5862
    %5916 = vmatpush2.bf16.msra.mxu0 %v5861
    %5917 = vmatprep.subr.bf16.mxu0 %v5860
    %5918 = vmatpush2.bf16.msra.mxu0 %v5859
    %5919 = vmatprep.subr.bf16.mxu0 %v5858
    %5920 = vmatpush2.bf16.msra.mxu0 %v5857
    %5921 = vmatprep.subr.bf16.mxu0 %v5856
    %5922 = vmatpush2.bf16.msra.mxu0 %v5855
    %5923 = vmatprep.subr.bf16.mxu0 %v5854
    %5924 = vmatpush2.bf16.msra.mxu0 %v5853
    %5925 = vmatprep.subr.bf16.mxu0 %v5852
    %5926 = vmatpush2.bf16.msra.mxu0 %v5851
    %5927 = vmatprep.subr.bf16.mxu0 %v5850
    %5928 = vmatpush2.bf16.msra.mxu0 %v5849
    %5929 = vmatprep.mubr.bf16.mxu0 %v5706
    %5930 = vmatmul.mubr.bf16.gmra.mxu0 %v5705
    %v5931 = vpop.f32.mrf.mxu0
    %v5932 = vadd.f32 0.0, %v5931
    %v5933 = vpop.f32.mrf.mxu0
    %v5934 = vadd.f32 0.0, %v5933
    %v5935 = vpop.f32.mrf.mxu0
    %v5936 = vadd.f32 0.0, %v5935
    %v5937 = vpop.f32.mrf.mxu0
    %v5938 = vadd.f32 0.0, %v5937
    %5939 = vmatprep.mubr.bf16.mxu0 %v5708
    %5940 = vmatmul.mubr.bf16.gmra.mxu0 %v5707
    %v5941 = vpop.f32.mrf.mxu0
    %v5942 = vadd.f32 0.0, %v5941
    %v5943 = vpop.f32.mrf.mxu0
    %v5944 = vadd.f32 0.0, %v5943
    %v5945 = vpop.f32.mrf.mxu0
    %v5946 = vadd.f32 0.0, %v5945
    %v5947 = vpop.f32.mrf.mxu0
    %v5948 = vadd.f32 0.0, %v5947
    %5949 = vmatprep.mubr.bf16.mxu0 %v5710
    %5950 = vmatmul.mubr.bf16.gmra.mxu0 %v5709
    %v5951 = vpop.f32.mrf.mxu0
    %v5952 = vadd.f32 0.0, %v5951
    %v5953 = vpop.f32.mrf.mxu0
    %v5954 = vadd.f32 0.0, %v5953
    %v5955 = vpop.f32.mrf.mxu0
    %v5956 = vadd.f32 0.0, %v5955
    %v5957 = vpop.f32.mrf.mxu0
    %v5958 = vadd.f32 0.0, %v5957
    %5959 = vmatprep.mubr.bf16.mxu0 %v5712
    %5960 = vmatmul.mubr.bf16.gmra.mxu0 %v5711
    %v5961 = vpop.f32.mrf.mxu0
    %v5962 = vadd.f32 0.0, %v5961
    %v5963 = vpop.f32.mrf.mxu0
    %v5964 = vadd.f32 0.0, %v5963
    %v5965 = vpop.f32.mrf.mxu0
    %v5966 = vadd.f32 0.0, %v5965
    %v5967 = vpop.f32.mrf.mxu0
    %v5968 = vadd.f32 0.0, %v5967
    %5969 = vmatprep.mubr.bf16.mxu0 %v5714
    %5970 = vmatmul.mubr.bf16.gmra.mxu0 %v5713
    %v5971 = vpop.f32.mrf.mxu0
    %v5972 = vadd.f32 0.0, %v5971
    %v5973 = vpop.f32.mrf.mxu0
    %v5974 = vadd.f32 0.0, %v5973
    %v5975 = vpop.f32.mrf.mxu0
    %v5976 = vadd.f32 0.0, %v5975
    %v5977 = vpop.f32.mrf.mxu0
    %v5978 = vadd.f32 0.0, %v5977
    %5979 = vmatprep.mubr.bf16.mxu0 %v5716
    %5980 = vmatmul.mubr.bf16.gmra.mxu0 %v5715
    %v5981 = vpop.f32.mrf.mxu0
    %v5982 = vadd.f32 0.0, %v5981
    %v5983 = vpop.f32.mrf.mxu0
    %v5984 = vadd.f32 0.0, %v5983
    %v5985 = vpop.f32.mrf.mxu0
    %v5986 = vadd.f32 0.0, %v5985
    %v5987 = vpop.f32.mrf.mxu0
    %v5988 = vadd.f32 0.0, %v5987
    %5989 = vmatprep.mubr.bf16.mxu0 %v5718
    %5990 = vmatmul.mubr.bf16.gmra.mxu0 %v5717
    %v5991 = vpop.f32.mrf.mxu0
    %v5992 = vadd.f32 0.0, %v5991
    %v5993 = vpop.f32.mrf.mxu0
    %v5994 = vadd.f32 0.0, %v5993
    %v5995 = vpop.f32.mrf.mxu0
    %v5996 = vadd.f32 0.0, %v5995
    %v5997 = vpop.f32.mrf.mxu0
    %v5998 = vadd.f32 0.0, %v5997
    %5999 = vmatprep.mubr.bf16.mxu0 %v5720
    %6000 = vmatmul.mubr.bf16.gmra.mxu0 %v5719
    %v6001 = vpop.f32.mrf.mxu0
    %v6002 = vadd.f32 0.0, %v6001
    %v6003 = vpop.f32.mrf.mxu0
    %v6004 = vadd.f32 0.0, %v6003
    %v6005 = vpop.f32.mrf.mxu0
    %v6006 = vadd.f32 0.0, %v6005
    %v6007 = vpop.f32.mrf.mxu0
    %v6008 = vadd.f32 0.0, %v6007
    %6009 = vdwg.mxu0
    %v6010 = vadd.f32 %v5496, %v5932
    %v6011 = vadd.f32 %v5497, %v5934
    %v6012 = vadd.f32 %v5498, %v5936
    %v6013 = vadd.f32 %v5499, %v5938
    %v6014 = vadd.f32 %v5500, %v5942
    %v6015 = vadd.f32 %v5501, %v5944
    %v6016 = vadd.f32 %v5502, %v5946
    %v6017 = vadd.f32 %v5503, %v5948
    %v6018 = vadd.f32 %v5504, %v5952
    %v6019 = vadd.f32 %v5505, %v5954
    %v6020 = vadd.f32 %v5506, %v5956
    %v6021 = vadd.f32 %v5507, %v5958
    %v6022 = vadd.f32 %v5508, %v5962
    %v6023 = vadd.f32 %v5509, %v5964
    %v6024 = vadd.f32 %v5510, %v5966
    %v6025 = vadd.f32 %v5511, %v5968
    %v6026 = vadd.f32 %v5512, %v5972
    %v6027 = vadd.f32 %v5513, %v5974
    %v6028 = vadd.f32 %v5514, %v5976
    %v6029 = vadd.f32 %v5515, %v5978
    %v6030 = vadd.f32 %v5516, %v5982
    %v6031 = vadd.f32 %v5517, %v5984
    %v6032 = vadd.f32 %v5518, %v5986
    %v6033 = vadd.f32 %v5519, %v5988
    %v6034 = vadd.f32 %v5520, %v5992
    %v6035 = vadd.f32 %v5521, %v5994
    %v6036 = vadd.f32 %v5522, %v5996
    %v6037 = vadd.f32 %v5523, %v5998
    %v6038 = vadd.f32 %v5524, %v6002
    %v6039 = vadd.f32 %v5525, %v6004
    %v6040 = vadd.f32 %v5526, %v6006
    %v6041 = vadd.f32 %v5527, %v6008
    %v6042 = vld [vmem:[#allocation14] sm:$0x3]
    %v6043 = vld [vmem:[#allocation15] sm:$0x3]
    %v6044 = vadd.f32 %v6010, %v6012
    %v6045 = vadd.f32 %v6044, %v6014
    %v6046 = vadd.f32 %v6045, %v6016
    %v6047 = vadd.f32 %v6046, %v6018
    %v6048 = vadd.f32 %v6047, %v6020
    %v6049 = vadd.f32 %v6048, %v6022
    %v6050 = vadd.f32 %v6049, %v6024
    %v6051 = vadd.f32 %v6050, %v6026
    %v6052 = vadd.f32 %v6051, %v6028
    %v6053 = vadd.f32 %v6052, %v6030
    %v6054 = vadd.f32 %v6053, %v6032
    %v6055 = vadd.f32 %v6054, %v6034
    %v6056 = vadd.f32 %v6055, %v6036
    %v6057 = vadd.f32 %v6056, %v6038
    %v6058 = vadd.f32 %v6057, %v6040
    %v6059 = vrot.slane %v6058, 4
    %v6060 = vadd.f32 %v6058, %v6059
    %v6061 = vrot.slane %v6060, 2
    %v6062 = vadd.f32 %v6060, %v6061
    %v6063 = vrot.slane %v6062, 1
    %v6064 = vadd.f32 %v6062, %v6063
    %v6065 = vadd.f32 %v6011, %v6013
    %v6066 = vadd.f32 %v6065, %v6015
    %v6067 = vadd.f32 %v6066, %v6017
    %v6068 = vadd.f32 %v6067, %v6019
    %v6069 = vadd.f32 %v6068, %v6021
    %v6070 = vadd.f32 %v6069, %v6023
    %v6071 = vadd.f32 %v6070, %v6025
    %v6072 = vadd.f32 %v6071, %v6027
    %v6073 = vadd.f32 %v6072, %v6029
    %v6074 = vadd.f32 %v6073, %v6031
    %v6075 = vadd.f32 %v6074, %v6033
    %v6076 = vadd.f32 %v6075, %v6035
    %v6077 = vadd.f32 %v6076, %v6037
    %v6078 = vadd.f32 %v6077, %v6039
    %v6079 = vadd.f32 %v6078, %v6041
    %v6080 = vrot.slane %v6079, 4
    %v6081 = vadd.f32 %v6079, %v6080
    %v6082 = vrot.slane %v6081, 2
    %v6083 = vadd.f32 %v6081, %v6082
    %v6084 = vrot.slane %v6083, 1
    %v6085 = vadd.f32 %v6083, %v6084
    %v6086 = vmul.f32 %v6064, 0.0078125
    %v6087 = vmul.f32 %v6085, 0.0078125
    %v6088 = vsub.f32 %v6010, %v6086
    %v6089 = vsub.f32 %v6011, %v6087
    %v6090 = vsub.f32 %v6012, %v6086
    %v6091 = vsub.f32 %v6013, %v6087
    %v6092 = vsub.f32 %v6014, %v6086
    %v6093 = vsub.f32 %v6015, %v6087
    %v6094 = vsub.f32 %v6016, %v6086
    %v6095 = vsub.f32 %v6017, %v6087
    %v6096 = vsub.f32 %v6018, %v6086
    %v6097 = vsub.f32 %v6019, %v6087
    %v6098 = vsub.f32 %v6020, %v6086
    %v6099 = vsub.f32 %v6021, %v6087
    %v6100 = vsub.f32 %v6022, %v6086
    %v6101 = vsub.f32 %v6023, %v6087
    %v6102 = vsub.f32 %v6024, %v6086
    %v6103 = vsub.f32 %v6025, %v6087
    %v6104 = vsub.f32 %v6026, %v6086
    %v6105 = vsub.f32 %v6027, %v6087
    %v6106 = vsub.f32 %v6028, %v6086
    %v6107 = vsub.f32 %v6029, %v6087
    %v6108 = vsub.f32 %v6030, %v6086
    %v6109 = vsub.f32 %v6031, %v6087
    %v6110 = vsub.f32 %v6032, %v6086
    %v6111 = vsub.f32 %v6033, %v6087
    %v6112 = vsub.f32 %v6034, %v6086
    %v6113 = vsub.f32 %v6035, %v6087
    %v6114 = vsub.f32 %v6036, %v6086
    %v6115 = vsub.f32 %v6037, %v6087
    %v6116 = vsub.f32 %v6038, %v6086
    %v6117 = vsub.f32 %v6039, %v6087
    %v6118 = vsub.f32 %v6040, %v6086
    %v6119 = vsub.f32 %v6041, %v6087
    %v6120 = vmul.f32 %v6088, %v6088
    %v6121 = vmul.f32 %v6089, %v6089
    %v6122 = vmul.f32 %v6090, %v6090
    %v6123 = vmul.f32 %v6091, %v6091
    %v6124 = vmul.f32 %v6092, %v6092
    %v6125 = vmul.f32 %v6093, %v6093
    %v6126 = vmul.f32 %v6094, %v6094
    %v6127 = vmul.f32 %v6095, %v6095
    %v6128 = vmul.f32 %v6096, %v6096
    %v6129 = vmul.f32 %v6097, %v6097
    %v6130 = vmul.f32 %v6098, %v6098
    %v6131 = vmul.f32 %v6099, %v6099
    %v6132 = vmul.f32 %v6100, %v6100
    %v6133 = vmul.f32 %v6101, %v6101
    %v6134 = vmul.f32 %v6102, %v6102
    %v6135 = vmul.f32 %v6103, %v6103
    %v6136 = vmul.f32 %v6104, %v6104
    %v6137 = vmul.f32 %v6105, %v6105
    %v6138 = vmul.f32 %v6106, %v6106
    %v6139 = vmul.f32 %v6107, %v6107
    %v6140 = vmul.f32 %v6108, %v6108
    %v6141 = vmul.f32 %v6109, %v6109
    %v6142 = vmul.f32 %v6110, %v6110
    %v6143 = vmul.f32 %v6111, %v6111
    %v6144 = vmul.f32 %v6112, %v6112
    %v6145 = vmul.f32 %v6113, %v6113
    %v6146 = vmul.f32 %v6114, %v6114
    %v6147 = vmul.f32 %v6115, %v6115
    %v6148 = vmul.f32 %v6116, %v6116
    %v6149 = vmul.f32 %v6117, %v6117
    %v6150 = vmul.f32 %v6118, %v6118
    %v6151 = vmul.f32 %v6119, %v6119
    %v6152 = vadd.f32 %v6120, %v6122
    %v6153 = vadd.f32 %v6152, %v6124
    %v6154 = vadd.f32 %v6153, %v6126
    %v6155 = vadd.f32 %v6154, %v6128
    %v6156 = vadd.f32 %v6155, %v6130
    %v6157 = vadd.f32 %v6156, %v6132
    %v6158 = vadd.f32 %v6157, %v6134
    %v6159 = vadd.f32 %v6158, %v6136
    %v6160 = vadd.f32 %v6159, %v6138
    %v6161 = vadd.f32 %v6160, %v6140
    %v6162 = vadd.f32 %v6161, %v6142
    %v6163 = vadd.f32 %v6162, %v6144
    %v6164 = vadd.f32 %v6163, %v6146
    %v6165 = vadd.f32 %v6164, %v6148
    %v6166 = vadd.f32 %v6165, %v6150
    %v6167 = vrot.slane %v6166, 4
    %v6168 = vadd.f32 %v6166, %v6167
    %v6169 = vrot.slane %v6168, 2
    %v6170 = vadd.f32 %v6168, %v6169
    %v6171 = vrot.slane %v6170, 1
    %v6172 = vadd.f32 %v6170, %v6171
    %v6173 = vadd.f32 %v6121, %v6123
    %v6174 = vadd.f32 %v6173, %v6125
    %v6175 = vadd.f32 %v6174, %v6127
    %v6176 = vadd.f32 %v6175, %v6129
    %v6177 = vadd.f32 %v6176, %v6131
    %v6178 = vadd.f32 %v6177, %v6133
    %v6179 = vadd.f32 %v6178, %v6135
    %v6180 = vadd.f32 %v6179, %v6137
    %v6181 = vadd.f32 %v6180, %v6139
    %v6182 = vadd.f32 %v6181, %v6141
    %v6183 = vadd.f32 %v6182, %v6143
    %v6184 = vadd.f32 %v6183, %v6145
    %v6185 = vadd.f32 %v6184, %v6147
    %v6186 = vadd.f32 %v6185, %v6149
    %v6187 = vadd.f32 %v6186, %v6151
    %v6188 = vrot.slane %v6187, 4
    %v6189 = vadd.f32 %v6187, %v6188
    %v6190 = vrot.slane %v6189, 2
    %v6191 = vadd.f32 %v6189, %v6190
    %v6192 = vrot.slane %v6191, 1
    %v6193 = vadd.f32 %v6191, %v6192
    %v6194 = vmul.f32 %v6172, 0.0078125
    %v6195 = vmul.f32 %v6193, 0.0078125
    %v6196 = vadd.f32 %v6194, 1e-05
    %v6197 = vadd.f32 %v6195, 1e-05
    %v6198 = vrsqrt.pop %v6196
    %v6199 = vrsqrt.pop %v6197
    %v6200 = vmul.f32 %v6088, %v6198
    %v6201 = vmul.f32 %v6089, %v6199
    %v6202 = vmul.f32 %v6090, %v6198
    %v6203 = vmul.f32 %v6091, %v6199
    %v6204 = vmul.f32 %v6092, %v6198
    %v6205 = vmul.f32 %v6093, %v6199
    %v6206 = vmul.f32 %v6094, %v6198
    %v6207 = vmul.f32 %v6095, %v6199
    %v6208 = vmul.f32 %v6096, %v6198
    %v6209 = vmul.f32 %v6097, %v6199
    %v6210 = vmul.f32 %v6098, %v6198
    %v6211 = vmul.f32 %v6099, %v6199
    %v6212 = vmul.f32 %v6100, %v6198
    %v6213 = vmul.f32 %v6101, %v6199
    %v6214 = vmul.f32 %v6102, %v6198
    %v6215 = vmul.f32 %v6103, %v6199
    %v6216 = vmul.f32 %v6104, %v6198
    %v6217 = vmul.f32 %v6105, %v6199
    %v6218 = vmul.f32 %v6106, %v6198
    %v6219 = vmul.f32 %v6107, %v6199
    %v6220 = vmul.f32 %v6108, %v6198
    %v6221 = vmul.f32 %v6109, %v6199
    %v6222 = vmul.f32 %v6110, %v6198
    %v6223 = vmul.f32 %v6111, %v6199
    %v6224 = vmul.f32 %v6112, %v6198
    %v6225 = vmul.f32 %v6113, %v6199
    %v6226 = vmul.f32 %v6114, %v6198
    %v6227 = vmul.f32 %v6115, %v6199
    %v6228 = vmul.f32 %v6116, %v6198
    %v6229 = vmul.f32 %v6117, %v6199
    %v6230 = vmul.f32 %v6118, %v6198
    %v6231 = vmul.f32 %v6119, %v6199
    %v6233 = vlaneseq
    %v6234 = vshrl.u32 %v6233, 7
    %v6235 = vsub.s32 0, %v6234
    %v6236 = vrot.slane %v6042, %v6235
    %v6237 = vlaneseq
    %v6238 = vshrl.u32 %v6237, 7
    %v6239 = vsub.s32 1, %v6238
    %v6240 = vrot.slane %v6042, %v6239
    %v6243 = vmul.f32 %v6200, %v6236
    %v6244 = vmul.f32 %v6201, %v6240
    %v6245 = vmul.f32 %v6202, %v6236
    %v6246 = vmul.f32 %v6203, %v6240
    %v6247 = vmul.f32 %v6204, %v6236
    %v6248 = vmul.f32 %v6205, %v6240
    %v6249 = vmul.f32 %v6206, %v6236
    %v6250 = vmul.f32 %v6207, %v6240
    %v6251 = vmul.f32 %v6208, %v6236
    %v6252 = vmul.f32 %v6209, %v6240
    %v6253 = vmul.f32 %v6210, %v6236
    %v6254 = vmul.f32 %v6211, %v6240
    %v6255 = vmul.f32 %v6212, %v6236
    %v6256 = vmul.f32 %v6213, %v6240
    %v6257 = vmul.f32 %v6214, %v6236
    %v6258 = vmul.f32 %v6215, %v6240
    %v6259 = vmul.f32 %v6216, %v6236
    %v6260 = vmul.f32 %v6217, %v6240
    %v6261 = vmul.f32 %v6218, %v6236
    %v6262 = vmul.f32 %v6219, %v6240
    %v6263 = vmul.f32 %v6220, %v6236
    %v6264 = vmul.f32 %v6221, %v6240
    %v6265 = vmul.f32 %v6222, %v6236
    %v6266 = vmul.f32 %v6223, %v6240
    %v6267 = vmul.f32 %v6224, %v6236
    %v6268 = vmul.f32 %v6225, %v6240
    %v6269 = vmul.f32 %v6226, %v6236
    %v6270 = vmul.f32 %v6227, %v6240
    %v6271 = vmul.f32 %v6228, %v6236
    %v6272 = vmul.f32 %v6229, %v6240
    %v6273 = vmul.f32 %v6230, %v6236
    %v6274 = vmul.f32 %v6231, %v6240
    %v6276 = vlaneseq
    %v6277 = vshrl.u32 %v6276, 7
    %v6278 = vsub.s32 0, %v6277
    %v6279 = vrot.slane %v6043, %v6278
    %v6280 = vlaneseq
    %v6281 = vshrl.u32 %v6280, 7
    %v6282 = vsub.s32 1, %v6281
    %v6283 = vrot.slane %v6043, %v6282
    %v6286 = vadd.f32 %v6243, %v6279
    %v6287 = vadd.f32 %v6244, %v6283
    %v6288 = vadd.f32 %v6245, %v6279
    %v6289 = vadd.f32 %v6246, %v6283
    %v6290 = vadd.f32 %v6247, %v6279
    %v6291 = vadd.f32 %v6248, %v6283
    %v6292 = vadd.f32 %v6249, %v6279
    %v6293 = vadd.f32 %v6250, %v6283
    %v6294 = vadd.f32 %v6251, %v6279
    %v6295 = vadd.f32 %v6252, %v6283
    %v6296 = vadd.f32 %v6253, %v6279
    %v6297 = vadd.f32 %v6254, %v6283
    %v6298 = vadd.f32 %v6255, %v6279
    %v6299 = vadd.f32 %v6256, %v6283
    %v6300 = vadd.f32 %v6257, %v6279
    %v6301 = vadd.f32 %v6258, %v6283
    %v6302 = vadd.f32 %v6259, %v6279
    %v6303 = vadd.f32 %v6260, %v6283
    %v6304 = vadd.f32 %v6261, %v6279
    %v6305 = vadd.f32 %v6262, %v6283
    %v6306 = vadd.f32 %v6263, %v6279
    %v6307 = vadd.f32 %v6264, %v6283
    %v6308 = vadd.f32 %v6265, %v6279
    %v6309 = vadd.f32 %v6266, %v6283
    %v6310 = vadd.f32 %v6267, %v6279
    %v6311 = vadd.f32 %v6268, %v6283
    %v6312 = vadd.f32 %v6269, %v6279
    %v6313 = vadd.f32 %v6270, %v6283
    %v6314 = vadd.f32 %v6271, %v6279
    %v6315 = vadd.f32 %v6272, %v6283
    %v6316 = vadd.f32 %v6273, %v6279
    %v6317 = vadd.f32 %v6274, %v6283
    %v6318 = vmax.f32 %v6286, 0.0
    %v6319 = vmax.f32 %v6287, 0.0
    %v6320 = vmax.f32 %v6288, 0.0
    %v6321 = vmax.f32 %v6289, 0.0
    %v6322 = vmax.f32 %v6290, 0.0
    %v6323 = vmax.f32 %v6291, 0.0
    %v6324 = vmax.f32 %v6292, 0.0
    %v6325 = vmax.f32 %v6293, 0.0
    %v6326 = vmax.f32 %v6294, 0.0
    %v6327 = vmax.f32 %v6295, 0.0
    %v6328 = vmax.f32 %v6296, 0.0
    %v6329 = vmax.f32 %v6297, 0.0
    %v6330 = vmax.f32 %v6298, 0.0
    %v6331 = vmax.f32 %v6299, 0.0
    %v6332 = vmax.f32 %v6300, 0.0
    %v6333 = vmax.f32 %v6301, 0.0
    %v6334 = vmax.f32 %v6302, 0.0
    %v6335 = vmax.f32 %v6303, 0.0
    %v6336 = vmax.f32 %v6304, 0.0
    %v6337 = vmax.f32 %v6305, 0.0
    %v6338 = vmax.f32 %v6306, 0.0
    %v6339 = vmax.f32 %v6307, 0.0
    %v6340 = vmax.f32 %v6308, 0.0
    %v6341 = vmax.f32 %v6309, 0.0
    %v6342 = vmax.f32 %v6310, 0.0
    %v6343 = vmax.f32 %v6311, 0.0
    %v6344 = vmax.f32 %v6312, 0.0
    %v6345 = vmax.f32 %v6313, 0.0
    %v6346 = vmax.f32 %v6314, 0.0
    %v6347 = vmax.f32 %v6315, 0.0
    %v6348 = vmax.f32 %v6316, 0.0
    %v6349 = vmax.f32 %v6317, 0.0
    %6350 = vst [vmem:[#allocation17] sm:$0xff] %v6318
    %6351 = vst [vmem:[#allocation17 + $0x8] sm:$0xff] %v6319
    %6352 = vst [vmem:[#allocation17 + $0x10] sm:$0xff] %v6320
    %6353 = vst [vmem:[#allocation17 + $0x18] sm:$0xff] %v6321
    %6354 = vst [vmem:[#allocation17 + $0x20] sm:$0xff] %v6322
    %6355 = vst [vmem:[#allocation17 + $0x28] sm:$0xff] %v6323
    %6356 = vst [vmem:[#allocation17 + $0x30] sm:$0xff] %v6324
    %6357 = vst [vmem:[#allocation17 + $0x38] sm:$0xff] %v6325
    %6358 = vst [vmem:[#allocation17 + $0x40] sm:$0xff] %v6326
    %6359 = vst [vmem:[#allocation17 + $0x48] sm:$0xff] %v6327
    %6360 = vst [vmem:[#allocation17 + $0x50] sm:$0xff] %v6328
    %6361 = vst [vmem:[#allocation17 + $0x58] sm:$0xff] %v6329
    %6362 = vst [vmem:[#allocation17 + $0x60] sm:$0xff] %v6330
    %6363 = vst [vmem:[#allocation17 + $0x68] sm:$0xff] %v6331
    %6364 = vst [vmem:[#allocation17 + $0x70] sm:$0xff] %v6332
    %6365 = vst [vmem:[#allocation17 + $0x78] sm:$0xff] %v6333
    %6366 = vst [vmem:[#allocation17 + $0x80] sm:$0xff] %v6334
    %6367 = vst [vmem:[#allocation17 + $0x88] sm:$0xff] %v6335
    %6368 = vst [vmem:[#allocation17 + $0x90] sm:$0xff] %v6336
    %6369 = vst [vmem:[#allocation17 + $0x98] sm:$0xff] %v6337
    %6370 = vst [vmem:[#allocation17 + $0xa0] sm:$0xff] %v6338
    %6371 = vst [vmem:[#allocation17 + $0xa8] sm:$0xff] %v6339
    %6372 = vst [vmem:[#allocation17 + $0xb0] sm:$0xff] %v6340
    %6373 = vst [vmem:[#allocation17 + $0xb8] sm:$0xff] %v6341
    %6374 = vst [vmem:[#allocation17 + $0xc0] sm:$0xff] %v6342
    %6375 = vst [vmem:[#allocation17 + $0xc8] sm:$0xff] %v6343
    %6376 = vst [vmem:[#allocation17 + $0xd0] sm:$0xff] %v6344
    %6377 = vst [vmem:[#allocation17 + $0xd8] sm:$0xff] %v6345
    %6378 = vst [vmem:[#allocation17 + $0xe0] sm:$0xff] %v6346
    %6379 = vst [vmem:[#allocation17 + $0xe8] sm:$0xff] %v6347
    %6380 = vst [vmem:[#allocation17 + $0xf0] sm:$0xff] %v6348
    %6381 = vst [vmem:[#allocation17 + $0xf8] sm:$0xff] %v6349
    // Predicated region
    $region66: #{tpu_custom_call.1} parent=1 // pred_check
      _
    $region67: #{tpu_custom_call.1} parent=1 // pred_check_branch
      %6383 = sbr.rel (0) target = $region69
    $region68: #{tpu_custom_call.1} parent=1 // pred_region
      %s6385 = ssub.s32 4096, 4096
      %6386 = vsyncadd [#allocation5], %s6385
      %s6387 = sshll.u32 [#allocation17], 4
      %s6388 = int_to_ptr.vmem [resolvable:$true] %s6387
      %6393 = dma.vmem_to_hbm [thread:$0]  %s6388, 4096, %s8, [#allocation5], 256, 256, 16
    $region69: #{tpu_custom_call.1} parent=1 // pred_fallthru
      _
    // Predicated region
    $region70: #{tpu_custom_call.1} parent=1 // pred_check
      _
    $region71: #{tpu_custom_call.1} parent=1 // pred_check_branch
      %6395 = sbr.rel (0) target = $region73
    $region72: #{tpu_custom_call.1} parent=1 // pred_region
      %6396 = dma.done [#allocation5], 4096
    $region73: #{tpu_custom_call.1} parent=1 // pred_fallthru
      _
    %6397 = vsyncpa [#allocation4], 1
    %6398 = vsyncpa [#allocation7], 1
    %6399 = vsyncpa [#allocation10], 1
    %6400 = vsyncpa [#allocation13], 1
    %6401 = vsyncpa [#allocation16], 1
    %6402 = vsyncpa [#allocation5], 1

</llo_original>
